<compile_context>
chip_gen: v7x
topology: tpu7x:2x2x1
jax: 0.10.0
libtpu: 0.0.40
codegen_flags: <defaults>
</compile_context>

<pallas_src>
import functools
import math

import jax
import jax.numpy as jnp
from jax import lax
from jax.experimental import pallas as pl
from jax.experimental.pallas import tpu as pltpu


# ----------------------------- shared math ---------------------------------


def _layer_norm(x, gamma, beta, eps=1e-5):
    # PyTorch LayerNorm: biased variance, eps inside sqrt.
    mu = jnp.mean(x, axis=-1, keepdims=True)
    var = jnp.mean((x - mu) ** 2, axis=-1, keepdims=True)
    return (x - mu) * lax.rsqrt(var + eps) * gamma + beta


# ----------------------------- Pallas kernel -------------------------------


def fused_reasoner_kernel(ids_ref, emb_ref,
                          wqkv_ref, bqkv_ref, wo_ref, bo_ref,
                          g1_ref, be1_ref, w1_ref, b1_ref,
                          w2_ref, b2_ref, g2_ref, be2_ref,
                          o_ref, ctx_ref,
                          *, num_heads, num_layers, batch, seq):
    """Embedding + all transformer encoder layers, fused, on a (B*S, E) slab."""
    BS = batch * seq
    V, E = emb_ref.shape
    D = E // num_heads
    scale = 1.0 / math.sqrt(float(D))

    # ---- embedding gather as a one-hot matmul (MXU, exact) ----
    ids = ids_ref[...]                                                   # (BS, 1) int32
    onehot = (ids == lax.broadcasted_iota(jnp.int32, (BS, V), 1)).astype(jnp.float32)
    x = jnp.dot(onehot, emb_ref[...], preferred_element_type=jnp.float32)  # (BS, E)

    # Static unrolled layer loop (L is small); each layer's weights are a
    # statically-indexed slice of the stacked VMEM-resident weight arrays.
    for l in range(num_layers):
        wqkv, bqkv = wqkv_ref[l], bqkv_ref[l]          # (E, 3E), (1, 3E)
        wo, bo = wo_ref[l], bo_ref[l]                  # (E, E),  (1, E)
        g1, be1 = g1_ref[l], be1_ref[l]                # (1, E) each
        w1, b1 = w1_ref[l], b1_ref[l]                  # (E, F),  (1, F)
        w2, b2 = w2_ref[l], b2_ref[l]                  # (F, E),  (1, E)
        g2, be2 = g2_ref[l], be2_ref[l]                # (1, E) each

        # --- fused QKV projection over the whole (B*S, E) slab ---
        qkv = jnp.dot(x, wqkv, preferred_element_type=jnp.float32) + bqkv  # (BS, 3E)

        # --- per (batch, head) scores / softmax / weighted sum (tiny S x S) ---
        for b in range(batch):
            r0 = b * seq
            for h in range(num_heads):
                c0 = h * D
                q = qkv[r0:r0 + seq, c0:c0 + D] * scale            # scale folded into q
                k = qkv[r0:r0 + seq, E + c0:E + c0 + D]
                v = qkv[r0:r0 + seq, 2 * E + c0:2 * E + c0 + D]
                # contract on last dim of both operands -> no k transpose.
                s = lax.dot_general(q, k, (((1,), (1,)), ((), ())),
                                    preferred_element_type=jnp.float32)    # (S, S)
                s = s - jnp.max(s, axis=-1, keepdims=True)
                p = jnp.exp(s)
                p = p * pl.reciprocal(jnp.sum(p, axis=-1, keepdims=True), approx=True)
                a = jnp.dot(p, v, preferred_element_type=jnp.float32)      # (S, D)
                ctx_ref[pl.ds(r0, seq), pl.ds(c0, D)] = a

        # --- one out-projection for all batches and heads ---
        attn = jnp.dot(ctx_ref[...], wo, preferred_element_type=jnp.float32) + bo

        # --- residual + LayerNorm1 ---
        y = _layer_norm(x + attn, g1, be1)

        # --- feed-forward (ReLU) on the full slab ---
        hid = jnp.maximum(jnp.dot(y, w1, preferred_element_type=jnp.float32) + b1, 0.0)
        ff = jnp.dot(hid, w2, preferred_element_type=jnp.float32) + b2

        # --- residual + LayerNorm2 ---
        x = _layer_norm(y + ff, g2, be2)

    o_ref[...] = x


def commonsense_reasoner_forward(inputs, params, cfg):
    """inputs: int32 (B, S) token ids. Returns float32 (B, S, E)."""
    B, S = inputs.shape
    E = cfg["embedding_dim"]
    L = cfg["initial_layers"]
    H = cfg["initial_attention_heads"]

    ids = inputs.reshape(B * S, 1).astype(jnp.int32)
    weight_names = ("wqkv", "bqkv", "wo", "bo", "g1", "be1",
                    "w1", "b1", "w2", "b2", "g2", "be2")
    stacked = [params[name] for name in weight_names]
    n_in = 2 + len(stacked)

    # Single kernel launch for the whole forward.  All weights (~70 KB) are
    # VMEM-resident; no grid is needed at these shapes.
    # TODO(synk): at larger B, add grid=(B,) with dimension_semantics=("parallel",)
    # so v7x's second TensorCore takes half the batch.
    out2d = pl.pallas_call(
        functools.partial(fused_reasoner_kernel, num_heads=H,
                          num_layers=L, batch=B, seq=S),
        out_shape=jax.ShapeDtypeStruct((B * S, E), jnp.float32),
        in_specs=[pl.BlockSpec(memory_space=pltpu.MemorySpace.VMEM)
                  for _ in range(n_in)],
        out_specs=pl.BlockSpec(memory_space=pltpu.MemorySpace.VMEM),
        scratch_shapes=[pltpu.VMEM((B * S, E), jnp.float32)],   # attention context slab
    )(ids, params["embedding"], *stacked)
    return out2d.reshape(B, S, E)


# ----------------------------- parameters ----------------------------------


def init_params(key, cfg):
    E = cfg["embedding_dim"]
    F = cfg["feedforward_dim"]
    V = cfg["vocab_size"]
    L = cfg["initial_layers"]

    keys = jax.random.split(key, 10)
    emb = jax.random.normal(keys[0], (V, E), jnp.float32) * 0.02

    # modal_merge = nn.Linear(2E, E): defined by CommonsenseReasoner.__init__
    # but unused in the forward(inputs, knowledge_base=None) path.
    modal_merge = dict(
        w=jax.random.normal(keys[1], (2 * E, E), jnp.float32) * 0.05,
        b=jnp.zeros((1, E), jnp.float32),
    )

    p = dict(embedding=emb, modal_merge=modal_merge)
    p["wqkv"] = jax.random.normal(keys[2], (L, E, 3 * E), jnp.float32) * 0.05
    p["bqkv"] = jax.random.normal(keys[3], (L, 1, 3 * E), jnp.float32) * 0.01
    p["wo"] = jax.random.normal(keys[4], (L, E, E), jnp.float32) * 0.05
    p["bo"] = jax.random.normal(keys[5], (L, 1, E), jnp.float32) * 0.01
    p["g1"] = jnp.ones((L, 1, E), jnp.float32)
    p["be1"] = jnp.zeros((L, 1, E), jnp.float32)
    p["w1"] = jax.random.normal(keys[6], (L, E, F), jnp.float32) * 0.05
    p["b1"] = jax.random.normal(keys[7], (L, 1, F), jnp.float32) * 0.01
    p["w2"] = jax.random.normal(keys[8], (L, F, E), jnp.float32) * 0.05
    p["b2"] = jax.random.normal(keys[9], (L, 1, E), jnp.float32) * 0.01
    p["g2"] = jnp.ones((L, 1, E), jnp.float32)
    p["be2"] = jnp.zeros((L, 1, E), jnp.float32)
    return p


# ------------------------------ reference ----------------------------------


def reference_forward(inputs, params, cfg):
    """Pure-JAX reference mirroring the PyTorch math (correctness check)."""
    E = cfg["embedding_dim"]
    H = cfg["initial_attention_heads"]
    D = E // H
    x = jnp.take(params["embedding"], inputs, axis=0)   # (B, S, E)
    for l in range(cfg["initial_layers"]):
        wqkv, bqkv = params["wqkv"][l], params["bqkv"][l]
        wo, bo = params["wo"][l], params["bo"][l]
        g1, be1 = params["g1"][l], params["be1"][l]
        w1, b1 = params["w1"][l], params["b1"][l]
        w2, b2 = params["w2"][l], params["b2"][l]
        g2, be2 = params["g2"][l], params["be2"][l]

        qkv = x @ wqkv + bqkv                                   # (B, S, 3E)
        attn = jnp.zeros_like(x)
        for h in range(H):
            q = qkv[..., h * D:(h + 1) * D]
            k = qkv[..., E + h * D:E + (h + 1) * D]
            v = qkv[..., 2 * E + h * D:2 * E + (h + 1) * D]
            s = jnp.einsum("bqd,bkd->bqk", q, k) / jnp.sqrt(float(D))
            p = jax.nn.softmax(s, axis=-1)
            a = jnp.einsum("bqk,bkd->bqd", p, v)
            attn = attn + a @ wo[h * D:(h + 1) * D, :]
        attn = attn + bo
        x = _layer_norm(x + attn, g1, be1)
        ff = jnp.maximum(x @ w1 + b1, 0.0) @ w2 + b2
        x = _layer_norm(x + ff, g2, be2)
    return x


# -------------------------------- main --------------------------------------


if __name__ == "__main__":
    cfg = dict(
        vocab_size=50,
        embedding_dim=32,
        feedforward_dim=64,
        initial_attention_heads=2,
        initial_layers=2,
    )
    key = jax.random.PRNGKey(0)
    pkey, dkey = jax.random.split(key)
    params = init_params(pkey, cfg)

    B, S = 2, 8
    inputs = jax.random.randint(dkey, (B, S), 0, cfg["vocab_size"], jnp.int32)

    out = commonsense_reasoner_forward(inputs, params, cfg)
    out = jax.block_until_ready(out)

    ref = reference_forward(inputs, params, cfg)
    assert out.shape == (B, S, cfg["embedding_dim"])
    assert bool(jnp.all(jnp.isfinite(out)))
    # approx=True reciprocal in the in-kernel softmax -> slightly looser tolerance.
    assert bool(jnp.allclose(out, ref, atol=2e-3, rtol=2e-3))

    # TODO(synk): incorporate_external_knowledge (graph knowledge_base walk) has
    # no tensor-program equivalent; only the knowledge_base=None forward path is
    # implemented.
    print("KERNEL_OK")
</pallas_src>

<mosaic_0001>
module attributes {stable_mosaic.version = 11 : i64} {
  func.func @fused_reasoner_kernel(%arg0: memref<16x1xi32, #tpu.memory_space<vmem>>, %arg1: memref<50x32xf32, #tpu.memory_space<vmem>>, %arg2: memref<2x32x96xf32, #tpu.memory_space<vmem>>, %arg3: memref<2x1x96xf32, #tpu.memory_space<vmem>>, %arg4: memref<2x32x32xf32, #tpu.memory_space<vmem>>, %arg5: memref<2x1x32xf32, #tpu.memory_space<vmem>>, %arg6: memref<2x1x32xf32, #tpu.memory_space<vmem>>, %arg7: memref<2x1x32xf32, #tpu.memory_space<vmem>>, %arg8: memref<2x32x64xf32, #tpu.memory_space<vmem>>, %arg9: memref<2x1x64xf32, #tpu.memory_space<vmem>>, %arg10: memref<2x64x32xf32, #tpu.memory_space<vmem>>, %arg11: memref<2x1x32xf32, #tpu.memory_space<vmem>>, %arg12: memref<2x1x32xf32, #tpu.memory_space<vmem>>, %arg13: memref<2x1x32xf32, #tpu.memory_space<vmem>>, %arg14: memref<16x32xf32, #tpu.memory_space<vmem>>, %arg15: memref<16x32xf32, #tpu.memory_space<vmem>>) attributes {dimension_semantics = [], scalar_prefetch = 0 : i64, scratch_operands = 1 : i64, tpu.core_type = #tpu.core_type<tc>} {
    %c0 = arith.constant 0 : index
    %c0_0 = arith.constant 0 : index
    %0 = vector.load %arg0[%c0, %c0_0] : memref<16x1xi32, #tpu.memory_space<vmem>>, vector<16x1xi32>
    %1 = tpu.iota {dimensions = array<i32: 1>} : vector<16x50xi32>
    %2 = vector.broadcast %0 : vector<16x1xi32> to vector<16x50xi32>
    %3 = arith.cmpi eq, %2, %1 : vector<16x50xi32>
    %4 = arith.extui %3 : vector<16x50xi1> to vector<16x50xi32>
    %5 = arith.sitofp %4 : vector<16x50xi32> to vector<16x50xf32>
    %c0_1 = arith.constant 0 : index
    %c0_2 = arith.constant 0 : index
    %6 = vector.load %arg1[%c0_1, %c0_2] : memref<50x32xf32, #tpu.memory_space<vmem>>, vector<50x32xf32>
    %cst = arith.constant dense<0.000000e+00> : vector<16x32xf32>
    %7 = tpu.matmul %5, %6, %cst {dimension_numbers = #tpu.dot_dimension_numbers<[1], [0], [0], [1], [0, 0, 1, 1], [], []>} : vector<16x50xf32>, vector<50x32xf32>, vector<16x32xf32> -> vector<16x32xf32>
    %c0_3 = arith.constant 0 : index
    %c0_4 = arith.constant 0 : index
    %c0_5 = arith.constant 0 : index
    %8 = vector.load %arg2[%c0_3, %c0_4, %c0_5] : memref<2x32x96xf32, #tpu.memory_space<vmem>>, vector<1x32x96xf32>
    %9 = vector.shape_cast %8 : vector<1x32x96xf32> to vector<32x96xf32>
    %c0_6 = arith.constant 0 : index
    %c0_7 = arith.constant 0 : index
    %c0_8 = arith.constant 0 : index
    %10 = vector.load %arg3[%c0_6, %c0_7, %c0_8] : memref<2x1x96xf32, #tpu.memory_space<vmem>>, vector<1x1x96xf32>
    %11 = vector.shape_cast %10 : vector<1x1x96xf32> to vector<1x96xf32>
    %c0_9 = arith.constant 0 : index
    %c0_10 = arith.constant 0 : index
    %c0_11 = arith.constant 0 : index
    %12 = vector.load %arg4[%c0_9, %c0_10, %c0_11] : memref<2x32x32xf32, #tpu.memory_space<vmem>>, vector<1x32x32xf32>
    %13 = vector.shape_cast %12 : vector<1x32x32xf32> to vector<32x32xf32>
    %c0_12 = arith.constant 0 : index
    %c0_13 = arith.constant 0 : index
    %c0_14 = arith.constant 0 : index
    %14 = vector.load %arg5[%c0_12, %c0_13, %c0_14] : memref<2x1x32xf32, #tpu.memory_space<vmem>>, vector<1x1x32xf32>
    %15 = vector.shape_cast %14 : vector<1x1x32xf32> to vector<1x32xf32>
    %c0_15 = arith.constant 0 : index
    %c0_16 = arith.constant 0 : index
    %c0_17 = arith.constant 0 : index
    %16 = vector.load %arg6[%c0_15, %c0_16, %c0_17] : memref<2x1x32xf32, #tpu.memory_space<vmem>>, vector<1x1x32xf32>
    %17 = vector.shape_cast %16 : vector<1x1x32xf32> to vector<1x32xf32>
    %c0_18 = arith.constant 0 : index
    %c0_19 = arith.constant 0 : index
    %c0_20 = arith.constant 0 : index
    %18 = vector.load %arg7[%c0_18, %c0_19, %c0_20] : memref<2x1x32xf32, #tpu.memory_space<vmem>>, vector<1x1x32xf32>
    %19 = vector.shape_cast %18 : vector<1x1x32xf32> to vector<1x32xf32>
    %c0_21 = arith.constant 0 : index
    %c0_22 = arith.constant 0 : index
    %c0_23 = arith.constant 0 : index
    %20 = vector.load %arg8[%c0_21, %c0_22, %c0_23] : memref<2x32x64xf32, #tpu.memory_space<vmem>>, vector<1x32x64xf32>
    %21 = vector.shape_cast %20 : vector<1x32x64xf32> to vector<32x64xf32>
    %c0_24 = arith.constant 0 : index
    %c0_25 = arith.constant 0 : index
    %c0_26 = arith.constant 0 : index
    %22 = vector.load %arg9[%c0_24, %c0_25, %c0_26] : memref<2x1x64xf32, #tpu.memory_space<vmem>>, vector<1x1x64xf32>
    %23 = vector.shape_cast %22 : vector<1x1x64xf32> to vector<1x64xf32>
    %c0_27 = arith.constant 0 : index
    %c0_28 = arith.constant 0 : index
    %c0_29 = arith.constant 0 : index
    %24 = vector.load %arg10[%c0_27, %c0_28, %c0_29] : memref<2x64x32xf32, #tpu.memory_space<vmem>>, vector<1x64x32xf32>
    %25 = vector.shape_cast %24 : vector<1x64x32xf32> to vector<64x32xf32>
    %c0_30 = arith.constant 0 : index
    %c0_31 = arith.constant 0 : index
    %c0_32 = arith.constant 0 : index
    %26 = vector.load %arg11[%c0_30, %c0_31, %c0_32] : memref<2x1x32xf32, #tpu.memory_space<vmem>>, vector<1x1x32xf32>
    %27 = vector.shape_cast %26 : vector<1x1x32xf32> to vector<1x32xf32>
    %c0_33 = arith.constant 0 : index
    %c0_34 = arith.constant 0 : index
    %c0_35 = arith.constant 0 : index
    %28 = vector.load %arg12[%c0_33, %c0_34, %c0_35] : memref<2x1x32xf32, #tpu.memory_space<vmem>>, vector<1x1x32xf32>
    %29 = vector.shape_cast %28 : vector<1x1x32xf32> to vector<1x32xf32>
    %c0_36 = arith.constant 0 : index
    %c0_37 = arith.constant 0 : index
    %c0_38 = arith.constant 0 : index
    %30 = vector.load %arg13[%c0_36, %c0_37, %c0_38] : memref<2x1x32xf32, #tpu.memory_space<vmem>>, vector<1x1x32xf32>
    %31 = vector.shape_cast %30 : vector<1x1x32xf32> to vector<1x32xf32>
    %cst_39 = arith.constant dense<0.000000e+00> : vector<16x96xf32>
    %32 = tpu.matmul %7, %9, %cst_39 {dimension_numbers = #tpu.dot_dimension_numbers<[1], [0], [0], [1], [0, 0, 1, 1], [], []>} : vector<16x32xf32>, vector<32x96xf32>, vector<16x96xf32> -> vector<16x96xf32>
    %33 = vector.broadcast %11 : vector<1x96xf32> to vector<16x96xf32>
    %34 = arith.addf %32, %33 : vector<16x96xf32>
    %35 = vector.extract_strided_slice %34 {offsets = [0, 0], sizes = [8, 16], strides = [1, 1]} : vector<16x96xf32> to vector<8x16xf32>
    %cst_40 = arith.constant 2.500000e-01 : f32
    %36 = vector.broadcast %cst_40 : f32 to vector<8x16xf32>
    %37 = arith.mulf %35, %36 : vector<8x16xf32>
    %38 = vector.extract_strided_slice %34 {offsets = [0, 32], sizes = [8, 16], strides = [1, 1]} : vector<16x96xf32> to vector<8x16xf32>
    %39 = vector.extract_strided_slice %34 {offsets = [0, 64], sizes = [8, 16], strides = [1, 1]} : vector<16x96xf32> to vector<8x16xf32>
    %cst_41 = arith.constant dense<0.000000e+00> : vector<8x8xf32>
    %40 = tpu.matmul %37, %38, %cst_41 {dimension_numbers = #tpu.dot_dimension_numbers<[1], [1], [0], [0], [0, 0, 1, 0], [], []>} : vector<8x16xf32>, vector<8x16xf32>, vector<8x8xf32> -> vector<8x8xf32>
    %cst_42 = arith.constant dense<0xFF800000> : vector<8xf32>
    %41 = vector.multi_reduction <maximumf>, %40, %cst_42 [1] : vector<8x8xf32> to vector<8xf32>
    %42 = vector.shape_cast %41 : vector<8xf32> to vector<8x1xf32>
    %43 = vector.broadcast %42 : vector<8x1xf32> to vector<8x8xf32>
    %44 = arith.subf %40, %43 : vector<8x8xf32>
    %45 = math.exp %44 : vector<8x8xf32>
    %cst_43 = arith.constant dense<0.000000e+00> : vector<8xf32>
    %46 = vector.multi_reduction <add>, %45, %cst_43 [1] : vector<8x8xf32> to vector<8xf32>
    %47 = vector.shape_cast %46 : vector<8xf32> to vector<8x1xf32>
    %48 = tpu.reciprocal %47 {approx = true} : vector<8x1xf32> -> vector<8x1xf32>
    %49 = vector.broadcast %48 : vector<8x1xf32> to vector<8x8xf32>
    %50 = arith.mulf %45, %49 : vector<8x8xf32>
    %cst_44 = arith.constant dense<0.000000e+00> : vector<8x16xf32>
    %51 = tpu.matmul %50, %39, %cst_44 {dimension_numbers = #tpu.dot_dimension_numbers<[1], [0], [0], [1], [0, 0, 1, 1], [], []>} : vector<8x8xf32>, vector<8x16xf32>, vector<8x16xf32> -> vector<8x16xf32>
    %c0_45 = arith.constant 0 : index
    %c0_46 = arith.constant 0 : index
    %52 = vector.load %arg15[%c0_45, %c0_46] : memref<16x32xf32, #tpu.memory_space<vmem>>, vector<8x16xf32>
    tpu.vector_store %arg15[%c0_45, %c0_46], %51 {strides = array<i32>} : memref<16x32xf32, #tpu.memory_space<vmem>>, vector<8x16xf32>,
    %53 = vector.extract_strided_slice %34 {offsets = [0, 16], sizes = [8, 16], strides = [1, 1]} : vector<16x96xf32> to vector<8x16xf32>
    %cst_47 = arith.constant 2.500000e-01 : f32
    %54 = vector.broadcast %cst_47 : f32 to vector<8x16xf32>
    %55 = arith.mulf %53, %54 : vector<8x16xf32>
    %56 = vector.extract_strided_slice %34 {offsets = [0, 48], sizes = [8, 16], strides = [1, 1]} : vector<16x96xf32> to vector<8x16xf32>
    %57 = vector.extract_strided_slice %34 {offsets = [0, 80], sizes = [8, 16], strides = [1, 1]} : vector<16x96xf32> to vector<8x16xf32>
    %cst_48 = arith.constant dense<0.000000e+00> : vector<8x8xf32>
    %58 = tpu.matmul %55, %56, %cst_48 {dimension_numbers = #tpu.dot_dimension_numbers<[1], [1], [0], [0], [0, 0, 1, 0], [], []>} : vector<8x16xf32>, vector<8x16xf32>, vector<8x8xf32> -> vector<8x8xf32>
    %cst_49 = arith.constant dense<0xFF800000> : vector<8xf32>
    %59 = vector.multi_reduction <maximumf>, %58, %cst_49 [1] : vector<8x8xf32> to vector<8xf32>
    %60 = vector.shape_cast %59 : vector<8xf32> to vector<8x1xf32>
    %61 = vector.broadcast %60 : vector<8x1xf32> to vector<8x8xf32>
    %62 = arith.subf %58, %61 : vector<8x8xf32>
    %63 = math.exp %62 : vector<8x8xf32>
    %cst_50 = arith.constant dense<0.000000e+00> : vector<8xf32>
    %64 = vector.multi_reduction <add>, %63, %cst_50 [1] : vector<8x8xf32> to vector<8xf32>
    %65 = vector.shape_cast %64 : vector<8xf32> to vector<8x1xf32>
    %66 = tpu.reciprocal %65 {approx = true} : vector<8x1xf32> -> vector<8x1xf32>
    %67 = vector.broadcast %66 : vector<8x1xf32> to vector<8x8xf32>
    %68 = arith.mulf %63, %67 : vector<8x8xf32>
    %cst_51 = arith.constant dense<0.000000e+00> : vector<8x16xf32>
    %69 = tpu.matmul %68, %57, %cst_51 {dimension_numbers = #tpu.dot_dimension_numbers<[1], [0], [0], [1], [0, 0, 1, 1], [], []>} : vector<8x8xf32>, vector<8x16xf32>, vector<8x16xf32> -> vector<8x16xf32>
    %c0_52 = arith.constant 0 : index
    %c16 = arith.constant 16 : index
    %70 = vector.load %arg15[%c0_52, %c16] : memref<16x32xf32, #tpu.memory_space<vmem>>, vector<8x16xf32>
    tpu.vector_store %arg15[%c0_52, %c16], %69 {strides = array<i32>} : memref<16x32xf32, #tpu.memory_space<vmem>>, vector<8x16xf32>,
    %71 = vector.extract_strided_slice %34 {offsets = [8, 0], sizes = [8, 16], strides = [1, 1]} : vector<16x96xf32> to vector<8x16xf32>
    %cst_53 = arith.constant 2.500000e-01 : f32
    %72 = vector.broadcast %cst_53 : f32 to vector<8x16xf32>
    %73 = arith.mulf %71, %72 : vector<8x16xf32>
    %74 = vector.extract_strided_slice %34 {offsets = [8, 32], sizes = [8, 16], strides = [1, 1]} : vector<16x96xf32> to vector<8x16xf32>
    %75 = vector.extract_strided_slice %34 {offsets = [8, 64], sizes = [8, 16], strides = [1, 1]} : vector<16x96xf32> to vector<8x16xf32>
    %cst_54 = arith.constant dense<0.000000e+00> : vector<8x8xf32>
    %76 = tpu.matmul %73, %74, %cst_54 {dimension_numbers = #tpu.dot_dimension_numbers<[1], [1], [0], [0], [0, 0, 1, 0], [], []>} : vector<8x16xf32>, vector<8x16xf32>, vector<8x8xf32> -> vector<8x8xf32>
    %cst_55 = arith.constant dense<0xFF800000> : vector<8xf32>
    %77 = vector.multi_reduction <maximumf>, %76, %cst_55 [1] : vector<8x8xf32> to vector<8xf32>
    %78 = vector.shape_cast %77 : vector<8xf32> to vector<8x1xf32>
    %79 = vector.broadcast %78 : vector<8x1xf32> to vector<8x8xf32>
    %80 = arith.subf %76, %79 : vector<8x8xf32>
    %81 = math.exp %80 : vector<8x8xf32>
    %cst_56 = arith.constant dense<0.000000e+00> : vector<8xf32>
    %82 = vector.multi_reduction <add>, %81, %cst_56 [1] : vector<8x8xf32> to vector<8xf32>
    %83 = vector.shape_cast %82 : vector<8xf32> to vector<8x1xf32>
    %84 = tpu.reciprocal %83 {approx = true} : vector<8x1xf32> -> vector<8x1xf32>
    %85 = vector.broadcast %84 : vector<8x1xf32> to vector<8x8xf32>
    %86 = arith.mulf %81, %85 : vector<8x8xf32>
    %cst_57 = arith.constant dense<0.000000e+00> : vector<8x16xf32>
    %87 = tpu.matmul %86, %75, %cst_57 {dimension_numbers = #tpu.dot_dimension_numbers<[1], [0], [0], [1], [0, 0, 1, 1], [], []>} : vector<8x8xf32>, vector<8x16xf32>, vector<8x16xf32> -> vector<8x16xf32>
    %c8 = arith.constant 8 : index
    %c0_58 = arith.constant 0 : index
    %88 = vector.load %arg15[%c8, %c0_58] : memref<16x32xf32, #tpu.memory_space<vmem>>, vector<8x16xf32>
    tpu.vector_store %arg15[%c8, %c0_58], %87 {strides = array<i32>} : memref<16x32xf32, #tpu.memory_space<vmem>>, vector<8x16xf32>,
    %89 = vector.extract_strided_slice %34 {offsets = [8, 16], sizes = [8, 16], strides = [1, 1]} : vector<16x96xf32> to vector<8x16xf32>
    %cst_59 = arith.constant 2.500000e-01 : f32
    %90 = vector.broadcast %cst_59 : f32 to vector<8x16xf32>
    %91 = arith.mulf %89, %90 : vector<8x16xf32>
    %92 = vector.extract_strided_slice %34 {offsets = [8, 48], sizes = [8, 16], strides = [1, 1]} : vector<16x96xf32> to vector<8x16xf32>
    %93 = vector.extract_strided_slice %34 {offsets = [8, 80], sizes = [8, 16], strides = [1, 1]} : vector<16x96xf32> to vector<8x16xf32>
    %cst_60 = arith.constant dense<0.000000e+00> : vector<8x8xf32>
    %94 = tpu.matmul %91, %92, %cst_60 {dimension_numbers = #tpu.dot_dimension_numbers<[1], [1], [0], [0], [0, 0, 1, 0], [], []>} : vector<8x16xf32>, vector<8x16xf32>, vector<8x8xf32> -> vector<8x8xf32>
    %cst_61 = arith.constant dense<0xFF800000> : vector<8xf32>
    %95 = vector.multi_reduction <maximumf>, %94, %cst_61 [1] : vector<8x8xf32> to vector<8xf32>
    %96 = vector.shape_cast %95 : vector<8xf32> to vector<8x1xf32>
    %97 = vector.broadcast %96 : vector<8x1xf32> to vector<8x8xf32>
    %98 = arith.subf %94, %97 : vector<8x8xf32>
    %99 = math.exp %98 : vector<8x8xf32>
    %cst_62 = arith.constant dense<0.000000e+00> : vector<8xf32>
    %100 = vector.multi_reduction <add>, %99, %cst_62 [1] : vector<8x8xf32> to vector<8xf32>
    %101 = vector.shape_cast %100 : vector<8xf32> to vector<8x1xf32>
    %102 = tpu.reciprocal %101 {approx = true} : vector<8x1xf32> -> vector<8x1xf32>
    %103 = vector.broadcast %102 : vector<8x1xf32> to vector<8x8xf32>
    %104 = arith.mulf %99, %103 : vector<8x8xf32>
    %cst_63 = arith.constant dense<0.000000e+00> : vector<8x16xf32>
    %105 = tpu.matmul %104, %93, %cst_63 {dimension_numbers = #tpu.dot_dimension_numbers<[1], [0], [0], [1], [0, 0, 1, 1], [], []>} : vector<8x8xf32>, vector<8x16xf32>, vector<8x16xf32> -> vector<8x16xf32>
    %c8_64 = arith.constant 8 : index
    %c16_65 = arith.constant 16 : index
    %106 = vector.load %arg15[%c8_64, %c16_65] : memref<16x32xf32, #tpu.memory_space<vmem>>, vector<8x16xf32>
    tpu.vector_store %arg15[%c8_64, %c16_65], %105 {strides = array<i32>} : memref<16x32xf32, #tpu.memory_space<vmem>>, vector<8x16xf32>,
    %c0_66 = arith.constant 0 : index
    %c0_67 = arith.constant 0 : index
    %107 = vector.load %arg15[%c0_66, %c0_67] : memref<16x32xf32, #tpu.memory_space<vmem>>, vector<16x32xf32>
    %cst_68 = arith.constant dense<0.000000e+00> : vector<16x32xf32>
    %108 = tpu.matmul %107, %13, %cst_68 {dimension_numbers = #tpu.dot_dimension_numbers<[1], [0], [0], [1], [0, 0, 1, 1], [], []>} : vector<16x32xf32>, vector<32x32xf32>, vector<16x32xf32> -> vector<16x32xf32>
    %109 = vector.broadcast %15 : vector<1x32xf32> to vector<16x32xf32>
    %110 = arith.addf %108, %109 : vector<16x32xf32>
    %111 = arith.addf %7, %110 : vector<16x32xf32>
    %cst_69 = arith.constant dense<0.000000e+00> : vector<16xf32>
    %112 = vector.multi_reduction <add>, %111, %cst_69 [1] : vector<16x32xf32> to vector<16xf32>
    %113 = vector.shape_cast %112 : vector<16xf32> to vector<16x1xf32>
    %cst_70 = arith.constant 3.200000e+01 : f32
    %114 = vector.broadcast %cst_70 : f32 to vector<16x1xf32>
    %115 = arith.divf %113, %114 : vector<16x1xf32>
    %116 = vector.broadcast %115 : vector<16x1xf32> to vector<16x32xf32>
    %117 = arith.subf %111, %116 : vector<16x32xf32>
    %118 = arith.mulf %117, %117 : vector<16x32xf32>
    %cst_71 = arith.constant dense<0.000000e+00> : vector<16xf32>
    %119 = vector.multi_reduction <add>, %118, %cst_71 [1] : vector<16x32xf32> to vector<16xf32>
    %120 = vector.shape_cast %119 : vector<16xf32> to vector<16x1xf32>
    %cst_72 = arith.constant 3.200000e+01 : f32
    %121 = vector.broadcast %cst_72 : f32 to vector<16x1xf32>
    %122 = arith.divf %120, %121 : vector<16x1xf32>
    %123 = vector.broadcast %115 : vector<16x1xf32> to vector<16x32xf32>
    %124 = arith.subf %111, %123 : vector<16x32xf32>
    %cst_73 = arith.constant 9.99999974E-6 : f32
    %125 = vector.broadcast %cst_73 : f32 to vector<16x1xf32>
    %126 = arith.addf %122, %125 : vector<16x1xf32>
    %127 = math.rsqrt %126 : vector<16x1xf32>
    %128 = vector.broadcast %127 : vector<16x1xf32> to vector<16x32xf32>
    %129 = arith.mulf %124, %128 : vector<16x32xf32>
    %130 = vector.broadcast %17 : vector<1x32xf32> to vector<16x32xf32>
    %131 = arith.mulf %129, %130 : vector<16x32xf32>
    %132 = vector.broadcast %19 : vector<1x32xf32> to vector<16x32xf32>
    %133 = arith.addf %131, %132 : vector<16x32xf32>
    %cst_74 = arith.constant dense<0.000000e+00> : vector<16x64xf32>
    %134 = tpu.matmul %133, %21, %cst_74 {dimension_numbers = #tpu.dot_dimension_numbers<[1], [0], [0], [1], [0, 0, 1, 1], [], []>} : vector<16x32xf32>, vector<32x64xf32>, vector<16x64xf32> -> vector<16x64xf32>
    %135 = vector.broadcast %23 : vector<1x64xf32> to vector<16x64xf32>
    %136 = arith.addf %134, %135 : vector<16x64xf32>
    %cst_75 = arith.constant 0.000000e+00 : f32
    %137 = vector.broadcast %cst_75 : f32 to vector<16x64xf32>
    %138 = arith.maximumf %136, %137 : vector<16x64xf32>
    %cst_76 = arith.constant dense<0.000000e+00> : vector<16x32xf32>
    %139 = tpu.matmul %138, %25, %cst_76 {dimension_numbers = #tpu.dot_dimension_numbers<[1], [0], [0], [1], [0, 0, 1, 1], [], []>} : vector<16x64xf32>, vector<64x32xf32>, vector<16x32xf32> -> vector<16x32xf32>
    %140 = vector.broadcast %27 : vector<1x32xf32> to vector<16x32xf32>
    %141 = arith.addf %139, %140 : vector<16x32xf32>
    %142 = arith.addf %133, %141 : vector<16x32xf32>
    %cst_77 = arith.constant dense<0.000000e+00> : vector<16xf32>
    %143 = vector.multi_reduction <add>, %142, %cst_77 [1] : vector<16x32xf32> to vector<16xf32>
    %144 = vector.shape_cast %143 : vector<16xf32> to vector<16x1xf32>
    %cst_78 = arith.constant 3.200000e+01 : f32
    %145 = vector.broadcast %cst_78 : f32 to vector<16x1xf32>
    %146 = arith.divf %144, %145 : vector<16x1xf32>
    %147 = vector.broadcast %146 : vector<16x1xf32> to vector<16x32xf32>
    %148 = arith.subf %142, %147 : vector<16x32xf32>
    %149 = arith.mulf %148, %148 : vector<16x32xf32>
    %cst_79 = arith.constant dense<0.000000e+00> : vector<16xf32>
    %150 = vector.multi_reduction <add>, %149, %cst_79 [1] : vector<16x32xf32> to vector<16xf32>
    %151 = vector.shape_cast %150 : vector<16xf32> to vector<16x1xf32>
    %cst_80 = arith.constant 3.200000e+01 : f32
    %152 = vector.broadcast %cst_80 : f32 to vector<16x1xf32>
    %153 = arith.divf %151, %152 : vector<16x1xf32>
    %154 = vector.broadcast %146 : vector<16x1xf32> to vector<16x32xf32>
    %155 = arith.subf %142, %154 : vector<16x32xf32>
    %cst_81 = arith.constant 9.99999974E-6 : f32
    %156 = vector.broadcast %cst_81 : f32 to vector<16x1xf32>
    %157 = arith.addf %153, %156 : vector<16x1xf32>
    %158 = math.rsqrt %157 : vector<16x1xf32>
    %159 = vector.broadcast %158 : vector<16x1xf32> to vector<16x32xf32>
    %160 = arith.mulf %155, %159 : vector<16x32xf32>
    %161 = vector.broadcast %29 : vector<1x32xf32> to vector<16x32xf32>
    %162 = arith.mulf %160, %161 : vector<16x32xf32>
    %163 = vector.broadcast %31 : vector<1x32xf32> to vector<16x32xf32>
    %164 = arith.addf %162, %163 : vector<16x32xf32>
    %c1 = arith.constant 1 : index
    %c0_82 = arith.constant 0 : index
    %c0_83 = arith.constant 0 : index
    %165 = vector.load %arg2[%c1, %c0_82, %c0_83] : memref<2x32x96xf32, #tpu.memory_space<vmem>>, vector<1x32x96xf32>
    %166 = vector.shape_cast %165 : vector<1x32x96xf32> to vector<32x96xf32>
    %c1_84 = arith.constant 1 : index
    %c0_85 = arith.constant 0 : index
    %c0_86 = arith.constant 0 : index
    %167 = vector.load %arg3[%c1_84, %c0_85, %c0_86] : memref<2x1x96xf32, #tpu.memory_space<vmem>>, vector<1x1x96xf32>
    %168 = vector.shape_cast %167 : vector<1x1x96xf32> to vector<1x96xf32>
    %c1_87 = arith.constant 1 : index
    %c0_88 = arith.constant 0 : index
    %c0_89 = arith.constant 0 : index
    %169 = vector.load %arg4[%c1_87, %c0_88, %c0_89] : memref<2x32x32xf32, #tpu.memory_space<vmem>>, vector<1x32x32xf32>
    %170 = vector.shape_cast %169 : vector<1x32x32xf32> to vector<32x32xf32>
    %c1_90 = arith.constant 1 : index
    %c0_91 = arith.constant 0 : index
    %c0_92 = arith.constant 0 : index
    %171 = vector.load %arg5[%c1_90, %c0_91, %c0_92] : memref<2x1x32xf32, #tpu.memory_space<vmem>>, vector<1x1x32xf32>
    %172 = vector.shape_cast %171 : vector<1x1x32xf32> to vector<1x32xf32>
    %c1_93 = arith.constant 1 : index
    %c0_94 = arith.constant 0 : index
    %c0_95 = arith.constant 0 : index
    %173 = vector.load %arg6[%c1_93, %c0_94, %c0_95] : memref<2x1x32xf32, #tpu.memory_space<vmem>>, vector<1x1x32xf32>
    %174 = vector.shape_cast %173 : vector<1x1x32xf32> to vector<1x32xf32>
    %c1_96 = arith.constant 1 : index
    %c0_97 = arith.constant 0 : index
    %c0_98 = arith.constant 0 : index
    %175 = vector.load %arg7[%c1_96, %c0_97, %c0_98] : memref<2x1x32xf32, #tpu.memory_space<vmem>>, vector<1x1x32xf32>
    %176 = vector.shape_cast %175 : vector<1x1x32xf32> to vector<1x32xf32>
    %c1_99 = arith.constant 1 : index
    %c0_100 = arith.constant 0 : index
    %c0_101 = arith.constant 0 : index
    %177 = vector.load %arg8[%c1_99, %c0_100, %c0_101] : memref<2x32x64xf32, #tpu.memory_space<vmem>>, vector<1x32x64xf32>
    %178 = vector.shape_cast %177 : vector<1x32x64xf32> to vector<32x64xf32>
    %c1_102 = arith.constant 1 : index
    %c0_103 = arith.constant 0 : index
    %c0_104 = arith.constant 0 : index
    %179 = vector.load %arg9[%c1_102, %c0_103, %c0_104] : memref<2x1x64xf32, #tpu.memory_space<vmem>>, vector<1x1x64xf32>
    %180 = vector.shape_cast %179 : vector<1x1x64xf32> to vector<1x64xf32>
    %c1_105 = arith.constant 1 : index
    %c0_106 = arith.constant 0 : index
    %c0_107 = arith.constant 0 : index
    %181 = vector.load %arg10[%c1_105, %c0_106, %c0_107] : memref<2x64x32xf32, #tpu.memory_space<vmem>>, vector<1x64x32xf32>
    %182 = vector.shape_cast %181 : vector<1x64x32xf32> to vector<64x32xf32>
    %c1_108 = arith.constant 1 : index
    %c0_109 = arith.constant 0 : index
    %c0_110 = arith.constant 0 : index
    %183 = vector.load %arg11[%c1_108, %c0_109, %c0_110] : memref<2x1x32xf32, #tpu.memory_space<vmem>>, vector<1x1x32xf32>
    %184 = vector.shape_cast %183 : vector<1x1x32xf32> to vector<1x32xf32>
    %c1_111 = arith.constant 1 : index
    %c0_112 = arith.constant 0 : index
    %c0_113 = arith.constant 0 : index
    %185 = vector.load %arg12[%c1_111, %c0_112, %c0_113] : memref<2x1x32xf32, #tpu.memory_space<vmem>>, vector<1x1x32xf32>
    %186 = vector.shape_cast %185 : vector<1x1x32xf32> to vector<1x32xf32>
    %c1_114 = arith.constant 1 : index
    %c0_115 = arith.constant 0 : index
    %c0_116 = arith.constant 0 : index
    %187 = vector.load %arg13[%c1_114, %c0_115, %c0_116] : memref<2x1x32xf32, #tpu.memory_space<vmem>>, vector<1x1x32xf32>
    %188 = vector.shape_cast %187 : vector<1x1x32xf32> to vector<1x32xf32>
    %cst_117 = arith.constant dense<0.000000e+00> : vector<16x96xf32>
    %189 = tpu.matmul %164, %166, %cst_117 {dimension_numbers = #tpu.dot_dimension_numbers<[1], [0], [0], [1], [0, 0, 1, 1], [], []>} : vector<16x32xf32>, vector<32x96xf32>, vector<16x96xf32> -> vector<16x96xf32>
    %190 = vector.broadcast %168 : vector<1x96xf32> to vector<16x96xf32>
    %191 = arith.addf %189, %190 : vector<16x96xf32>
    %192 = vector.extract_strided_slice %191 {offsets = [0, 0], sizes = [8, 16], strides = [1, 1]} : vector<16x96xf32> to vector<8x16xf32>
    %cst_118 = arith.constant 2.500000e-01 : f32
    %193 = vector.broadcast %cst_118 : f32 to vector<8x16xf32>
    %194 = arith.mulf %192, %193 : vector<8x16xf32>
    %195 = vector.extract_strided_slice %191 {offsets = [0, 32], sizes = [8, 16], strides = [1, 1]} : vector<16x96xf32> to vector<8x16xf32>
    %196 = vector.extract_strided_slice %191 {offsets = [0, 64], sizes = [8, 16], strides = [1, 1]} : vector<16x96xf32> to vector<8x16xf32>
    %cst_119 = arith.constant dense<0.000000e+00> : vector<8x8xf32>
    %197 = tpu.matmul %194, %195, %cst_119 {dimension_numbers = #tpu.dot_dimension_numbers<[1], [1], [0], [0], [0, 0, 1, 0], [], []>} : vector<8x16xf32>, vector<8x16xf32>, vector<8x8xf32> -> vector<8x8xf32>
    %cst_120 = arith.constant dense<0xFF800000> : vector<8xf32>
    %198 = vector.multi_reduction <maximumf>, %197, %cst_120 [1] : vector<8x8xf32> to vector<8xf32>
    %199 = vector.shape_cast %198 : vector<8xf32> to vector<8x1xf32>
    %200 = vector.broadcast %199 : vector<8x1xf32> to vector<8x8xf32>
    %201 = arith.subf %197, %200 : vector<8x8xf32>
    %202 = math.exp %201 : vector<8x8xf32>
    %cst_121 = arith.constant dense<0.000000e+00> : vector<8xf32>
    %203 = vector.multi_reduction <add>, %202, %cst_121 [1] : vector<8x8xf32> to vector<8xf32>
    %204 = vector.shape_cast %203 : vector<8xf32> to vector<8x1xf32>
    %205 = tpu.reciprocal %204 {approx = true} : vector<8x1xf32> -> vector<8x1xf32>
    %206 = vector.broadcast %205 : vector<8x1xf32> to vector<8x8xf32>
    %207 = arith.mulf %202, %206 : vector<8x8xf32>
    %cst_122 = arith.constant dense<0.000000e+00> : vector<8x16xf32>
    %208 = tpu.matmul %207, %196, %cst_122 {dimension_numbers = #tpu.dot_dimension_numbers<[1], [0], [0], [1], [0, 0, 1, 1], [], []>} : vector<8x8xf32>, vector<8x16xf32>, vector<8x16xf32> -> vector<8x16xf32>
    %c0_123 = arith.constant 0 : index
    %c0_124 = arith.constant 0 : index
    %209 = vector.load %arg15[%c0_123, %c0_124] : memref<16x32xf32, #tpu.memory_space<vmem>>, vector<8x16xf32>
    tpu.vector_store %arg15[%c0_123, %c0_124], %208 {strides = array<i32>} : memref<16x32xf32, #tpu.memory_space<vmem>>, vector<8x16xf32>,
    %210 = vector.extract_strided_slice %191 {offsets = [0, 16], sizes = [8, 16], strides = [1, 1]} : vector<16x96xf32> to vector<8x16xf32>
    %cst_125 = arith.constant 2.500000e-01 : f32
    %211 = vector.broadcast %cst_125 : f32 to vector<8x16xf32>
    %212 = arith.mulf %210, %211 : vector<8x16xf32>
    %213 = vector.extract_strided_slice %191 {offsets = [0, 48], sizes = [8, 16], strides = [1, 1]} : vector<16x96xf32> to vector<8x16xf32>
    %214 = vector.extract_strided_slice %191 {offsets = [0, 80], sizes = [8, 16], strides = [1, 1]} : vector<16x96xf32> to vector<8x16xf32>
    %cst_126 = arith.constant dense<0.000000e+00> : vector<8x8xf32>
    %215 = tpu.matmul %212, %213, %cst_126 {dimension_numbers = #tpu.dot_dimension_numbers<[1], [1], [0], [0], [0, 0, 1, 0], [], []>} : vector<8x16xf32>, vector<8x16xf32>, vector<8x8xf32> -> vector<8x8xf32>
    %cst_127 = arith.constant dense<0xFF800000> : vector<8xf32>
    %216 = vector.multi_reduction <maximumf>, %215, %cst_127 [1] : vector<8x8xf32> to vector<8xf32>
    %217 = vector.shape_cast %216 : vector<8xf32> to vector<8x1xf32>
    %218 = vector.broadcast %217 : vector<8x1xf32> to vector<8x8xf32>
    %219 = arith.subf %215, %218 : vector<8x8xf32>
    %220 = math.exp %219 : vector<8x8xf32>
    %cst_128 = arith.constant dense<0.000000e+00> : vector<8xf32>
    %221 = vector.multi_reduction <add>, %220, %cst_128 [1] : vector<8x8xf32> to vector<8xf32>
    %222 = vector.shape_cast %221 : vector<8xf32> to vector<8x1xf32>
    %223 = tpu.reciprocal %222 {approx = true} : vector<8x1xf32> -> vector<8x1xf32>
    %224 = vector.broadcast %223 : vector<8x1xf32> to vector<8x8xf32>
    %225 = arith.mulf %220, %224 : vector<8x8xf32>
    %cst_129 = arith.constant dense<0.000000e+00> : vector<8x16xf32>
    %226 = tpu.matmul %225, %214, %cst_129 {dimension_numbers = #tpu.dot_dimension_numbers<[1], [0], [0], [1], [0, 0, 1, 1], [], []>} : vector<8x8xf32>, vector<8x16xf32>, vector<8x16xf32> -> vector<8x16xf32>
    %c0_130 = arith.constant 0 : index
    %c16_131 = arith.constant 16 : index
    %227 = vector.load %arg15[%c0_130, %c16_131] : memref<16x32xf32, #tpu.memory_space<vmem>>, vector<8x16xf32>
    tpu.vector_store %arg15[%c0_130, %c16_131], %226 {strides = array<i32>} : memref<16x32xf32, #tpu.memory_space<vmem>>, vector<8x16xf32>,
    %228 = vector.extract_strided_slice %191 {offsets = [8, 0], sizes = [8, 16], strides = [1, 1]} : vector<16x96xf32> to vector<8x16xf32>
    %cst_132 = arith.constant 2.500000e-01 : f32
    %229 = vector.broadcast %cst_132 : f32 to vector<8x16xf32>
    %230 = arith.mulf %228, %229 : vector<8x16xf32>
    %231 = vector.extract_strided_slice %191 {offsets = [8, 32], sizes = [8, 16], strides = [1, 1]} : vector<16x96xf32> to vector<8x16xf32>
    %232 = vector.extract_strided_slice %191 {offsets = [8, 64], sizes = [8, 16], strides = [1, 1]} : vector<16x96xf32> to vector<8x16xf32>
    %cst_133 = arith.constant dense<0.000000e+00> : vector<8x8xf32>
    %233 = tpu.matmul %230, %231, %cst_133 {dimension_numbers = #tpu.dot_dimension_numbers<[1], [1], [0], [0], [0, 0, 1, 0], [], []>} : vector<8x16xf32>, vector<8x16xf32>, vector<8x8xf32> -> vector<8x8xf32>
    %cst_134 = arith.constant dense<0xFF800000> : vector<8xf32>
    %234 = vector.multi_reduction <maximumf>, %233, %cst_134 [1] : vector<8x8xf32> to vector<8xf32>
    %235 = vector.shape_cast %234 : vector<8xf32> to vector<8x1xf32>
    %236 = vector.broadcast %235 : vector<8x1xf32> to vector<8x8xf32>
    %237 = arith.subf %233, %236 : vector<8x8xf32>
    %238 = math.exp %237 : vector<8x8xf32>
    %cst_135 = arith.constant dense<0.000000e+00> : vector<8xf32>
    %239 = vector.multi_reduction <add>, %238, %cst_135 [1] : vector<8x8xf32> to vector<8xf32>
    %240 = vector.shape_cast %239 : vector<8xf32> to vector<8x1xf32>
    %241 = tpu.reciprocal %240 {approx = true} : vector<8x1xf32> -> vector<8x1xf32>
    %242 = vector.broadcast %241 : vector<8x1xf32> to vector<8x8xf32>
    %243 = arith.mulf %238, %242 : vector<8x8xf32>
    %cst_136 = arith.constant dense<0.000000e+00> : vector<8x16xf32>
    %244 = tpu.matmul %243, %232, %cst_136 {dimension_numbers = #tpu.dot_dimension_numbers<[1], [0], [0], [1], [0, 0, 1, 1], [], []>} : vector<8x8xf32>, vector<8x16xf32>, vector<8x16xf32> -> vector<8x16xf32>
    %c8_137 = arith.constant 8 : index
    %c0_138 = arith.constant 0 : index
    %245 = vector.load %arg15[%c8_137, %c0_138] : memref<16x32xf32, #tpu.memory_space<vmem>>, vector<8x16xf32>
    tpu.vector_store %arg15[%c8_137, %c0_138], %244 {strides = array<i32>} : memref<16x32xf32, #tpu.memory_space<vmem>>, vector<8x16xf32>,
    %246 = vector.extract_strided_slice %191 {offsets = [8, 16], sizes = [8, 16], strides = [1, 1]} : vector<16x96xf32> to vector<8x16xf32>
    %cst_139 = arith.constant 2.500000e-01 : f32
    %247 = vector.broadcast %cst_139 : f32 to vector<8x16xf32>
    %248 = arith.mulf %246, %247 : vector<8x16xf32>
    %249 = vector.extract_strided_slice %191 {offsets = [8, 48], sizes = [8, 16], strides = [1, 1]} : vector<16x96xf32> to vector<8x16xf32>
    %250 = vector.extract_strided_slice %191 {offsets = [8, 80], sizes = [8, 16], strides = [1, 1]} : vector<16x96xf32> to vector<8x16xf32>
    %cst_140 = arith.constant dense<0.000000e+00> : vector<8x8xf32>
    %251 = tpu.matmul %248, %249, %cst_140 {dimension_numbers = #tpu.dot_dimension_numbers<[1], [1], [0], [0], [0, 0, 1, 0], [], []>} : vector<8x16xf32>, vector<8x16xf32>, vector<8x8xf32> -> vector<8x8xf32>
    %cst_141 = arith.constant dense<0xFF800000> : vector<8xf32>
    %252 = vector.multi_reduction <maximumf>, %251, %cst_141 [1] : vector<8x8xf32> to vector<8xf32>
    %253 = vector.shape_cast %252 : vector<8xf32> to vector<8x1xf32>
    %254 = vector.broadcast %253 : vector<8x1xf32> to vector<8x8xf32>
    %255 = arith.subf %251, %254 : vector<8x8xf32>
    %256 = math.exp %255 : vector<8x8xf32>
    %cst_142 = arith.constant dense<0.000000e+00> : vector<8xf32>
    %257 = vector.multi_reduction <add>, %256, %cst_142 [1] : vector<8x8xf32> to vector<8xf32>
    %258 = vector.shape_cast %257 : vector<8xf32> to vector<8x1xf32>
    %259 = tpu.reciprocal %258 {approx = true} : vector<8x1xf32> -> vector<8x1xf32>
    %260 = vector.broadcast %259 : vector<8x1xf32> to vector<8x8xf32>
    %261 = arith.mulf %256, %260 : vector<8x8xf32>
    %cst_143 = arith.constant dense<0.000000e+00> : vector<8x16xf32>
    %262 = tpu.matmul %261, %250, %cst_143 {dimension_numbers = #tpu.dot_dimension_numbers<[1], [0], [0], [1], [0, 0, 1, 1], [], []>} : vector<8x8xf32>, vector<8x16xf32>, vector<8x16xf32> -> vector<8x16xf32>
    %c8_144 = arith.constant 8 : index
    %c16_145 = arith.constant 16 : index
    %263 = vector.load %arg15[%c8_144, %c16_145] : memref<16x32xf32, #tpu.memory_space<vmem>>, vector<8x16xf32>
    tpu.vector_store %arg15[%c8_144, %c16_145], %262 {strides = array<i32>} : memref<16x32xf32, #tpu.memory_space<vmem>>, vector<8x16xf32>,
    %c0_146 = arith.constant 0 : index
    %c0_147 = arith.constant 0 : index
    %264 = vector.load %arg15[%c0_146, %c0_147] : memref<16x32xf32, #tpu.memory_space<vmem>>, vector<16x32xf32>
    %cst_148 = arith.constant dense<0.000000e+00> : vector<16x32xf32>
    %265 = tpu.matmul %264, %170, %cst_148 {dimension_numbers = #tpu.dot_dimension_numbers<[1], [0], [0], [1], [0, 0, 1, 1], [], []>} : vector<16x32xf32>, vector<32x32xf32>, vector<16x32xf32> -> vector<16x32xf32>
    %266 = vector.broadcast %172 : vector<1x32xf32> to vector<16x32xf32>
    %267 = arith.addf %265, %266 : vector<16x32xf32>
    %268 = arith.addf %164, %267 : vector<16x32xf32>
    %cst_149 = arith.constant dense<0.000000e+00> : vector<16xf32>
    %269 = vector.multi_reduction <add>, %268, %cst_149 [1] : vector<16x32xf32> to vector<16xf32>
    %270 = vector.shape_cast %269 : vector<16xf32> to vector<16x1xf32>
    %cst_150 = arith.constant 3.200000e+01 : f32
    %271 = vector.broadcast %cst_150 : f32 to vector<16x1xf32>
    %272 = arith.divf %270, %271 : vector<16x1xf32>
    %273 = vector.broadcast %272 : vector<16x1xf32> to vector<16x32xf32>
    %274 = arith.subf %268, %273 : vector<16x32xf32>
    %275 = arith.mulf %274, %274 : vector<16x32xf32>
    %cst_151 = arith.constant dense<0.000000e+00> : vector<16xf32>
    %276 = vector.multi_reduction <add>, %275, %cst_151 [1] : vector<16x32xf32> to vector<16xf32>
    %277 = vector.shape_cast %276 : vector<16xf32> to vector<16x1xf32>
    %cst_152 = arith.constant 3.200000e+01 : f32
    %278 = vector.broadcast %cst_152 : f32 to vector<16x1xf32>
    %279 = arith.divf %277, %278 : vector<16x1xf32>
    %280 = vector.broadcast %272 : vector<16x1xf32> to vector<16x32xf32>
    %281 = arith.subf %268, %280 : vector<16x32xf32>
    %cst_153 = arith.constant 9.99999974E-6 : f32
    %282 = vector.broadcast %cst_153 : f32 to vector<16x1xf32>
    %283 = arith.addf %279, %282 : vector<16x1xf32>
    %284 = math.rsqrt %283 : vector<16x1xf32>
    %285 = vector.broadcast %284 : vector<16x1xf32> to vector<16x32xf32>
    %286 = arith.mulf %281, %285 : vector<16x32xf32>
    %287 = vector.broadcast %174 : vector<1x32xf32> to vector<16x32xf32>
    %288 = arith.mulf %286, %287 : vector<16x32xf32>
    %289 = vector.broadcast %176 : vector<1x32xf32> to vector<16x32xf32>
    %290 = arith.addf %288, %289 : vector<16x32xf32>
    %cst_154 = arith.constant dense<0.000000e+00> : vector<16x64xf32>
    %291 = tpu.matmul %290, %178, %cst_154 {dimension_numbers = #tpu.dot_dimension_numbers<[1], [0], [0], [1], [0, 0, 1, 1], [], []>} : vector<16x32xf32>, vector<32x64xf32>, vector<16x64xf32> -> vector<16x64xf32>
    %292 = vector.broadcast %180 : vector<1x64xf32> to vector<16x64xf32>
    %293 = arith.addf %291, %292 : vector<16x64xf32>
    %cst_155 = arith.constant 0.000000e+00 : f32
    %294 = vector.broadcast %cst_155 : f32 to vector<16x64xf32>
    %295 = arith.maximumf %293, %294 : vector<16x64xf32>
    %cst_156 = arith.constant dense<0.000000e+00> : vector<16x32xf32>
    %296 = tpu.matmul %295, %182, %cst_156 {dimension_numbers = #tpu.dot_dimension_numbers<[1], [0], [0], [1], [0, 0, 1, 1], [], []>} : vector<16x64xf32>, vector<64x32xf32>, vector<16x32xf32> -> vector<16x32xf32>
    %297 = vector.broadcast %184 : vector<1x32xf32> to vector<16x32xf32>
    %298 = arith.addf %296, %297 : vector<16x32xf32>
    %299 = arith.addf %290, %298 : vector<16x32xf32>
    %cst_157 = arith.constant dense<0.000000e+00> : vector<16xf32>
    %300 = vector.multi_reduction <add>, %299, %cst_157 [1] : vector<16x32xf32> to vector<16xf32>
    %301 = vector.shape_cast %300 : vector<16xf32> to vector<16x1xf32>
    %cst_158 = arith.constant 3.200000e+01 : f32
    %302 = vector.broadcast %cst_158 : f32 to vector<16x1xf32>
    %303 = arith.divf %301, %302 : vector<16x1xf32>
    %304 = vector.broadcast %303 : vector<16x1xf32> to vector<16x32xf32>
    %305 = arith.subf %299, %304 : vector<16x32xf32>
    %306 = arith.mulf %305, %305 : vector<16x32xf32>
    %cst_159 = arith.constant dense<0.000000e+00> : vector<16xf32>
    %307 = vector.multi_reduction <add>, %306, %cst_159 [1] : vector<16x32xf32> to vector<16xf32>
    %308 = vector.shape_cast %307 : vector<16xf32> to vector<16x1xf32>
    %cst_160 = arith.constant 3.200000e+01 : f32
    %309 = vector.broadcast %cst_160 : f32 to vector<16x1xf32>
    %310 = arith.divf %308, %309 : vector<16x1xf32>
    %311 = vector.broadcast %303 : vector<16x1xf32> to vector<16x32xf32>
    %312 = arith.subf %299, %311 : vector<16x32xf32>
    %cst_161 = arith.constant 9.99999974E-6 : f32
    %313 = vector.broadcast %cst_161 : f32 to vector<16x1xf32>
    %314 = arith.addf %310, %313 : vector<16x1xf32>
    %315 = math.rsqrt %314 : vector<16x1xf32>
    %316 = vector.broadcast %315 : vector<16x1xf32> to vector<16x32xf32>
    %317 = arith.mulf %312, %316 : vector<16x32xf32>
    %318 = vector.broadcast %186 : vector<1x32xf32> to vector<16x32xf32>
    %319 = arith.mulf %317, %318 : vector<16x32xf32>
    %320 = vector.broadcast %188 : vector<1x32xf32> to vector<16x32xf32>
    %321 = arith.addf %319, %320 : vector<16x32xf32>
    %c0_162 = arith.constant 0 : index
    %c0_163 = arith.constant 0 : index
    %322 = vector.load %arg14[%c0_162, %c0_163] : memref<16x32xf32, #tpu.memory_space<vmem>>, vector<16x32xf32>
    tpu.vector_store %arg14[%c0_162, %c0_163], %321 {strides = array<i32>} : memref<16x32xf32, #tpu.memory_space<vmem>>, vector<16x32xf32>,
    return
  }
}

</mosaic_0001>

<llo_original>
// kernel: tpu_custom_call.1
$region0: #{tpu_custom_call.1}
  #allocation0 [shape = 'u32[]', space=smem, size = 0x4, offset = 0x4, fixed_abs, tag = 'smem constant byte address 0x4 - core index']
  #allocation1 [shape = 'u32[144,128]{1,0:T(1,128)}', space=vmem, size = 0x12000, scoped, tag = 'internal scratch']
  #allocation2 [shape = 'f32[16,32]{1,0:T(8,128)}', space=vmem, size = 0x2000, scoped, tag = 'scratch operand']
  %s0 = inlined_call_operand.vmem [shape: s32[16,1], index: 0, kind: input, shape index: {}]
  %s1 = inlined_call_operand.vmem [shape: f32[50,32], index: 1, kind: input, shape index: {}]
  %s2 = inlined_call_operand.vmem [shape: f32[2,32,96], index: 2, kind: input, shape index: {}]
  %s3 = inlined_call_operand.vmem [shape: f32[2,1,96], index: 3, kind: input, shape index: {}]
  %s4 = inlined_call_operand.vmem [shape: f32[2,32,32], index: 4, kind: input, shape index: {}]
  %s5 = inlined_call_operand.vmem [shape: f32[2,1,32], index: 5, kind: input, shape index: {}]
  %s6 = inlined_call_operand.vmem [shape: f32[2,1,32], index: 6, kind: input, shape index: {}]
  %s7 = inlined_call_operand.vmem [shape: f32[2,1,32], index: 7, kind: input, shape index: {}]
  %s8 = inlined_call_operand.vmem [shape: f32[2,32,64], index: 8, kind: input, shape index: {}]
  %s9 = inlined_call_operand.vmem [shape: f32[2,1,64], index: 9, kind: input, shape index: {}]
  %s10 = inlined_call_operand.vmem [shape: f32[2,64,32], index: 10, kind: input, shape index: {}]
  %s11 = inlined_call_operand.vmem [shape: f32[2,1,32], index: 11, kind: input, shape index: {}]
  %s12 = inlined_call_operand.vmem [shape: f32[2,1,32], index: 12, kind: input, shape index: {}]
  %s13 = inlined_call_operand.vmem [shape: f32[2,1,32], index: 13, kind: input, shape index: {}]
  %s14 = inlined_call_operand.hbm [shape: f32[16,32], index: 14, kind: output, shape index: {}]
  %s15 = sld [smem:[#allocation0]]
  $region66: #{tpu_custom_call.1} parent=0
    _
  %s17 = ssub.s32 1, %s15
  %s18 = scalar_select 0, %s17, %s15
  $region1: #{tpu_custom_call.1} parent=0
    #allocation3 [shape = 'u8[8192]{0}', space=vmem, size = 0x2000, scoped, tag = 'output window, operand 0, single buffered']
    #allocation4 [shape = 's32[1]{0}', space=sflag, size = 0x4, scoped, tag = 'scoped memory for tpu_custom_call.1']
    %19 = vsyncpa [#allocation4], 0
    // Predicated region
    $region2: #{tpu_custom_call.1} parent=1 // pred_check
      _
    $region3: #{tpu_custom_call.1} parent=1 // pred_check_branch
      %21 = sbr.rel (0) target = $region5
    $region4: #{tpu_custom_call.1} parent=1 // pred_region
      _
    $region5: #{tpu_custom_call.1} parent=1 // pred_fallthru
      _
    // Predicated region
    $region6: #{tpu_custom_call.1} parent=1 // pred_check
      _
    $region7: #{tpu_custom_call.1} parent=1 // pred_check_branch
      %23 = sbr.rel (0) target = $region9
    $region8: #{tpu_custom_call.1} parent=1 // pred_region
      _
    $region9: #{tpu_custom_call.1} parent=1 // pred_fallthru
      _
    // Predicated region
    $region10: #{tpu_custom_call.1} parent=1 // pred_check
      _
    $region11: #{tpu_custom_call.1} parent=1 // pred_check_branch
      %25 = sbr.rel (0) target = $region13
    $region12: #{tpu_custom_call.1} parent=1 // pred_region
      _
    $region13: #{tpu_custom_call.1} parent=1 // pred_fallthru
      _
    // Predicated region
    $region14: #{tpu_custom_call.1} parent=1 // pred_check
      _
    $region15: #{tpu_custom_call.1} parent=1 // pred_check_branch
      %27 = sbr.rel (0) target = $region17
    $region16: #{tpu_custom_call.1} parent=1 // pred_region
      _
    $region17: #{tpu_custom_call.1} parent=1 // pred_fallthru
      _
    // Predicated region
    $region18: #{tpu_custom_call.1} parent=1 // pred_check
      _
    $region19: #{tpu_custom_call.1} parent=1 // pred_check_branch
      %29 = sbr.rel (0) target = $region21
    $region20: #{tpu_custom_call.1} parent=1 // pred_region
      _
    $region21: #{tpu_custom_call.1} parent=1 // pred_fallthru
      _
    // Predicated region
    $region22: #{tpu_custom_call.1} parent=1 // pred_check
      _
    $region23: #{tpu_custom_call.1} parent=1 // pred_check_branch
      %31 = sbr.rel (0) target = $region25
    $region24: #{tpu_custom_call.1} parent=1 // pred_region
      _
    $region25: #{tpu_custom_call.1} parent=1 // pred_fallthru
      _
    // Predicated region
    $region26: #{tpu_custom_call.1} parent=1 // pred_check
      _
    $region27: #{tpu_custom_call.1} parent=1 // pred_check_branch
      %33 = sbr.rel (0) target = $region29
    $region28: #{tpu_custom_call.1} parent=1 // pred_region
      _
    $region29: #{tpu_custom_call.1} parent=1 // pred_fallthru
      _
    // Predicated region
    $region30: #{tpu_custom_call.1} parent=1 // pred_check
      _
    $region31: #{tpu_custom_call.1} parent=1 // pred_check_branch
      %35 = sbr.rel (0) target = $region33
    $region32: #{tpu_custom_call.1} parent=1 // pred_region
      _
    $region33: #{tpu_custom_call.1} parent=1 // pred_fallthru
      _
    // Predicated region
    $region34: #{tpu_custom_call.1} parent=1 // pred_check
      _
    $region35: #{tpu_custom_call.1} parent=1 // pred_check_branch
      %37 = sbr.rel (0) target = $region37
    $region36: #{tpu_custom_call.1} parent=1 // pred_region
      _
    $region37: #{tpu_custom_call.1} parent=1 // pred_fallthru
      _
    // Predicated region
    $region38: #{tpu_custom_call.1} parent=1 // pred_check
      _
    $region39: #{tpu_custom_call.1} parent=1 // pred_check_branch
      %39 = sbr.rel (0) target = $region41
    $region40: #{tpu_custom_call.1} parent=1 // pred_region
      _
    $region41: #{tpu_custom_call.1} parent=1 // pred_fallthru
      _
    // Predicated region
    $region42: #{tpu_custom_call.1} parent=1 // pred_check
      _
    $region43: #{tpu_custom_call.1} parent=1 // pred_check_branch
      %41 = sbr.rel (0) target = $region45
    $region44: #{tpu_custom_call.1} parent=1 // pred_region
      _
    $region45: #{tpu_custom_call.1} parent=1 // pred_fallthru
      _
    // Predicated region
    $region46: #{tpu_custom_call.1} parent=1 // pred_check
      _
    $region47: #{tpu_custom_call.1} parent=1 // pred_check_branch
      %43 = sbr.rel (0) target = $region49
    $region48: #{tpu_custom_call.1} parent=1 // pred_region
      _
    $region49: #{tpu_custom_call.1} parent=1 // pred_fallthru
      _
    // Predicated region
    $region50: #{tpu_custom_call.1} parent=1 // pred_check
      _
    $region51: #{tpu_custom_call.1} parent=1 // pred_check_branch
      %45 = sbr.rel (0) target = $region53
    $region52: #{tpu_custom_call.1} parent=1 // pred_region
      _
    $region53: #{tpu_custom_call.1} parent=1 // pred_fallthru
      _
    // Predicated region
    $region54: #{tpu_custom_call.1} parent=1 // pred_check
      _
    $region55: #{tpu_custom_call.1} parent=1 // pred_check_branch
      %47 = sbr.rel (0) target = $region57
    $region56: #{tpu_custom_call.1} parent=1 // pred_region
      _
    $region57: #{tpu_custom_call.1} parent=1 // pred_fallthru
      _
    %v48 = vld [vmem:[%s0] sm:$0xff]
    %v49 = vld [vmem:[%s0 + $0x8] sm:$0xff]
    %v50 = vlaneseq
    %v51 = vand.u32 %v50, 127
    %52 = vset.pattern.permute.xlu0 0
    %53 = vperm.xlu0 %52, %v48
    %v54 = vpop.permute.xlu0 %53
    %55 = vset.pattern.permute.xlu0 0
    %56 = vperm.xlu0 %55, %v49
    %v57 = vpop.permute.xlu0 %56
    %vm58 = vcmp.eq.s32.totalorder %v54, %v51
    %vm59 = vcmp.eq.s32.totalorder %v57, %v51
    %v60 = vsel %vm58, 1, 0
    %v61 = vsel %vm59, 1, 0
    %v62 = vcvt.s32.f32 %v60
    %v63 = vcvt.s32.f32 %v61
    %v64 = vld [vmem:[%s1] sm:$0xff]
    %v65 = vld [vmem:[%s1 + $0x8] sm:$0xff]
    %v66 = vld [vmem:[%s1 + $0x10] sm:$0xff]
    %v67 = vld [vmem:[%s1 + $0x18] sm:$0xff]
    %v68 = vld [vmem:[%s1 + $0x20] sm:$0xff]
    %v69 = vld [vmem:[%s1 + $0x28] sm:$0xff]
    %v70 = vld [vmem:[%s1 + $0x30] sm:$0x3]
    %vm71 = vcmask 408576
    %v73 = vsel %vm71, %v62, 0
    %v76 = vsel %vm71, %v63, 0
    %vm78 = vcmask 1041408
    %v80 = vsel %vm78, %v70, 0
    %82 = vmatprep.subr.mxu0 0.0
    %83 = vmatpush1.msra.mxu0 %v64
    %84 = vmatprep.subr.mxu0 0.0
    %85 = vmatpush1.msra.mxu0 %v65
    %86 = vmatprep.subr.mxu0 0.0
    %87 = vmatpush1.msra.mxu0 %v66
    %88 = vmatprep.subr.mxu0 0.0
    %89 = vmatpush1.msra.mxu0 %v67
    %90 = vmatprep.subr.mxu0 0.0
    %91 = vmatpush1.msra.mxu0 %v68
    %92 = vmatprep.subr.mxu0 0.0
    %93 = vmatpush1.msra.mxu0 %v69
    %94 = vmatprep.subr.mxu0 0.0
    %95 = vmatpush1.msra.mxu0 %v80
    %96 = vmatprep.subr.mxu0 0.0
    %97 = vmatpush1.msra.mxu0 0.0
    %98 = vmatprep.subr.mxu0 0.0
    %99 = vmatpush1.msra.mxu0 0.0
    %100 = vmatprep.subr.mxu0 0.0
    %101 = vmatpush1.msra.mxu0 0.0
    %102 = vmatprep.subr.mxu0 0.0
    %103 = vmatpush1.msra.mxu0 0.0
    %104 = vmatprep.subr.mxu0 0.0
    %105 = vmatpush1.msra.mxu0 0.0
    %106 = vmatprep.subr.mxu0 0.0
    %107 = vmatpush1.msra.mxu0 0.0
    %108 = vmatprep.subr.mxu0 0.0
    %109 = vmatpush1.msra.mxu0 0.0
    %110 = vmatprep.subr.mxu0 0.0
    %111 = vmatpush1.msra.mxu0 0.0
    %112 = vmatprep.subr.mxu0 0.0
    %113 = vmatpush1.msra.mxu0 0.0
    %114 = vmatprep.subr.mxu0 0.0
    %115 = vmatpush1.msra.mxu0 0.0
    %116 = vmatprep.subr.mxu0 0.0
    %117 = vmatpush1.msra.mxu0 0.0
    %118 = vmatprep.subr.mxu0 0.0
    %119 = vmatpush1.msra.mxu0 0.0
    %120 = vmatprep.subr.mxu0 0.0
    %121 = vmatpush1.msra.mxu0 0.0
    %122 = vmatprep.subr.mxu0 0.0
    %123 = vmatpush1.msra.mxu0 0.0
    %124 = vmatprep.subr.mxu0 0.0
    %125 = vmatpush1.msra.mxu0 0.0
    %126 = vmatprep.subr.mxu0 0.0
    %127 = vmatpush1.msra.mxu0 0.0
    %128 = vmatprep.subr.mxu0 0.0
    %129 = vmatpush1.msra.mxu0 0.0
    %130 = vmatprep.subr.mxu0 0.0
    %131 = vmatpush1.msra.mxu0 0.0
    %132 = vmatprep.subr.mxu0 0.0
    %133 = vmatpush1.msra.mxu0 0.0
    %134 = vmatprep.subr.mxu0 0.0
    %135 = vmatpush1.msra.mxu0 0.0
    %136 = vmatprep.subr.mxu0 0.0
    %137 = vmatpush1.msra.mxu0 0.0
    %138 = vmatprep.subr.mxu0 0.0
    %139 = vmatpush1.msra.mxu0 0.0
    %140 = vmatprep.subr.mxu0 0.0
    %141 = vmatpush1.msra.mxu0 0.0
    %142 = vmatprep.subr.mxu0 0.0
    %143 = vmatpush1.msra.mxu0 0.0
    %144 = vmatprep.subr.mxu0 0.0
    %145 = vmatpush1.msra.mxu0 0.0
    %146 = vmatprep.mubr.f32.mxu0 0.0
    %147 = vmatmul.mubr.f32.gmra.mrb[0].mxu0 %v73
    %v148 = vpop.f32.mrb[0].mxu0
    %v149 = vadd.f32 0.0, %v148
    %v150 = vpop.f32.mrb[0].mxu0
    %151 = vmatprep.mubr.f32.mxu0 0.0
    %152 = vmatmul.mubr.f32.gmra.mrb[0].mxu0 %v76
    %v153 = vpop.f32.mrb[0].mxu0
    %v154 = vadd.f32 0.0, %v153
    %v155 = vpop.f32.mrb[0].mxu0
    %156 = vdwg.mxu0
    %v157 = vld [vmem:[%s2] sm:$0xff]
    %v158 = vld [vmem:[%s2 + $0x8] sm:$0xff]
    %v159 = vld [vmem:[%s2 + $0x10] sm:$0xff]
    %v160 = vld [vmem:[%s2 + $0x18] sm:$0xff]
    %v161 = vld [vmem:[%s3] sm:$0x1]
    %v162 = vld [vmem:[%s4] sm:$0xff]
    %v163 = vld [vmem:[%s4 + $0x8] sm:$0xff]
    %v164 = vld [vmem:[%s4 + $0x10] sm:$0xff]
    %v165 = vld [vmem:[%s4 + $0x18] sm:$0xff]
    %v166 = vld [vmem:[%s5] sm:$0x1]
    %v167 = vld [vmem:[%s6] sm:$0x1]
    %v168 = vld [vmem:[%s7] sm:$0x1]
    %v169 = vld [vmem:[%s8] sm:$0xff]
    %v170 = vld [vmem:[%s8 + $0x8] sm:$0xff]
    %v171 = vld [vmem:[%s8 + $0x10] sm:$0xff]
    %v172 = vld [vmem:[%s8 + $0x18] sm:$0xff]
    %v173 = vld [vmem:[%s9] sm:$0x1]
    %v174 = vld [vmem:[%s10] sm:$0xff]
    %v175 = vld [vmem:[%s10 + $0x8] sm:$0xff]
    %v176 = vld [vmem:[%s10 + $0x10] sm:$0xff]
    %v177 = vld [vmem:[%s10 + $0x18] sm:$0xff]
    %v178 = vld [vmem:[%s10 + $0x20] sm:$0xff]
    %v179 = vld [vmem:[%s10 + $0x28] sm:$0xff]
    %v180 = vld [vmem:[%s10 + $0x30] sm:$0xff]
    %v181 = vld [vmem:[%s10 + $0x38] sm:$0xff]
    %v182 = vld [vmem:[%s11] sm:$0x1]
    %v183 = vld [vmem:[%s12] sm:$0x1]
    %v184 = vld [vmem:[%s13] sm:$0x1]
    %v186 = vlaneseq
    %v187 = vshrl.u32 %v186, 7
    %v188 = vsub.s32 0, %v187
    %v189 = vrot.slane %v161, %v188
    %vm191 = vcmask 261120
    %v193 = vsel %vm191, %v149, 0
    %v196 = vsel %vm191, %v154, 0
    %198 = vmatprep.subr.mxu0 0.0
    %199 = vmatpush1.msra.mxu0 %v157
    %200 = vmatprep.subr.mxu0 0.0
    %201 = vmatpush1.msra.mxu0 %v158
    %202 = vmatprep.subr.mxu0 0.0
    %203 = vmatpush1.msra.mxu0 %v159
    %204 = vmatprep.subr.mxu0 0.0
    %205 = vmatpush1.msra.mxu0 %v160
    %206 = vmatprep.subr.mxu0 0.0
    %207 = vmatpush1.msra.mxu0 0.0
    %208 = vmatprep.subr.mxu0 0.0
    %209 = vmatpush1.msra.mxu0 0.0
    %210 = vmatprep.subr.mxu0 0.0
    %211 = vmatpush1.msra.mxu0 0.0
    %212 = vmatprep.subr.mxu0 0.0
    %213 = vmatpush1.msra.mxu0 0.0
    %214 = vmatprep.subr.mxu0 0.0
    %215 = vmatpush1.msra.mxu0 0.0
    %216 = vmatprep.subr.mxu0 0.0
    %217 = vmatpush1.msra.mxu0 0.0
    %218 = vmatprep.subr.mxu0 0.0
    %219 = vmatpush1.msra.mxu0 0.0
    %220 = vmatprep.subr.mxu0 0.0
    %221 = vmatpush1.msra.mxu0 0.0
    %222 = vmatprep.subr.mxu0 0.0
    %223 = vmatpush1.msra.mxu0 0.0
    %224 = vmatprep.subr.mxu0 0.0
    %225 = vmatpush1.msra.mxu0 0.0
    %226 = vmatprep.subr.mxu0 0.0
    %227 = vmatpush1.msra.mxu0 0.0
    %228 = vmatprep.subr.mxu0 0.0
    %229 = vmatpush1.msra.mxu0 0.0
    %230 = vmatprep.subr.mxu0 0.0
    %231 = vmatpush1.msra.mxu0 0.0
    %232 = vmatprep.subr.mxu0 0.0
    %233 = vmatpush1.msra.mxu0 0.0
    %234 = vmatprep.subr.mxu0 0.0
    %235 = vmatpush1.msra.mxu0 0.0
    %236 = vmatprep.subr.mxu0 0.0
    %237 = vmatpush1.msra.mxu0 0.0
    %238 = vmatprep.subr.mxu0 0.0
    %239 = vmatpush1.msra.mxu0 0.0
    %240 = vmatprep.subr.mxu0 0.0
    %241 = vmatpush1.msra.mxu0 0.0
    %242 = vmatprep.subr.mxu0 0.0
    %243 = vmatpush1.msra.mxu0 0.0
    %244 = vmatprep.subr.mxu0 0.0
    %245 = vmatpush1.msra.mxu0 0.0
    %246 = vmatprep.subr.mxu0 0.0
    %247 = vmatpush1.msra.mxu0 0.0
    %248 = vmatprep.subr.mxu0 0.0
    %249 = vmatpush1.msra.mxu0 0.0
    %250 = vmatprep.subr.mxu0 0.0
    %251 = vmatpush1.msra.mxu0 0.0
    %252 = vmatprep.subr.mxu0 0.0
    %253 = vmatpush1.msra.mxu0 0.0
    %254 = vmatprep.subr.mxu0 0.0
    %255 = vmatpush1.msra.mxu0 0.0
    %256 = vmatprep.subr.mxu0 0.0
    %257 = vmatpush1.msra.mxu0 0.0
    %258 = vmatprep.subr.mxu0 0.0
    %259 = vmatpush1.msra.mxu0 0.0
    %260 = vmatprep.subr.mxu0 0.0
    %261 = vmatpush1.msra.mxu0 0.0
    %262 = vmatprep.mubr.f32.mxu0 0.0
    %263 = vmatmul.mubr.f32.gmra.mrb[0].mxu0 %v193
    %v264 = vpop.f32.mrb[0].mxu0
    %v265 = vadd.f32 %v189, %v264
    %v266 = vpop.f32.mrb[0].mxu0
    %267 = vmatprep.mubr.f32.mxu0 0.0
    %268 = vmatmul.mubr.f32.gmra.mrb[0].mxu0 %v196
    %v269 = vpop.f32.mrb[0].mxu0
    %v270 = vadd.f32 %v189, %v269
    %v271 = vpop.f32.mrb[0].mxu0
    %272 = vdwg.mxu0
    %v273 = vmul.f32 %v265, 0.25
    %275 = vrot.lane.b32.xlu0 %v265, 96
    %v276 = vpop.permute.xlu0 %275
    %vm277 = vcmask 130048
    %v279 = vsel %vm277, %v273, 0
    %v281 = vsel %vm277, %v276, 0
    %283 = vmatprep.subr.mxu0 0.0
    %284 = vmatpush1.xpose.msra.mxu0 %v281
    %285 = vmatprep.subr.mxu0 0.0
    %286 = vmatpush1.xpose.msra.mxu0 0.0
    %287 = vmatprep.subr.mxu0 0.0
    %288 = vmatpush1.xpose.msra.mxu0 0.0
    %289 = vmatprep.subr.mxu0 0.0
    %290 = vmatpush1.xpose.msra.mxu0 0.0
    %291 = vmatprep.subr.mxu0 0.0
    %292 = vmatpush1.xpose.msra.mxu0 0.0
    %293 = vmatprep.subr.mxu0 0.0
    %294 = vmatpush1.xpose.msra.mxu0 0.0
    %295 = vmatprep.subr.mxu0 0.0
    %296 = vmatpush1.xpose.msra.mxu0 0.0
    %297 = vmatprep.subr.mxu0 0.0
    %298 = vmatpush1.xpose.msra.mxu0 0.0
    %299 = vmatprep.subr.mxu0 0.0
    %300 = vmatpush1.xpose.msra.mxu0 0.0
    %301 = vmatprep.subr.mxu0 0.0
    %302 = vmatpush1.xpose.msra.mxu0 0.0
    %303 = vmatprep.subr.mxu0 0.0
    %304 = vmatpush1.xpose.msra.mxu0 0.0
    %305 = vmatprep.subr.mxu0 0.0
    %306 = vmatpush1.xpose.msra.mxu0 0.0
    %307 = vmatprep.subr.mxu0 0.0
    %308 = vmatpush1.xpose.msra.mxu0 0.0
    %309 = vmatprep.subr.mxu0 0.0
    %310 = vmatpush1.xpose.msra.mxu0 0.0
    %311 = vmatprep.subr.mxu0 0.0
    %312 = vmatpush1.xpose.msra.mxu0 0.0
    %313 = vmatprep.subr.mxu0 0.0
    %314 = vmatpush1.xpose.msra.mxu0 0.0
    %315 = vmatprep.subr.mxu0 0.0
    %316 = vmatpush1.xpose.msra.mxu0 0.0
    %317 = vmatprep.subr.mxu0 0.0
    %318 = vmatpush1.xpose.msra.mxu0 0.0
    %319 = vmatprep.subr.mxu0 0.0
    %320 = vmatpush1.xpose.msra.mxu0 0.0
    %321 = vmatprep.subr.mxu0 0.0
    %322 = vmatpush1.xpose.msra.mxu0 0.0
    %323 = vmatprep.subr.mxu0 0.0
    %324 = vmatpush1.xpose.msra.mxu0 0.0
    %325 = vmatprep.subr.mxu0 0.0
    %326 = vmatpush1.xpose.msra.mxu0 0.0
    %327 = vmatprep.subr.mxu0 0.0
    %328 = vmatpush1.xpose.msra.mxu0 0.0
    %329 = vmatprep.subr.mxu0 0.0
    %330 = vmatpush1.xpose.msra.mxu0 0.0
    %331 = vmatprep.subr.mxu0 0.0
    %332 = vmatpush1.xpose.msra.mxu0 0.0
    %333 = vmatprep.subr.mxu0 0.0
    %334 = vmatpush1.xpose.msra.mxu0 0.0
    %335 = vmatprep.subr.mxu0 0.0
    %336 = vmatpush1.xpose.msra.mxu0 0.0
    %337 = vmatprep.subr.mxu0 0.0
    %338 = vmatpush1.xpose.msra.mxu0 0.0
    %339 = vmatprep.subr.mxu0 0.0
    %340 = vmatpush1.xpose.msra.mxu0 0.0
    %341 = vmatprep.subr.mxu0 0.0
    %342 = vmatpush1.xpose.msra.mxu0 0.0
    %343 = vmatprep.subr.mxu0 0.0
    %344 = vmatpush1.xpose.msra.mxu0 0.0
    %345 = vmatprep.subr.mxu0 0.0
    %346 = vmatpush1.xpose.msra.mxu0 0.0
    %347 = vmatprep.mubr.f32.mxu0 0.0
    %348 = vmatmul.mubr.f32.gmra.mrb[0].mxu0 %v279
    %v349 = vpop.f32.mrb[0].mxu0
    %v350 = vadd.f32 0.0, %v349
    %v351 = vpop.f32.mrb[0].mxu0
    %352 = vdwg.mxu0
    %vm353 = vcmask 64512
    %v354 = vsel %vm353, %v350, -inf
    %355 = vmax.xlane.f32.xlu0 %v354
    %v356 = vpop.xlane.xlu0 %355
    %v357 = vsub.f32 %v350, %v356
    %v358 = vmul.f32 %v357, 1.442695
    %v359 = vpow.pop %v358
    %v360 = vsel %vm353, %v359, 0.0
    %361 = vadd.xlane.f32.xlu0 %v360
    %v362 = vpop.xlane.xlu0 %361
    %v363 = vrcp.pop %v362
    %v364 = vmul.f32 %v359, %v363
    %365 = vrot.lane.b32.xlu0 %v265, 64
    %v366 = vpop.permute.xlu0 %365
    %v369 = vsel %vm353, %v364, 0
    %371 = vmatprep.subr.mxu0 0.0
    %372 = vmatpush1.msra.mxu0 %v366
    %373 = vmatprep.subr.mxu0 0.0
    %374 = vmatpush1.msra.mxu0 0.0
    %375 = vmatprep.subr.mxu0 0.0
    %376 = vmatpush1.msra.mxu0 0.0
    %377 = vmatprep.subr.mxu0 0.0
    %378 = vmatpush1.msra.mxu0 0.0
    %379 = vmatprep.subr.mxu0 0.0
    %380 = vmatpush1.msra.mxu0 0.0
    %381 = vmatprep.subr.mxu0 0.0
    %382 = vmatpush1.msra.mxu0 0.0
    %383 = vmatprep.subr.mxu0 0.0
    %384 = vmatpush1.msra.mxu0 0.0
    %385 = vmatprep.subr.mxu0 0.0
    %386 = vmatpush1.msra.mxu0 0.0
    %387 = vmatprep.subr.mxu0 0.0
    %388 = vmatpush1.msra.mxu0 0.0
    %389 = vmatprep.subr.mxu0 0.0
    %390 = vmatpush1.msra.mxu0 0.0
    %391 = vmatprep.subr.mxu0 0.0
    %392 = vmatpush1.msra.mxu0 0.0
    %393 = vmatprep.subr.mxu0 0.0
    %394 = vmatpush1.msra.mxu0 0.0
    %395 = vmatprep.subr.mxu0 0.0
    %396 = vmatpush1.msra.mxu0 0.0
    %397 = vmatprep.subr.mxu0 0.0
    %398 = vmatpush1.msra.mxu0 0.0
    %399 = vmatprep.subr.mxu0 0.0
    %400 = vmatpush1.msra.mxu0 0.0
    %401 = vmatprep.subr.mxu0 0.0
    %402 = vmatpush1.msra.mxu0 0.0
    %403 = vmatprep.subr.mxu0 0.0
    %404 = vmatpush1.msra.mxu0 0.0
    %405 = vmatprep.subr.mxu0 0.0
    %406 = vmatpush1.msra.mxu0 0.0
    %407 = vmatprep.subr.mxu0 0.0
    %408 = vmatpush1.msra.mxu0 0.0
    %409 = vmatprep.subr.mxu0 0.0
    %410 = vmatpush1.msra.mxu0 0.0
    %411 = vmatprep.subr.mxu0 0.0
    %412 = vmatpush1.msra.mxu0 0.0
    %413 = vmatprep.subr.mxu0 0.0
    %414 = vmatpush1.msra.mxu0 0.0
    %415 = vmatprep.subr.mxu0 0.0
    %416 = vmatpush1.msra.mxu0 0.0
    %417 = vmatprep.subr.mxu0 0.0
    %418 = vmatpush1.msra.mxu0 0.0
    %419 = vmatprep.subr.mxu0 0.0
    %420 = vmatpush1.msra.mxu0 0.0
    %421 = vmatprep.subr.mxu0 0.0
    %422 = vmatpush1.msra.mxu0 0.0
    %423 = vmatprep.subr.mxu0 0.0
    %424 = vmatpush1.msra.mxu0 0.0
    %425 = vmatprep.subr.mxu0 0.0
    %426 = vmatpush1.msra.mxu0 0.0
    %427 = vmatprep.subr.mxu0 0.0
    %428 = vmatpush1.msra.mxu0 0.0
    %429 = vmatprep.subr.mxu0 0.0
    %430 = vmatpush1.msra.mxu0 0.0
    %431 = vmatprep.subr.mxu0 0.0
    %432 = vmatpush1.msra.mxu0 0.0
    %433 = vmatprep.subr.mxu0 0.0
    %434 = vmatpush1.msra.mxu0 0.0
    %435 = vmatprep.mubr.f32.mxu0 0.0
    %436 = vmatmul.mubr.f32.gmra.mrb[0].mxu0 %v369
    %v437 = vpop.f32.mrb[0].mxu0
    %v438 = vadd.f32 0.0, %v437
    %v439 = vpop.f32.mrb[0].mxu0
    %440 = vdwg.mxu0
    %441 = vst.msk [vmem:[#allocation2] sm:$0xff] %vm277, %v438
    %442 = vrot.lane.b32.xlu0 %v273, 112
    %v443 = vpop.permute.xlu0 %442
    %444 = vrot.lane.b32.xlu0 %v265, 80
    %v445 = vpop.permute.xlu0 %444
    %v446 = vsel %vm277, %v443, 0
    %v448 = vsel %vm277, %v445, 0
    %450 = vmatprep.subr.mxu0 0.0
    %451 = vmatpush1.xpose.msra.mxu0 %v448
    %452 = vmatprep.subr.mxu0 0.0
    %453 = vmatpush1.xpose.msra.mxu0 0.0
    %454 = vmatprep.subr.mxu0 0.0
    %455 = vmatpush1.xpose.msra.mxu0 0.0
    %456 = vmatprep.subr.mxu0 0.0
    %457 = vmatpush1.xpose.msra.mxu0 0.0
    %458 = vmatprep.subr.mxu0 0.0
    %459 = vmatpush1.xpose.msra.mxu0 0.0
    %460 = vmatprep.subr.mxu0 0.0
    %461 = vmatpush1.xpose.msra.mxu0 0.0
    %462 = vmatprep.subr.mxu0 0.0
    %463 = vmatpush1.xpose.msra.mxu0 0.0
    %464 = vmatprep.subr.mxu0 0.0
    %465 = vmatpush1.xpose.msra.mxu0 0.0
    %466 = vmatprep.subr.mxu0 0.0
    %467 = vmatpush1.xpose.msra.mxu0 0.0
    %468 = vmatprep.subr.mxu0 0.0
    %469 = vmatpush1.xpose.msra.mxu0 0.0
    %470 = vmatprep.subr.mxu0 0.0
    %471 = vmatpush1.xpose.msra.mxu0 0.0
    %472 = vmatprep.subr.mxu0 0.0
    %473 = vmatpush1.xpose.msra.mxu0 0.0
    %474 = vmatprep.subr.mxu0 0.0
    %475 = vmatpush1.xpose.msra.mxu0 0.0
    %476 = vmatprep.subr.mxu0 0.0
    %477 = vmatpush1.xpose.msra.mxu0 0.0
    %478 = vmatprep.subr.mxu0 0.0
    %479 = vmatpush1.xpose.msra.mxu0 0.0
    %480 = vmatprep.subr.mxu0 0.0
    %481 = vmatpush1.xpose.msra.mxu0 0.0
    %482 = vmatprep.subr.mxu0 0.0
    %483 = vmatpush1.xpose.msra.mxu0 0.0
    %484 = vmatprep.subr.mxu0 0.0
    %485 = vmatpush1.xpose.msra.mxu0 0.0
    %486 = vmatprep.subr.mxu0 0.0
    %487 = vmatpush1.xpose.msra.mxu0 0.0
    %488 = vmatprep.subr.mxu0 0.0
    %489 = vmatpush1.xpose.msra.mxu0 0.0
    %490 = vmatprep.subr.mxu0 0.0
    %491 = vmatpush1.xpose.msra.mxu0 0.0
    %492 = vmatprep.subr.mxu0 0.0
    %493 = vmatpush1.xpose.msra.mxu0 0.0
    %494 = vmatprep.subr.mxu0 0.0
    %495 = vmatpush1.xpose.msra.mxu0 0.0
    %496 = vmatprep.subr.mxu0 0.0
    %497 = vmatpush1.xpose.msra.mxu0 0.0
    %498 = vmatprep.subr.mxu0 0.0
    %499 = vmatpush1.xpose.msra.mxu0 0.0
    %500 = vmatprep.subr.mxu0 0.0
    %501 = vmatpush1.xpose.msra.mxu0 0.0
    %502 = vmatprep.subr.mxu0 0.0
    %503 = vmatpush1.xpose.msra.mxu0 0.0
    %504 = vmatprep.subr.mxu0 0.0
    %505 = vmatpush1.xpose.msra.mxu0 0.0
    %506 = vmatprep.subr.mxu0 0.0
    %507 = vmatpush1.xpose.msra.mxu0 0.0
    %508 = vmatprep.subr.mxu0 0.0
    %509 = vmatpush1.xpose.msra.mxu0 0.0
    %510 = vmatprep.subr.mxu0 0.0
    %511 = vmatpush1.xpose.msra.mxu0 0.0
    %512 = vmatprep.subr.mxu0 0.0
    %513 = vmatpush1.xpose.msra.mxu0 0.0
    %514 = vmatprep.mubr.f32.mxu0 0.0
    %515 = vmatmul.mubr.f32.gmra.mrb[0].mxu0 %v446
    %v516 = vpop.f32.mrb[0].mxu0
    %v517 = vadd.f32 0.0, %v516
    %v518 = vpop.f32.mrb[0].mxu0
    %519 = vdwg.mxu0
    %v520 = vsel %vm353, %v517, -inf
    %521 = vmax.xlane.f32.xlu0 %v520
    %v522 = vpop.xlane.xlu0 %521
    %v523 = vsub.f32 %v517, %v522
    %v524 = vmul.f32 %v523, 1.442695
    %v525 = vpow.pop %v524
    %v526 = vsel %vm353, %v525, 0.0
    %527 = vadd.xlane.f32.xlu0 %v526
    %v528 = vpop.xlane.xlu0 %527
    %v529 = vrcp.pop %v528
    %v530 = vmul.f32 %v525, %v529
    %531 = vrot.lane.b32.xlu0 %v265, 48
    %v532 = vpop.permute.xlu0 %531
    %v535 = vsel %vm353, %v530, 0
    %537 = vmatprep.subr.mxu0 0.0
    %538 = vmatpush1.msra.mxu0 %v532
    %539 = vmatprep.subr.mxu0 0.0
    %540 = vmatpush1.msra.mxu0 0.0
    %541 = vmatprep.subr.mxu0 0.0
    %542 = vmatpush1.msra.mxu0 0.0
    %543 = vmatprep.subr.mxu0 0.0
    %544 = vmatpush1.msra.mxu0 0.0
    %545 = vmatprep.subr.mxu0 0.0
    %546 = vmatpush1.msra.mxu0 0.0
    %547 = vmatprep.subr.mxu0 0.0
    %548 = vmatpush1.msra.mxu0 0.0
    %549 = vmatprep.subr.mxu0 0.0
    %550 = vmatpush1.msra.mxu0 0.0
    %551 = vmatprep.subr.mxu0 0.0
    %552 = vmatpush1.msra.mxu0 0.0
    %553 = vmatprep.subr.mxu0 0.0
    %554 = vmatpush1.msra.mxu0 0.0
    %555 = vmatprep.subr.mxu0 0.0
    %556 = vmatpush1.msra.mxu0 0.0
    %557 = vmatprep.subr.mxu0 0.0
    %558 = vmatpush1.msra.mxu0 0.0
    %559 = vmatprep.subr.mxu0 0.0
    %560 = vmatpush1.msra.mxu0 0.0
    %561 = vmatprep.subr.mxu0 0.0
    %562 = vmatpush1.msra.mxu0 0.0
    %563 = vmatprep.subr.mxu0 0.0
    %564 = vmatpush1.msra.mxu0 0.0
    %565 = vmatprep.subr.mxu0 0.0
    %566 = vmatpush1.msra.mxu0 0.0
    %567 = vmatprep.subr.mxu0 0.0
    %568 = vmatpush1.msra.mxu0 0.0
    %569 = vmatprep.subr.mxu0 0.0
    %570 = vmatpush1.msra.mxu0 0.0
    %571 = vmatprep.subr.mxu0 0.0
    %572 = vmatpush1.msra.mxu0 0.0
    %573 = vmatprep.subr.mxu0 0.0
    %574 = vmatpush1.msra.mxu0 0.0
    %575 = vmatprep.subr.mxu0 0.0
    %576 = vmatpush1.msra.mxu0 0.0
    %577 = vmatprep.subr.mxu0 0.0
    %578 = vmatpush1.msra.mxu0 0.0
    %579 = vmatprep.subr.mxu0 0.0
    %580 = vmatpush1.msra.mxu0 0.0
    %581 = vmatprep.subr.mxu0 0.0
    %582 = vmatpush1.msra.mxu0 0.0
    %583 = vmatprep.subr.mxu0 0.0
    %584 = vmatpush1.msra.mxu0 0.0
    %585 = vmatprep.subr.mxu0 0.0
    %586 = vmatpush1.msra.mxu0 0.0
    %587 = vmatprep.subr.mxu0 0.0
    %588 = vmatpush1.msra.mxu0 0.0
    %589 = vmatprep.subr.mxu0 0.0
    %590 = vmatpush1.msra.mxu0 0.0
    %591 = vmatprep.subr.mxu0 0.0
    %592 = vmatpush1.msra.mxu0 0.0
    %593 = vmatprep.subr.mxu0 0.0
    %594 = vmatpush1.msra.mxu0 0.0
    %595 = vmatprep.subr.mxu0 0.0
    %596 = vmatpush1.msra.mxu0 0.0
    %597 = vmatprep.subr.mxu0 0.0
    %598 = vmatpush1.msra.mxu0 0.0
    %599 = vmatprep.subr.mxu0 0.0
    %600 = vmatpush1.msra.mxu0 0.0
    %601 = vmatprep.mubr.f32.mxu0 0.0
    %602 = vmatmul.mubr.f32.gmra.mrb[0].mxu0 %v535
    %v603 = vpop.f32.mrb[0].mxu0
    %v604 = vadd.f32 0.0, %v603
    %v605 = vpop.f32.mrb[0].mxu0
    %606 = vdwg.mxu0
    %608 = vrot.lane.b32.xlu0 %v604, 16
    %v609 = vpop.permute.xlu0 %608
    %vm611 = vcmask 261248
    %612 = vst.msk [vmem:[#allocation2] sm:$0xff] %vm611, %v609
    %v613 = vmul.f32 %v270, 0.25
    %615 = vrot.lane.b32.xlu0 %v270, 96
    %v616 = vpop.permute.xlu0 %615
    %v618 = vsel %vm277, %v613, 0
    %v620 = vsel %vm277, %v616, 0
    %622 = vmatprep.subr.mxu0 0.0
    %623 = vmatpush1.xpose.msra.mxu0 %v620
    %624 = vmatprep.subr.mxu0 0.0
    %625 = vmatpush1.xpose.msra.mxu0 0.0
    %626 = vmatprep.subr.mxu0 0.0
    %627 = vmatpush1.xpose.msra.mxu0 0.0
    %628 = vmatprep.subr.mxu0 0.0
    %629 = vmatpush1.xpose.msra.mxu0 0.0
    %630 = vmatprep.subr.mxu0 0.0
    %631 = vmatpush1.xpose.msra.mxu0 0.0
    %632 = vmatprep.subr.mxu0 0.0
    %633 = vmatpush1.xpose.msra.mxu0 0.0
    %634 = vmatprep.subr.mxu0 0.0
    %635 = vmatpush1.xpose.msra.mxu0 0.0
    %636 = vmatprep.subr.mxu0 0.0
    %637 = vmatpush1.xpose.msra.mxu0 0.0
    %638 = vmatprep.subr.mxu0 0.0
    %639 = vmatpush1.xpose.msra.mxu0 0.0
    %640 = vmatprep.subr.mxu0 0.0
    %641 = vmatpush1.xpose.msra.mxu0 0.0
    %642 = vmatprep.subr.mxu0 0.0
    %643 = vmatpush1.xpose.msra.mxu0 0.0
    %644 = vmatprep.subr.mxu0 0.0
    %645 = vmatpush1.xpose.msra.mxu0 0.0
    %646 = vmatprep.subr.mxu0 0.0
    %647 = vmatpush1.xpose.msra.mxu0 0.0
    %648 = vmatprep.subr.mxu0 0.0
    %649 = vmatpush1.xpose.msra.mxu0 0.0
    %650 = vmatprep.subr.mxu0 0.0
    %651 = vmatpush1.xpose.msra.mxu0 0.0
    %652 = vmatprep.subr.mxu0 0.0
    %653 = vmatpush1.xpose.msra.mxu0 0.0
    %654 = vmatprep.subr.mxu0 0.0
    %655 = vmatpush1.xpose.msra.mxu0 0.0
    %656 = vmatprep.subr.mxu0 0.0
    %657 = vmatpush1.xpose.msra.mxu0 0.0
    %658 = vmatprep.subr.mxu0 0.0
    %659 = vmatpush1.xpose.msra.mxu0 0.0
    %660 = vmatprep.subr.mxu0 0.0
    %661 = vmatpush1.xpose.msra.mxu0 0.0
    %662 = vmatprep.subr.mxu0 0.0
    %663 = vmatpush1.xpose.msra.mxu0 0.0
    %664 = vmatprep.subr.mxu0 0.0
    %665 = vmatpush1.xpose.msra.mxu0 0.0
    %666 = vmatprep.subr.mxu0 0.0
    %667 = vmatpush1.xpose.msra.mxu0 0.0
    %668 = vmatprep.subr.mxu0 0.0
    %669 = vmatpush1.xpose.msra.mxu0 0.0
    %670 = vmatprep.subr.mxu0 0.0
    %671 = vmatpush1.xpose.msra.mxu0 0.0
    %672 = vmatprep.subr.mxu0 0.0
    %673 = vmatpush1.xpose.msra.mxu0 0.0
    %674 = vmatprep.subr.mxu0 0.0
    %675 = vmatpush1.xpose.msra.mxu0 0.0
    %676 = vmatprep.subr.mxu0 0.0
    %677 = vmatpush1.xpose.msra.mxu0 0.0
    %678 = vmatprep.subr.mxu0 0.0
    %679 = vmatpush1.xpose.msra.mxu0 0.0
    %680 = vmatprep.subr.mxu0 0.0
    %681 = vmatpush1.xpose.msra.mxu0 0.0
    %682 = vmatprep.subr.mxu0 0.0
    %683 = vmatpush1.xpose.msra.mxu0 0.0
    %684 = vmatprep.subr.mxu0 0.0
    %685 = vmatpush1.xpose.msra.mxu0 0.0
    %686 = vmatprep.mubr.f32.mxu0 0.0
    %687 = vmatmul.mubr.f32.gmra.mrb[0].mxu0 %v618
    %v688 = vpop.f32.mrb[0].mxu0
    %v689 = vadd.f32 0.0, %v688
    %v690 = vpop.f32.mrb[0].mxu0
    %691 = vdwg.mxu0
    %v692 = vsel %vm353, %v689, -inf
    %693 = vmax.xlane.f32.xlu0 %v692
    %v694 = vpop.xlane.xlu0 %693
    %v695 = vsub.f32 %v689, %v694
    %v696 = vmul.f32 %v695, 1.442695
    %v697 = vpow.pop %v696
    %v698 = vsel %vm353, %v697, 0.0
    %699 = vadd.xlane.f32.xlu0 %v698
    %v700 = vpop.xlane.xlu0 %699
    %v701 = vrcp.pop %v700
    %v702 = vmul.f32 %v697, %v701
    %703 = vrot.lane.b32.xlu0 %v270, 64
    %v704 = vpop.permute.xlu0 %703
    %v707 = vsel %vm353, %v702, 0
    %709 = vmatprep.subr.mxu0 0.0
    %710 = vmatpush1.msra.mxu0 %v704
    %711 = vmatprep.subr.mxu0 0.0
    %712 = vmatpush1.msra.mxu0 0.0
    %713 = vmatprep.subr.mxu0 0.0
    %714 = vmatpush1.msra.mxu0 0.0
    %715 = vmatprep.subr.mxu0 0.0
    %716 = vmatpush1.msra.mxu0 0.0
    %717 = vmatprep.subr.mxu0 0.0
    %718 = vmatpush1.msra.mxu0 0.0
    %719 = vmatprep.subr.mxu0 0.0
    %720 = vmatpush1.msra.mxu0 0.0
    %721 = vmatprep.subr.mxu0 0.0
    %722 = vmatpush1.msra.mxu0 0.0
    %723 = vmatprep.subr.mxu0 0.0
    %724 = vmatpush1.msra.mxu0 0.0
    %725 = vmatprep.subr.mxu0 0.0
    %726 = vmatpush1.msra.mxu0 0.0
    %727 = vmatprep.subr.mxu0 0.0
    %728 = vmatpush1.msra.mxu0 0.0
    %729 = vmatprep.subr.mxu0 0.0
    %730 = vmatpush1.msra.mxu0 0.0
    %731 = vmatprep.subr.mxu0 0.0
    %732 = vmatpush1.msra.mxu0 0.0
    %733 = vmatprep.subr.mxu0 0.0
    %734 = vmatpush1.msra.mxu0 0.0
    %735 = vmatprep.subr.mxu0 0.0
    %736 = vmatpush1.msra.mxu0 0.0
    %737 = vmatprep.subr.mxu0 0.0
    %738 = vmatpush1.msra.mxu0 0.0
    %739 = vmatprep.subr.mxu0 0.0
    %740 = vmatpush1.msra.mxu0 0.0
    %741 = vmatprep.subr.mxu0 0.0
    %742 = vmatpush1.msra.mxu0 0.0
    %743 = vmatprep.subr.mxu0 0.0
    %744 = vmatpush1.msra.mxu0 0.0
    %745 = vmatprep.subr.mxu0 0.0
    %746 = vmatpush1.msra.mxu0 0.0
    %747 = vmatprep.subr.mxu0 0.0
    %748 = vmatpush1.msra.mxu0 0.0
    %749 = vmatprep.subr.mxu0 0.0
    %750 = vmatpush1.msra.mxu0 0.0
    %751 = vmatprep.subr.mxu0 0.0
    %752 = vmatpush1.msra.mxu0 0.0
    %753 = vmatprep.subr.mxu0 0.0
    %754 = vmatpush1.msra.mxu0 0.0
    %755 = vmatprep.subr.mxu0 0.0
    %756 = vmatpush1.msra.mxu0 0.0
    %757 = vmatprep.subr.mxu0 0.0
    %758 = vmatpush1.msra.mxu0 0.0
    %759 = vmatprep.subr.mxu0 0.0
    %760 = vmatpush1.msra.mxu0 0.0
    %761 = vmatprep.subr.mxu0 0.0
    %762 = vmatpush1.msra.mxu0 0.0
    %763 = vmatprep.subr.mxu0 0.0
    %764 = vmatpush1.msra.mxu0 0.0
    %765 = vmatprep.subr.mxu0 0.0
    %766 = vmatpush1.msra.mxu0 0.0
    %767 = vmatprep.subr.mxu0 0.0
    %768 = vmatpush1.msra.mxu0 0.0
    %769 = vmatprep.subr.mxu0 0.0
    %770 = vmatpush1.msra.mxu0 0.0
    %771 = vmatprep.subr.mxu0 0.0
    %772 = vmatpush1.msra.mxu0 0.0
    %773 = vmatprep.mubr.f32.mxu0 0.0
    %774 = vmatmul.mubr.f32.gmra.mrb[0].mxu0 %v707
    %v775 = vpop.f32.mrb[0].mxu0
    %v776 = vadd.f32 0.0, %v775
    %v777 = vpop.f32.mrb[0].mxu0
    %778 = vdwg.mxu0
    %779 = vst.msk [vmem:[#allocation2 + $0x8] sm:$0xff] %vm277, %v776
    %780 = vrot.lane.b32.xlu0 %v613, 112
    %v781 = vpop.permute.xlu0 %780
    %782 = vrot.lane.b32.xlu0 %v270, 80
    %v783 = vpop.permute.xlu0 %782
    %v784 = vsel %vm277, %v781, 0
    %v786 = vsel %vm277, %v783, 0
    %788 = vmatprep.subr.mxu0 0.0
    %789 = vmatpush1.xpose.msra.mxu0 %v786
    %790 = vmatprep.subr.mxu0 0.0
    %791 = vmatpush1.xpose.msra.mxu0 0.0
    %792 = vmatprep.subr.mxu0 0.0
    %793 = vmatpush1.xpose.msra.mxu0 0.0
    %794 = vmatprep.subr.mxu0 0.0
    %795 = vmatpush1.xpose.msra.mxu0 0.0
    %796 = vmatprep.subr.mxu0 0.0
    %797 = vmatpush1.xpose.msra.mxu0 0.0
    %798 = vmatprep.subr.mxu0 0.0
    %799 = vmatpush1.xpose.msra.mxu0 0.0
    %800 = vmatprep.subr.mxu0 0.0
    %801 = vmatpush1.xpose.msra.mxu0 0.0
    %802 = vmatprep.subr.mxu0 0.0
    %803 = vmatpush1.xpose.msra.mxu0 0.0
    %804 = vmatprep.subr.mxu0 0.0
    %805 = vmatpush1.xpose.msra.mxu0 0.0
    %806 = vmatprep.subr.mxu0 0.0
    %807 = vmatpush1.xpose.msra.mxu0 0.0
    %808 = vmatprep.subr.mxu0 0.0
    %809 = vmatpush1.xpose.msra.mxu0 0.0
    %810 = vmatprep.subr.mxu0 0.0
    %811 = vmatpush1.xpose.msra.mxu0 0.0
    %812 = vmatprep.subr.mxu0 0.0
    %813 = vmatpush1.xpose.msra.mxu0 0.0
    %814 = vmatprep.subr.mxu0 0.0
    %815 = vmatpush1.xpose.msra.mxu0 0.0
    %816 = vmatprep.subr.mxu0 0.0
    %817 = vmatpush1.xpose.msra.mxu0 0.0
    %818 = vmatprep.subr.mxu0 0.0
    %819 = vmatpush1.xpose.msra.mxu0 0.0
    %820 = vmatprep.subr.mxu0 0.0
    %821 = vmatpush1.xpose.msra.mxu0 0.0
    %822 = vmatprep.subr.mxu0 0.0
    %823 = vmatpush1.xpose.msra.mxu0 0.0
    %824 = vmatprep.subr.mxu0 0.0
    %825 = vmatpush1.xpose.msra.mxu0 0.0
    %826 = vmatprep.subr.mxu0 0.0
    %827 = vmatpush1.xpose.msra.mxu0 0.0
    %828 = vmatprep.subr.mxu0 0.0
    %829 = vmatpush1.xpose.msra.mxu0 0.0
    %830 = vmatprep.subr.mxu0 0.0
    %831 = vmatpush1.xpose.msra.mxu0 0.0
    %832 = vmatprep.subr.mxu0 0.0
    %833 = vmatpush1.xpose.msra.mxu0 0.0
    %834 = vmatprep.subr.mxu0 0.0
    %835 = vmatpush1.xpose.msra.mxu0 0.0
    %836 = vmatprep.subr.mxu0 0.0
    %837 = vmatpush1.xpose.msra.mxu0 0.0
    %838 = vmatprep.subr.mxu0 0.0
    %839 = vmatpush1.xpose.msra.mxu0 0.0
    %840 = vmatprep.subr.mxu0 0.0
    %841 = vmatpush1.xpose.msra.mxu0 0.0
    %842 = vmatprep.subr.mxu0 0.0
    %843 = vmatpush1.xpose.msra.mxu0 0.0
    %844 = vmatprep.subr.mxu0 0.0
    %845 = vmatpush1.xpose.msra.mxu0 0.0
    %846 = vmatprep.subr.mxu0 0.0
    %847 = vmatpush1.xpose.msra.mxu0 0.0
    %848 = vmatprep.subr.mxu0 0.0
    %849 = vmatpush1.xpose.msra.mxu0 0.0
    %850 = vmatprep.subr.mxu0 0.0
    %851 = vmatpush1.xpose.msra.mxu0 0.0
    %852 = vmatprep.mubr.f32.mxu0 0.0
    %853 = vmatmul.mubr.f32.gmra.mrb[0].mxu0 %v784
    %v854 = vpop.f32.mrb[0].mxu0
    %v855 = vadd.f32 0.0, %v854
    %v856 = vpop.f32.mrb[0].mxu0
    %857 = vdwg.mxu0
    %v858 = vsel %vm353, %v855, -inf
    %859 = vmax.xlane.f32.xlu0 %v858
    %v860 = vpop.xlane.xlu0 %859
    %v861 = vsub.f32 %v855, %v860
    %v862 = vmul.f32 %v861, 1.442695
    %v863 = vpow.pop %v862
    %v864 = vsel %vm353, %v863, 0.0
    %865 = vadd.xlane.f32.xlu0 %v864
    %v866 = vpop.xlane.xlu0 %865
    %v867 = vrcp.pop %v866
    %v868 = vmul.f32 %v863, %v867
    %869 = vrot.lane.b32.xlu0 %v270, 48
    %v870 = vpop.permute.xlu0 %869
    %v873 = vsel %vm353, %v868, 0
    %875 = vmatprep.subr.mxu0 0.0
    %876 = vmatpush1.msra.mxu0 %v870
    %877 = vmatprep.subr.mxu0 0.0
    %878 = vmatpush1.msra.mxu0 0.0
    %879 = vmatprep.subr.mxu0 0.0
    %880 = vmatpush1.msra.mxu0 0.0
    %881 = vmatprep.subr.mxu0 0.0
    %882 = vmatpush1.msra.mxu0 0.0
    %883 = vmatprep.subr.mxu0 0.0
    %884 = vmatpush1.msra.mxu0 0.0
    %885 = vmatprep.subr.mxu0 0.0
    %886 = vmatpush1.msra.mxu0 0.0
    %887 = vmatprep.subr.mxu0 0.0
    %888 = vmatpush1.msra.mxu0 0.0
    %889 = vmatprep.subr.mxu0 0.0
    %890 = vmatpush1.msra.mxu0 0.0
    %891 = vmatprep.subr.mxu0 0.0
    %892 = vmatpush1.msra.mxu0 0.0
    %893 = vmatprep.subr.mxu0 0.0
    %894 = vmatpush1.msra.mxu0 0.0
    %895 = vmatprep.subr.mxu0 0.0
    %896 = vmatpush1.msra.mxu0 0.0
    %897 = vmatprep.subr.mxu0 0.0
    %898 = vmatpush1.msra.mxu0 0.0
    %899 = vmatprep.subr.mxu0 0.0
    %900 = vmatpush1.msra.mxu0 0.0
    %901 = vmatprep.subr.mxu0 0.0
    %902 = vmatpush1.msra.mxu0 0.0
    %903 = vmatprep.subr.mxu0 0.0
    %904 = vmatpush1.msra.mxu0 0.0
    %905 = vmatprep.subr.mxu0 0.0
    %906 = vmatpush1.msra.mxu0 0.0
    %907 = vmatprep.subr.mxu0 0.0
    %908 = vmatpush1.msra.mxu0 0.0
    %909 = vmatprep.subr.mxu0 0.0
    %910 = vmatpush1.msra.mxu0 0.0
    %911 = vmatprep.subr.mxu0 0.0
    %912 = vmatpush1.msra.mxu0 0.0
    %913 = vmatprep.subr.mxu0 0.0
    %914 = vmatpush1.msra.mxu0 0.0
    %915 = vmatprep.subr.mxu0 0.0
    %916 = vmatpush1.msra.mxu0 0.0
    %917 = vmatprep.subr.mxu0 0.0
    %918 = vmatpush1.msra.mxu0 0.0
    %919 = vmatprep.subr.mxu0 0.0
    %920 = vmatpush1.msra.mxu0 0.0
    %921 = vmatprep.subr.mxu0 0.0
    %922 = vmatpush1.msra.mxu0 0.0
    %923 = vmatprep.subr.mxu0 0.0
    %924 = vmatpush1.msra.mxu0 0.0
    %925 = vmatprep.subr.mxu0 0.0
    %926 = vmatpush1.msra.mxu0 0.0
    %927 = vmatprep.subr.mxu0 0.0
    %928 = vmatpush1.msra.mxu0 0.0
    %929 = vmatprep.subr.mxu0 0.0
    %930 = vmatpush1.msra.mxu0 0.0
    %931 = vmatprep.subr.mxu0 0.0
    %932 = vmatpush1.msra.mxu0 0.0
    %933 = vmatprep.subr.mxu0 0.0
    %934 = vmatpush1.msra.mxu0 0.0
    %935 = vmatprep.subr.mxu0 0.0
    %936 = vmatpush1.msra.mxu0 0.0
    %937 = vmatprep.subr.mxu0 0.0
    %938 = vmatpush1.msra.mxu0 0.0
    %939 = vmatprep.mubr.f32.mxu0 0.0
    %940 = vmatmul.mubr.f32.gmra.mrb[0].mxu0 %v873
    %v941 = vpop.f32.mrb[0].mxu0
    %v942 = vadd.f32 0.0, %v941
    %v943 = vpop.f32.mrb[0].mxu0
    %944 = vdwg.mxu0
    %946 = vrot.lane.b32.xlu0 %v942, 16
    %v947 = vpop.permute.xlu0 %946
    %949 = vst.msk [vmem:[#allocation2 + $0x8] sm:$0xff] %vm611, %v947
    %v950 = vld [vmem:[#allocation2] sm:$0xff]
    %v951 = vld [vmem:[#allocation2 + $0x8] sm:$0xff]
    %v953 = vlaneseq
    %v954 = vshrl.u32 %v953, 7
    %v955 = vsub.s32 0, %v954
    %v956 = vrot.slane %v166, %v955
    %v959 = vsel %vm191, %v950, 0
    %v962 = vsel %vm191, %v951, 0
    %964 = vmatprep.subr.mxu0 0.0
    %965 = vmatpush1.msra.mxu0 %v162
    %966 = vmatprep.subr.mxu0 0.0
    %967 = vmatpush1.msra.mxu0 %v163
    %968 = vmatprep.subr.mxu0 0.0
    %969 = vmatpush1.msra.mxu0 %v164
    %970 = vmatprep.subr.mxu0 0.0
    %971 = vmatpush1.msra.mxu0 %v165
    %972 = vmatprep.subr.mxu0 0.0
    %973 = vmatpush1.msra.mxu0 0.0
    %974 = vmatprep.subr.mxu0 0.0
    %975 = vmatpush1.msra.mxu0 0.0
    %976 = vmatprep.subr.mxu0 0.0
    %977 = vmatpush1.msra.mxu0 0.0
    %978 = vmatprep.subr.mxu0 0.0
    %979 = vmatpush1.msra.mxu0 0.0
    %980 = vmatprep.subr.mxu0 0.0
    %981 = vmatpush1.msra.mxu0 0.0
    %982 = vmatprep.subr.mxu0 0.0
    %983 = vmatpush1.msra.mxu0 0.0
    %984 = vmatprep.subr.mxu0 0.0
    %985 = vmatpush1.msra.mxu0 0.0
    %986 = vmatprep.subr.mxu0 0.0
    %987 = vmatpush1.msra.mxu0 0.0
    %988 = vmatprep.subr.mxu0 0.0
    %989 = vmatpush1.msra.mxu0 0.0
    %990 = vmatprep.subr.mxu0 0.0
    %991 = vmatpush1.msra.mxu0 0.0
    %992 = vmatprep.subr.mxu0 0.0
    %993 = vmatpush1.msra.mxu0 0.0
    %994 = vmatprep.subr.mxu0 0.0
    %995 = vmatpush1.msra.mxu0 0.0
    %996 = vmatprep.subr.mxu0 0.0
    %997 = vmatpush1.msra.mxu0 0.0
    %998 = vmatprep.subr.mxu0 0.0
    %999 = vmatpush1.msra.mxu0 0.0
    %1000 = vmatprep.subr.mxu0 0.0
    %1001 = vmatpush1.msra.mxu0 0.0
    %1002 = vmatprep.subr.mxu0 0.0
    %1003 = vmatpush1.msra.mxu0 0.0
    %1004 = vmatprep.subr.mxu0 0.0
    %1005 = vmatpush1.msra.mxu0 0.0
    %1006 = vmatprep.subr.mxu0 0.0
    %1007 = vmatpush1.msra.mxu0 0.0
    %1008 = vmatprep.subr.mxu0 0.0
    %1009 = vmatpush1.msra.mxu0 0.0
    %1010 = vmatprep.subr.mxu0 0.0
    %1011 = vmatpush1.msra.mxu0 0.0
    %1012 = vmatprep.subr.mxu0 0.0
    %1013 = vmatpush1.msra.mxu0 0.0
    %1014 = vmatprep.subr.mxu0 0.0
    %1015 = vmatpush1.msra.mxu0 0.0
    %1016 = vmatprep.subr.mxu0 0.0
    %1017 = vmatpush1.msra.mxu0 0.0
    %1018 = vmatprep.subr.mxu0 0.0
    %1019 = vmatpush1.msra.mxu0 0.0
    %1020 = vmatprep.subr.mxu0 0.0
    %1021 = vmatpush1.msra.mxu0 0.0
    %1022 = vmatprep.subr.mxu0 0.0
    %1023 = vmatpush1.msra.mxu0 0.0
    %1024 = vmatprep.subr.mxu0 0.0
    %1025 = vmatpush1.msra.mxu0 0.0
    %1026 = vmatprep.subr.mxu0 0.0
    %1027 = vmatpush1.msra.mxu0 0.0
    %1028 = vmatprep.mubr.f32.mxu0 0.0
    %1029 = vmatmul.mubr.f32.gmra.mrb[0].mxu0 %v959
    %v1030 = vpop.f32.mrb[0].mxu0
    %v1031 = vadd.f32 %v956, %v1030
    %v1032 = vpop.f32.mrb[0].mxu0
    %1033 = vmatprep.mubr.f32.mxu0 0.0
    %1034 = vmatmul.mubr.f32.gmra.mrb[0].mxu0 %v962
    %v1035 = vpop.f32.mrb[0].mxu0
    %v1036 = vadd.f32 %v956, %v1035
    %v1037 = vpop.f32.mrb[0].mxu0
    %1038 = vdwg.mxu0
    %v1039 = vadd.f32 %v149, %v1031
    %v1040 = vadd.f32 %v154, %v1036
    %v1041 = vsel %vm191, %v1039, 0.0
    %1042 = vadd.xlane.f32.xlu0 %v1041
    %v1043 = vpop.xlane.xlu0 %1042
    %v1044 = vsel %vm191, %v1040, 0.0
    %1045 = vadd.xlane.f32.xlu0 %v1044
    %v1046 = vpop.xlane.xlu0 %1045
    %v1047 = vrcp.pop 32.0
    %v1048 = vmul.f32 %v1043, %v1047
    %v1049 = vmul.f32 %v1046, %v1047
    %v1050 = vsub.f32 %v1039, %v1048
    %v1051 = vsub.f32 %v1040, %v1049
    %v1052 = vmul.f32 %v1050, %v1050
    %v1053 = vmul.f32 %v1051, %v1051
    %v1054 = vsel %vm191, %v1052, 0.0
    %1055 = vadd.xlane.f32.xlu0 %v1054
    %v1056 = vpop.xlane.xlu0 %1055
    %v1057 = vsel %vm191, %v1053, 0.0
    %1058 = vadd.xlane.f32.xlu0 %v1057
    %v1059 = vpop.xlane.xlu0 %1058
    %v1060 = vmul.f32 %v1056, %v1047
    %v1061 = vmul.f32 %v1059, %v1047
    %v1062 = vadd.f32 %v1060, 1e-05
    %v1063 = vadd.f32 %v1061, 1e-05
    %v1064 = vrsqrt.pop %v1062
    %v1065 = vrsqrt.pop %v1063
    %v1066 = vmul.f32 %v1050, %v1064
    %v1067 = vmul.f32 %v1051, %v1065
    %v1069 = vlaneseq
    %v1070 = vshrl.u32 %v1069, 7
    %v1071 = vsub.s32 0, %v1070
    %v1072 = vrot.slane %v167, %v1071
    %v1074 = vmul.f32 %v1066, %v1072
    %v1075 = vmul.f32 %v1067, %v1072
    %v1077 = vlaneseq
    %v1078 = vshrl.u32 %v1077, 7
    %v1079 = vsub.s32 0, %v1078
    %v1080 = vrot.slane %v168, %v1079
    %v1082 = vadd.f32 %v1074, %v1080
    %v1083 = vadd.f32 %v1075, %v1080
    %v1085 = vlaneseq
    %v1086 = vshrl.u32 %v1085, 7
    %v1087 = vsub.s32 0, %v1086
    %v1088 = vrot.slane %v173, %v1087
    %v1091 = vsel %vm191, %v1082, 0
    %v1094 = vsel %vm191, %v1083, 0
    %1096 = vmatprep.subr.mxu0 0.0
    %1097 = vmatpush1.msra.mxu0 %v169
    %1098 = vmatprep.subr.mxu0 0.0
    %1099 = vmatpush1.msra.mxu0 %v170
    %1100 = vmatprep.subr.mxu0 0.0
    %1101 = vmatpush1.msra.mxu0 %v171
    %1102 = vmatprep.subr.mxu0 0.0
    %1103 = vmatpush1.msra.mxu0 %v172
    %1104 = vmatprep.subr.mxu0 0.0
    %1105 = vmatpush1.msra.mxu0 0.0
    %1106 = vmatprep.subr.mxu0 0.0
    %1107 = vmatpush1.msra.mxu0 0.0
    %1108 = vmatprep.subr.mxu0 0.0
    %1109 = vmatpush1.msra.mxu0 0.0
    %1110 = vmatprep.subr.mxu0 0.0
    %1111 = vmatpush1.msra.mxu0 0.0
    %1112 = vmatprep.subr.mxu0 0.0
    %1113 = vmatpush1.msra.mxu0 0.0
    %1114 = vmatprep.subr.mxu0 0.0
    %1115 = vmatpush1.msra.mxu0 0.0
    %1116 = vmatprep.subr.mxu0 0.0
    %1117 = vmatpush1.msra.mxu0 0.0
    %1118 = vmatprep.subr.mxu0 0.0
    %1119 = vmatpush1.msra.mxu0 0.0
    %1120 = vmatprep.subr.mxu0 0.0
    %1121 = vmatpush1.msra.mxu0 0.0
    %1122 = vmatprep.subr.mxu0 0.0
    %1123 = vmatpush1.msra.mxu0 0.0
    %1124 = vmatprep.subr.mxu0 0.0
    %1125 = vmatpush1.msra.mxu0 0.0
    %1126 = vmatprep.subr.mxu0 0.0
    %1127 = vmatpush1.msra.mxu0 0.0
    %1128 = vmatprep.subr.mxu0 0.0
    %1129 = vmatpush1.msra.mxu0 0.0
    %1130 = vmatprep.subr.mxu0 0.0
    %1131 = vmatpush1.msra.mxu0 0.0
    %1132 = vmatprep.subr.mxu0 0.0
    %1133 = vmatpush1.msra.mxu0 0.0
    %1134 = vmatprep.subr.mxu0 0.0
    %1135 = vmatpush1.msra.mxu0 0.0
    %1136 = vmatprep.subr.mxu0 0.0
    %1137 = vmatpush1.msra.mxu0 0.0
    %1138 = vmatprep.subr.mxu0 0.0
    %1139 = vmatpush1.msra.mxu0 0.0
    %1140 = vmatprep.subr.mxu0 0.0
    %1141 = vmatpush1.msra.mxu0 0.0
    %1142 = vmatprep.subr.mxu0 0.0
    %1143 = vmatpush1.msra.mxu0 0.0
    %1144 = vmatprep.subr.mxu0 0.0
    %1145 = vmatpush1.msra.mxu0 0.0
    %1146 = vmatprep.subr.mxu0 0.0
    %1147 = vmatpush1.msra.mxu0 0.0
    %1148 = vmatprep.subr.mxu0 0.0
    %1149 = vmatpush1.msra.mxu0 0.0
    %1150 = vmatprep.subr.mxu0 0.0
    %1151 = vmatpush1.msra.mxu0 0.0
    %1152 = vmatprep.subr.mxu0 0.0
    %1153 = vmatpush1.msra.mxu0 0.0
    %1154 = vmatprep.subr.mxu0 0.0
    %1155 = vmatpush1.msra.mxu0 0.0
    %1156 = vmatprep.subr.mxu0 0.0
    %1157 = vmatpush1.msra.mxu0 0.0
    %1158 = vmatprep.subr.mxu0 0.0
    %1159 = vmatpush1.msra.mxu0 0.0
    %1160 = vmatprep.mubr.f32.mxu0 0.0
    %1161 = vmatmul.mubr.f32.gmra.mrb[0].mxu0 %v1091
    %v1162 = vpop.f32.mrb[0].mxu0
    %v1163 = vadd.f32 %v1088, %v1162
    %v1164 = vpop.f32.mrb[0].mxu0
    %1165 = vmatprep.mubr.f32.mxu0 0.0
    %1166 = vmatmul.mubr.f32.gmra.mrb[0].mxu0 %v1094
    %v1167 = vpop.f32.mrb[0].mxu0
    %v1168 = vadd.f32 %v1088, %v1167
    %v1169 = vpop.f32.mrb[0].mxu0
    %1170 = vdwg.mxu0
    %v1171 = vmax.f32 %v1163, 0.0
    %v1172 = vmax.f32 %v1168, 0.0
    %v1174 = vlaneseq
    %v1175 = vshrl.u32 %v1174, 7
    %v1176 = vsub.s32 0, %v1175
    %v1177 = vrot.slane %v182, %v1176
    %vm1179 = vcmask 523264
    %v1181 = vsel %vm1179, %v1171, 0
    %v1184 = vsel %vm1179, %v1172, 0
    %1186 = vmatprep.subr.mxu0 0.0
    %1187 = vmatpush1.msra.mxu0 %v174
    %1188 = vmatprep.subr.mxu0 0.0
    %1189 = vmatpush1.msra.mxu0 %v175
    %1190 = vmatprep.subr.mxu0 0.0
    %1191 = vmatpush1.msra.mxu0 %v176
    %1192 = vmatprep.subr.mxu0 0.0
    %1193 = vmatpush1.msra.mxu0 %v177
    %1194 = vmatprep.subr.mxu0 0.0
    %1195 = vmatpush1.msra.mxu0 %v178
    %1196 = vmatprep.subr.mxu0 0.0
    %1197 = vmatpush1.msra.mxu0 %v179
    %1198 = vmatprep.subr.mxu0 0.0
    %1199 = vmatpush1.msra.mxu0 %v180
    %1200 = vmatprep.subr.mxu0 0.0
    %1201 = vmatpush1.msra.mxu0 %v181
    %1202 = vmatprep.subr.mxu0 0.0
    %1203 = vmatpush1.msra.mxu0 0.0
    %1204 = vmatprep.subr.mxu0 0.0
    %1205 = vmatpush1.msra.mxu0 0.0
    %1206 = vmatprep.subr.mxu0 0.0
    %1207 = vmatpush1.msra.mxu0 0.0
    %1208 = vmatprep.subr.mxu0 0.0
    %1209 = vmatpush1.msra.mxu0 0.0
    %1210 = vmatprep.subr.mxu0 0.0
    %1211 = vmatpush1.msra.mxu0 0.0
    %1212 = vmatprep.subr.mxu0 0.0
    %1213 = vmatpush1.msra.mxu0 0.0
    %1214 = vmatprep.subr.mxu0 0.0
    %1215 = vmatpush1.msra.mxu0 0.0
    %1216 = vmatprep.subr.mxu0 0.0
    %1217 = vmatpush1.msra.mxu0 0.0
    %1218 = vmatprep.subr.mxu0 0.0
    %1219 = vmatpush1.msra.mxu0 0.0
    %1220 = vmatprep.subr.mxu0 0.0
    %1221 = vmatpush1.msra.mxu0 0.0
    %1222 = vmatprep.subr.mxu0 0.0
    %1223 = vmatpush1.msra.mxu0 0.0
    %1224 = vmatprep.subr.mxu0 0.0
    %1225 = vmatpush1.msra.mxu0 0.0
    %1226 = vmatprep.subr.mxu0 0.0
    %1227 = vmatpush1.msra.mxu0 0.0
    %1228 = vmatprep.subr.mxu0 0.0
    %1229 = vmatpush1.msra.mxu0 0.0
    %1230 = vmatprep.subr.mxu0 0.0
    %1231 = vmatpush1.msra.mxu0 0.0
    %1232 = vmatprep.subr.mxu0 0.0
    %1233 = vmatpush1.msra.mxu0 0.0
    %1234 = vmatprep.subr.mxu0 0.0
    %1235 = vmatpush1.msra.mxu0 0.0
    %1236 = vmatprep.subr.mxu0 0.0
    %1237 = vmatpush1.msra.mxu0 0.0
    %1238 = vmatprep.subr.mxu0 0.0
    %1239 = vmatpush1.msra.mxu0 0.0
    %1240 = vmatprep.subr.mxu0 0.0
    %1241 = vmatpush1.msra.mxu0 0.0
    %1242 = vmatprep.subr.mxu0 0.0
    %1243 = vmatpush1.msra.mxu0 0.0
    %1244 = vmatprep.subr.mxu0 0.0
    %1245 = vmatpush1.msra.mxu0 0.0
    %1246 = vmatprep.subr.mxu0 0.0
    %1247 = vmatpush1.msra.mxu0 0.0
    %1248 = vmatprep.subr.mxu0 0.0
    %1249 = vmatpush1.msra.mxu0 0.0
    %1250 = vmatprep.mubr.f32.mxu0 0.0
    %1251 = vmatmul.mubr.f32.gmra.mrb[0].mxu0 %v1181
    %v1252 = vpop.f32.mrb[0].mxu0
    %v1253 = vadd.f32 %v1177, %v1252
    %v1254 = vpop.f32.mrb[0].mxu0
    %1255 = vmatprep.mubr.f32.mxu0 0.0
    %1256 = vmatmul.mubr.f32.gmra.mrb[0].mxu0 %v1184
    %v1257 = vpop.f32.mrb[0].mxu0
    %v1258 = vadd.f32 %v1177, %v1257
    %v1259 = vpop.f32.mrb[0].mxu0
    %1260 = vdwg.mxu0
    %v1261 = vadd.f32 %v1082, %v1253
    %v1262 = vadd.f32 %v1083, %v1258
    %v1263 = vsel %vm191, %v1261, 0.0
    %1264 = vadd.xlane.f32.xlu0 %v1263
    %v1265 = vpop.xlane.xlu0 %1264
    %v1266 = vsel %vm191, %v1262, 0.0
    %1267 = vadd.xlane.f32.xlu0 %v1266
    %v1268 = vpop.xlane.xlu0 %1267
    %v1269 = vmul.f32 %v1265, %v1047
    %v1270 = vmul.f32 %v1268, %v1047
    %v1271 = vsub.f32 %v1261, %v1269
    %v1272 = vsub.f32 %v1262, %v1270
    %v1273 = vmul.f32 %v1271, %v1271
    %v1274 = vmul.f32 %v1272, %v1272
    %v1275 = vsel %vm191, %v1273, 0.0
    %1276 = vadd.xlane.f32.xlu0 %v1275
    %v1277 = vpop.xlane.xlu0 %1276
    %v1278 = vsel %vm191, %v1274, 0.0
    %1279 = vadd.xlane.f32.xlu0 %v1278
    %v1280 = vpop.xlane.xlu0 %1279
    %v1281 = vmul.f32 %v1277, %v1047
    %v1282 = vmul.f32 %v1280, %v1047
    %v1283 = vadd.f32 %v1281, 1e-05
    %v1284 = vadd.f32 %v1282, 1e-05
    %v1285 = vrsqrt.pop %v1283
    %v1286 = vrsqrt.pop %v1284
    %v1287 = vmul.f32 %v1271, %v1285
    %v1288 = vmul.f32 %v1272, %v1286
    %v1290 = vlaneseq
    %v1291 = vshrl.u32 %v1290, 7
    %v1292 = vsub.s32 0, %v1291
    %v1293 = vrot.slane %v183, %v1292
    %v1295 = vmul.f32 %v1287, %v1293
    %v1296 = vmul.f32 %v1288, %v1293
    %v1298 = vlaneseq
    %v1299 = vshrl.u32 %v1298, 7
    %v1300 = vsub.s32 0, %v1299
    %v1301 = vrot.slane %v184, %v1300
    %v1303 = vadd.f32 %v1295, %v1301
    %v1304 = vadd.f32 %v1296, %v1301
    %s1305 = scalar_lea.vmem %s2, 32
    %v1306 = vld [vmem:[%s1305] sm:$0xff]
    %v1307 = vld [vmem:[%s1305 + $0x8] sm:$0xff]
    %v1308 = vld [vmem:[%s1305 + $0x10] sm:$0xff]
    %v1309 = vld [vmem:[%s1305 + $0x18] sm:$0xff]
    %s1310 = scalar_lea.vmem %s3, 1
    %v1311 = vld [vmem:[%s1310] sm:$0x1]
    %s1312 = scalar_lea.vmem %s4, 32
    %v1313 = vld [vmem:[%s1312] sm:$0xff]
    %v1314 = vld [vmem:[%s1312 + $0x8] sm:$0xff]
    %v1315 = vld [vmem:[%s1312 + $0x10] sm:$0xff]
    %v1316 = vld [vmem:[%s1312 + $0x18] sm:$0xff]
    %s1317 = scalar_lea.vmem %s5, 1
    %v1318 = vld [vmem:[%s1317] sm:$0x1]
    %s1319 = scalar_lea.vmem %s6, 1
    %v1320 = vld [vmem:[%s1319] sm:$0x1]
    %s1321 = scalar_lea.vmem %s7, 1
    %v1322 = vld [vmem:[%s1321] sm:$0x1]
    %s1323 = scalar_lea.vmem %s8, 32
    %v1324 = vld [vmem:[%s1323] sm:$0xff]
    %v1325 = vld [vmem:[%s1323 + $0x8] sm:$0xff]
    %v1326 = vld [vmem:[%s1323 + $0x10] sm:$0xff]
    %v1327 = vld [vmem:[%s1323 + $0x18] sm:$0xff]
    %s1328 = scalar_lea.vmem %s9, 1
    %v1329 = vld [vmem:[%s1328] sm:$0x1]
    %s1330 = scalar_lea.vmem %s10, 64
    %v1331 = vld [vmem:[%s1330] sm:$0xff]
    %v1332 = vld [vmem:[%s1330 + $0x8] sm:$0xff]
    %v1333 = vld [vmem:[%s1330 + $0x10] sm:$0xff]
    %v1334 = vld [vmem:[%s1330 + $0x18] sm:$0xff]
    %v1335 = vld [vmem:[%s1330 + $0x20] sm:$0xff]
    %v1336 = vld [vmem:[%s1330 + $0x28] sm:$0xff]
    %v1337 = vld [vmem:[%s1330 + $0x30] sm:$0xff]
    %v1338 = vld [vmem:[%s1330 + $0x38] sm:$0xff]
    %s1339 = scalar_lea.vmem %s11, 1
    %v1340 = vld [vmem:[%s1339] sm:$0x1]
    %s1341 = scalar_lea.vmem %s12, 1
    %v1342 = vld [vmem:[%s1341] sm:$0x1]
    %s1343 = scalar_lea.vmem %s13, 1
    %v1344 = vld [vmem:[%s1343] sm:$0x1]
    %v1346 = vlaneseq
    %v1347 = vshrl.u32 %v1346, 7
    %v1348 = vsub.s32 0, %v1347
    %v1349 = vrot.slane %v1311, %v1348
    %v1352 = vsel %vm191, %v1303, 0
    %v1355 = vsel %vm191, %v1304, 0
    %1357 = vmatprep.subr.mxu0 0.0
    %1358 = vmatpush1.msra.mxu0 %v1306
    %1359 = vmatprep.subr.mxu0 0.0
    %1360 = vmatpush1.msra.mxu0 %v1307
    %1361 = vmatprep.subr.mxu0 0.0
    %1362 = vmatpush1.msra.mxu0 %v1308
    %1363 = vmatprep.subr.mxu0 0.0
    %1364 = vmatpush1.msra.mxu0 %v1309
    %1365 = vmatprep.subr.mxu0 0.0
    %1366 = vmatpush1.msra.mxu0 0.0
    %1367 = vmatprep.subr.mxu0 0.0
    %1368 = vmatpush1.msra.mxu0 0.0
    %1369 = vmatprep.subr.mxu0 0.0
    %1370 = vmatpush1.msra.mxu0 0.0
    %1371 = vmatprep.subr.mxu0 0.0
    %1372 = vmatpush1.msra.mxu0 0.0
    %1373 = vmatprep.subr.mxu0 0.0
    %1374 = vmatpush1.msra.mxu0 0.0
    %1375 = vmatprep.subr.mxu0 0.0
    %1376 = vmatpush1.msra.mxu0 0.0
    %1377 = vmatprep.subr.mxu0 0.0
    %1378 = vmatpush1.msra.mxu0 0.0
    %1379 = vmatprep.subr.mxu0 0.0
    %1380 = vmatpush1.msra.mxu0 0.0
    %1381 = vmatprep.subr.mxu0 0.0
    %1382 = vmatpush1.msra.mxu0 0.0
    %1383 = vmatprep.subr.mxu0 0.0
    %1384 = vmatpush1.msra.mxu0 0.0
    %1385 = vmatprep.subr.mxu0 0.0
    %1386 = vmatpush1.msra.mxu0 0.0
    %1387 = vmatprep.subr.mxu0 0.0
    %1388 = vmatpush1.msra.mxu0 0.0
    %1389 = vmatprep.subr.mxu0 0.0
    %1390 = vmatpush1.msra.mxu0 0.0
    %1391 = vmatprep.subr.mxu0 0.0
    %1392 = vmatpush1.msra.mxu0 0.0
    %1393 = vmatprep.subr.mxu0 0.0
    %1394 = vmatpush1.msra.mxu0 0.0
    %1395 = vmatprep.subr.mxu0 0.0
    %1396 = vmatpush1.msra.mxu0 0.0
    %1397 = vmatprep.subr.mxu0 0.0
    %1398 = vmatpush1.msra.mxu0 0.0
    %1399 = vmatprep.subr.mxu0 0.0
    %1400 = vmatpush1.msra.mxu0 0.0
    %1401 = vmatprep.subr.mxu0 0.0
    %1402 = vmatpush1.msra.mxu0 0.0
    %1403 = vmatprep.subr.mxu0 0.0
    %1404 = vmatpush1.msra.mxu0 0.0
    %1405 = vmatprep.subr.mxu0 0.0
    %1406 = vmatpush1.msra.mxu0 0.0
    %1407 = vmatprep.subr.mxu0 0.0
    %1408 = vmatpush1.msra.mxu0 0.0
    %1409 = vmatprep.subr.mxu0 0.0
    %1410 = vmatpush1.msra.mxu0 0.0
    %1411 = vmatprep.subr.mxu0 0.0
    %1412 = vmatpush1.msra.mxu0 0.0
    %1413 = vmatprep.subr.mxu0 0.0
    %1414 = vmatpush1.msra.mxu0 0.0
    %1415 = vmatprep.subr.mxu0 0.0
    %1416 = vmatpush1.msra.mxu0 0.0
    %1417 = vmatprep.subr.mxu0 0.0
    %1418 = vmatpush1.msra.mxu0 0.0
    %1419 = vmatprep.subr.mxu0 0.0
    %1420 = vmatpush1.msra.mxu0 0.0
    %1421 = vmatprep.mubr.f32.mxu0 0.0
    %1422 = vmatmul.mubr.f32.gmra.mrb[0].mxu0 %v1352
    %v1423 = vpop.f32.mrb[0].mxu0
    %v1424 = vadd.f32 %v1349, %v1423
    %v1425 = vpop.f32.mrb[0].mxu0
    %1426 = vmatprep.mubr.f32.mxu0 0.0
    %1427 = vmatmul.mubr.f32.gmra.mrb[0].mxu0 %v1355
    %v1428 = vpop.f32.mrb[0].mxu0
    %v1429 = vadd.f32 %v1349, %v1428
    %v1430 = vpop.f32.mrb[0].mxu0
    %1431 = vdwg.mxu0
    %v1432 = vmul.f32 %v1424, 0.25
    %1434 = vrot.lane.b32.xlu0 %v1424, 96
    %v1435 = vpop.permute.xlu0 %1434
    %v1437 = vsel %vm277, %v1432, 0
    %v1439 = vsel %vm277, %v1435, 0
    %1441 = vmatprep.subr.mxu0 0.0
    %1442 = vmatpush1.xpose.msra.mxu0 %v1439
    %1443 = vmatprep.subr.mxu0 0.0
    %1444 = vmatpush1.xpose.msra.mxu0 0.0
    %1445 = vmatprep.subr.mxu0 0.0
    %1446 = vmatpush1.xpose.msra.mxu0 0.0
    %1447 = vmatprep.subr.mxu0 0.0
    %1448 = vmatpush1.xpose.msra.mxu0 0.0
    %1449 = vmatprep.subr.mxu0 0.0
    %1450 = vmatpush1.xpose.msra.mxu0 0.0
    %1451 = vmatprep.subr.mxu0 0.0
    %1452 = vmatpush1.xpose.msra.mxu0 0.0
    %1453 = vmatprep.subr.mxu0 0.0
    %1454 = vmatpush1.xpose.msra.mxu0 0.0
    %1455 = vmatprep.subr.mxu0 0.0
    %1456 = vmatpush1.xpose.msra.mxu0 0.0
    %1457 = vmatprep.subr.mxu0 0.0
    %1458 = vmatpush1.xpose.msra.mxu0 0.0
    %1459 = vmatprep.subr.mxu0 0.0
    %1460 = vmatpush1.xpose.msra.mxu0 0.0
    %1461 = vmatprep.subr.mxu0 0.0
    %1462 = vmatpush1.xpose.msra.mxu0 0.0
    %1463 = vmatprep.subr.mxu0 0.0
    %1464 = vmatpush1.xpose.msra.mxu0 0.0
    %1465 = vmatprep.subr.mxu0 0.0
    %1466 = vmatpush1.xpose.msra.mxu0 0.0
    %1467 = vmatprep.subr.mxu0 0.0
    %1468 = vmatpush1.xpose.msra.mxu0 0.0
    %1469 = vmatprep.subr.mxu0 0.0
    %1470 = vmatpush1.xpose.msra.mxu0 0.0
    %1471 = vmatprep.subr.mxu0 0.0
    %1472 = vmatpush1.xpose.msra.mxu0 0.0
    %1473 = vmatprep.subr.mxu0 0.0
    %1474 = vmatpush1.xpose.msra.mxu0 0.0
    %1475 = vmatprep.subr.mxu0 0.0
    %1476 = vmatpush1.xpose.msra.mxu0 0.0
    %1477 = vmatprep.subr.mxu0 0.0
    %1478 = vmatpush1.xpose.msra.mxu0 0.0
    %1479 = vmatprep.subr.mxu0 0.0
    %1480 = vmatpush1.xpose.msra.mxu0 0.0
    %1481 = vmatprep.subr.mxu0 0.0
    %1482 = vmatpush1.xpose.msra.mxu0 0.0
    %1483 = vmatprep.subr.mxu0 0.0
    %1484 = vmatpush1.xpose.msra.mxu0 0.0
    %1485 = vmatprep.subr.mxu0 0.0
    %1486 = vmatpush1.xpose.msra.mxu0 0.0
    %1487 = vmatprep.subr.mxu0 0.0
    %1488 = vmatpush1.xpose.msra.mxu0 0.0
    %1489 = vmatprep.subr.mxu0 0.0
    %1490 = vmatpush1.xpose.msra.mxu0 0.0
    %1491 = vmatprep.subr.mxu0 0.0
    %1492 = vmatpush1.xpose.msra.mxu0 0.0
    %1493 = vmatprep.subr.mxu0 0.0
    %1494 = vmatpush1.xpose.msra.mxu0 0.0
    %1495 = vmatprep.subr.mxu0 0.0
    %1496 = vmatpush1.xpose.msra.mxu0 0.0
    %1497 = vmatprep.subr.mxu0 0.0
    %1498 = vmatpush1.xpose.msra.mxu0 0.0
    %1499 = vmatprep.subr.mxu0 0.0
    %1500 = vmatpush1.xpose.msra.mxu0 0.0
    %1501 = vmatprep.subr.mxu0 0.0
    %1502 = vmatpush1.xpose.msra.mxu0 0.0
    %1503 = vmatprep.subr.mxu0 0.0
    %1504 = vmatpush1.xpose.msra.mxu0 0.0
    %1505 = vmatprep.mubr.f32.mxu0 0.0
    %1506 = vmatmul.mubr.f32.gmra.mrb[0].mxu0 %v1437
    %v1507 = vpop.f32.mrb[0].mxu0
    %v1508 = vadd.f32 0.0, %v1507
    %v1509 = vpop.f32.mrb[0].mxu0
    %1510 = vdwg.mxu0
    %v1511 = vsel %vm353, %v1508, -inf
    %1512 = vmax.xlane.f32.xlu0 %v1511
    %v1513 = vpop.xlane.xlu0 %1512
    %v1514 = vsub.f32 %v1508, %v1513
    %v1515 = vmul.f32 %v1514, 1.442695
    %v1516 = vpow.pop %v1515
    %v1517 = vsel %vm353, %v1516, 0.0
    %1518 = vadd.xlane.f32.xlu0 %v1517
    %v1519 = vpop.xlane.xlu0 %1518
    %v1520 = vrcp.pop %v1519
    %v1521 = vmul.f32 %v1516, %v1520
    %1522 = vrot.lane.b32.xlu0 %v1424, 64
    %v1523 = vpop.permute.xlu0 %1522
    %v1526 = vsel %vm353, %v1521, 0
    %1528 = vmatprep.subr.mxu0 0.0
    %1529 = vmatpush1.msra.mxu0 %v1523
    %1530 = vmatprep.subr.mxu0 0.0
    %1531 = vmatpush1.msra.mxu0 0.0
    %1532 = vmatprep.subr.mxu0 0.0
    %1533 = vmatpush1.msra.mxu0 0.0
    %1534 = vmatprep.subr.mxu0 0.0
    %1535 = vmatpush1.msra.mxu0 0.0
    %1536 = vmatprep.subr.mxu0 0.0
    %1537 = vmatpush1.msra.mxu0 0.0
    %1538 = vmatprep.subr.mxu0 0.0
    %1539 = vmatpush1.msra.mxu0 0.0
    %1540 = vmatprep.subr.mxu0 0.0
    %1541 = vmatpush1.msra.mxu0 0.0
    %1542 = vmatprep.subr.mxu0 0.0
    %1543 = vmatpush1.msra.mxu0 0.0
    %1544 = vmatprep.subr.mxu0 0.0
    %1545 = vmatpush1.msra.mxu0 0.0
    %1546 = vmatprep.subr.mxu0 0.0
    %1547 = vmatpush1.msra.mxu0 0.0
    %1548 = vmatprep.subr.mxu0 0.0
    %1549 = vmatpush1.msra.mxu0 0.0
    %1550 = vmatprep.subr.mxu0 0.0
    %1551 = vmatpush1.msra.mxu0 0.0
    %1552 = vmatprep.subr.mxu0 0.0
    %1553 = vmatpush1.msra.mxu0 0.0
    %1554 = vmatprep.subr.mxu0 0.0
    %1555 = vmatpush1.msra.mxu0 0.0
    %1556 = vmatprep.subr.mxu0 0.0
    %1557 = vmatpush1.msra.mxu0 0.0
    %1558 = vmatprep.subr.mxu0 0.0
    %1559 = vmatpush1.msra.mxu0 0.0
    %1560 = vmatprep.subr.mxu0 0.0
    %1561 = vmatpush1.msra.mxu0 0.0
    %1562 = vmatprep.subr.mxu0 0.0
    %1563 = vmatpush1.msra.mxu0 0.0
    %1564 = vmatprep.subr.mxu0 0.0
    %1565 = vmatpush1.msra.mxu0 0.0
    %1566 = vmatprep.subr.mxu0 0.0
    %1567 = vmatpush1.msra.mxu0 0.0
    %1568 = vmatprep.subr.mxu0 0.0
    %1569 = vmatpush1.msra.mxu0 0.0
    %1570 = vmatprep.subr.mxu0 0.0
    %1571 = vmatpush1.msra.mxu0 0.0
    %1572 = vmatprep.subr.mxu0 0.0
    %1573 = vmatpush1.msra.mxu0 0.0
    %1574 = vmatprep.subr.mxu0 0.0
    %1575 = vmatpush1.msra.mxu0 0.0
    %1576 = vmatprep.subr.mxu0 0.0
    %1577 = vmatpush1.msra.mxu0 0.0
    %1578 = vmatprep.subr.mxu0 0.0
    %1579 = vmatpush1.msra.mxu0 0.0
    %1580 = vmatprep.subr.mxu0 0.0
    %1581 = vmatpush1.msra.mxu0 0.0
    %1582 = vmatprep.subr.mxu0 0.0
    %1583 = vmatpush1.msra.mxu0 0.0
    %1584 = vmatprep.subr.mxu0 0.0
    %1585 = vmatpush1.msra.mxu0 0.0
    %1586 = vmatprep.subr.mxu0 0.0
    %1587 = vmatpush1.msra.mxu0 0.0
    %1588 = vmatprep.subr.mxu0 0.0
    %1589 = vmatpush1.msra.mxu0 0.0
    %1590 = vmatprep.subr.mxu0 0.0
    %1591 = vmatpush1.msra.mxu0 0.0
    %1592 = vmatprep.mubr.f32.mxu0 0.0
    %1593 = vmatmul.mubr.f32.gmra.mrb[0].mxu0 %v1526
    %v1594 = vpop.f32.mrb[0].mxu0
    %v1595 = vadd.f32 0.0, %v1594
    %v1596 = vpop.f32.mrb[0].mxu0
    %1597 = vdwg.mxu0
    %1598 = vst.msk [vmem:[#allocation2] sm:$0xff] %vm277, %v1595
    %1599 = vrot.lane.b32.xlu0 %v1432, 112
    %v1600 = vpop.permute.xlu0 %1599
    %1601 = vrot.lane.b32.xlu0 %v1424, 80
    %v1602 = vpop.permute.xlu0 %1601
    %v1603 = vsel %vm277, %v1600, 0
    %v1605 = vsel %vm277, %v1602, 0
    %1607 = vmatprep.subr.mxu0 0.0
    %1608 = vmatpush1.xpose.msra.mxu0 %v1605
    %1609 = vmatprep.subr.mxu0 0.0
    %1610 = vmatpush1.xpose.msra.mxu0 0.0
    %1611 = vmatprep.subr.mxu0 0.0
    %1612 = vmatpush1.xpose.msra.mxu0 0.0
    %1613 = vmatprep.subr.mxu0 0.0
    %1614 = vmatpush1.xpose.msra.mxu0 0.0
    %1615 = vmatprep.subr.mxu0 0.0
    %1616 = vmatpush1.xpose.msra.mxu0 0.0
    %1617 = vmatprep.subr.mxu0 0.0
    %1618 = vmatpush1.xpose.msra.mxu0 0.0
    %1619 = vmatprep.subr.mxu0 0.0
    %1620 = vmatpush1.xpose.msra.mxu0 0.0
    %1621 = vmatprep.subr.mxu0 0.0
    %1622 = vmatpush1.xpose.msra.mxu0 0.0
    %1623 = vmatprep.subr.mxu0 0.0
    %1624 = vmatpush1.xpose.msra.mxu0 0.0
    %1625 = vmatprep.subr.mxu0 0.0
    %1626 = vmatpush1.xpose.msra.mxu0 0.0
    %1627 = vmatprep.subr.mxu0 0.0
    %1628 = vmatpush1.xpose.msra.mxu0 0.0
    %1629 = vmatprep.subr.mxu0 0.0
    %1630 = vmatpush1.xpose.msra.mxu0 0.0
    %1631 = vmatprep.subr.mxu0 0.0
    %1632 = vmatpush1.xpose.msra.mxu0 0.0
    %1633 = vmatprep.subr.mxu0 0.0
    %1634 = vmatpush1.xpose.msra.mxu0 0.0
    %1635 = vmatprep.subr.mxu0 0.0
    %1636 = vmatpush1.xpose.msra.mxu0 0.0
    %1637 = vmatprep.subr.mxu0 0.0
    %1638 = vmatpush1.xpose.msra.mxu0 0.0
    %1639 = vmatprep.subr.mxu0 0.0
    %1640 = vmatpush1.xpose.msra.mxu0 0.0
    %1641 = vmatprep.subr.mxu0 0.0
    %1642 = vmatpush1.xpose.msra.mxu0 0.0
    %1643 = vmatprep.subr.mxu0 0.0
    %1644 = vmatpush1.xpose.msra.mxu0 0.0
    %1645 = vmatprep.subr.mxu0 0.0
    %1646 = vmatpush1.xpose.msra.mxu0 0.0
    %1647 = vmatprep.subr.mxu0 0.0
    %1648 = vmatpush1.xpose.msra.mxu0 0.0
    %1649 = vmatprep.subr.mxu0 0.0
    %1650 = vmatpush1.xpose.msra.mxu0 0.0
    %1651 = vmatprep.subr.mxu0 0.0
    %1652 = vmatpush1.xpose.msra.mxu0 0.0
    %1653 = vmatprep.subr.mxu0 0.0
    %1654 = vmatpush1.xpose.msra.mxu0 0.0
    %1655 = vmatprep.subr.mxu0 0.0
    %1656 = vmatpush1.xpose.msra.mxu0 0.0
    %1657 = vmatprep.subr.mxu0 0.0
    %1658 = vmatpush1.xpose.msra.mxu0 0.0
    %1659 = vmatprep.subr.mxu0 0.0
    %1660 = vmatpush1.xpose.msra.mxu0 0.0
    %1661 = vmatprep.subr.mxu0 0.0
    %1662 = vmatpush1.xpose.msra.mxu0 0.0
    %1663 = vmatprep.subr.mxu0 0.0
    %1664 = vmatpush1.xpose.msra.mxu0 0.0
    %1665 = vmatprep.subr.mxu0 0.0
    %1666 = vmatpush1.xpose.msra.mxu0 0.0
    %1667 = vmatprep.subr.mxu0 0.0
    %1668 = vmatpush1.xpose.msra.mxu0 0.0
    %1669 = vmatprep.subr.mxu0 0.0
    %1670 = vmatpush1.xpose.msra.mxu0 0.0
    %1671 = vmatprep.mubr.f32.mxu0 0.0
    %1672 = vmatmul.mubr.f32.gmra.mrb[0].mxu0 %v1603
    %v1673 = vpop.f32.mrb[0].mxu0
    %v1674 = vadd.f32 0.0, %v1673
    %v1675 = vpop.f32.mrb[0].mxu0
    %1676 = vdwg.mxu0
    %v1677 = vsel %vm353, %v1674, -inf
    %1678 = vmax.xlane.f32.xlu0 %v1677
    %v1679 = vpop.xlane.xlu0 %1678
    %v1680 = vsub.f32 %v1674, %v1679
    %v1681 = vmul.f32 %v1680, 1.442695
    %v1682 = vpow.pop %v1681
    %v1683 = vsel %vm353, %v1682, 0.0
    %1684 = vadd.xlane.f32.xlu0 %v1683
    %v1685 = vpop.xlane.xlu0 %1684
    %v1686 = vrcp.pop %v1685
    %v1687 = vmul.f32 %v1682, %v1686
    %1688 = vrot.lane.b32.xlu0 %v1424, 48
    %v1689 = vpop.permute.xlu0 %1688
    %v1692 = vsel %vm353, %v1687, 0
    %1694 = vmatprep.subr.mxu0 0.0
    %1695 = vmatpush1.msra.mxu0 %v1689
    %1696 = vmatprep.subr.mxu0 0.0
    %1697 = vmatpush1.msra.mxu0 0.0
    %1698 = vmatprep.subr.mxu0 0.0
    %1699 = vmatpush1.msra.mxu0 0.0
    %1700 = vmatprep.subr.mxu0 0.0
    %1701 = vmatpush1.msra.mxu0 0.0
    %1702 = vmatprep.subr.mxu0 0.0
    %1703 = vmatpush1.msra.mxu0 0.0
    %1704 = vmatprep.subr.mxu0 0.0
    %1705 = vmatpush1.msra.mxu0 0.0
    %1706 = vmatprep.subr.mxu0 0.0
    %1707 = vmatpush1.msra.mxu0 0.0
    %1708 = vmatprep.subr.mxu0 0.0
    %1709 = vmatpush1.msra.mxu0 0.0
    %1710 = vmatprep.subr.mxu0 0.0
    %1711 = vmatpush1.msra.mxu0 0.0
    %1712 = vmatprep.subr.mxu0 0.0
    %1713 = vmatpush1.msra.mxu0 0.0
    %1714 = vmatprep.subr.mxu0 0.0
    %1715 = vmatpush1.msra.mxu0 0.0
    %1716 = vmatprep.subr.mxu0 0.0
    %1717 = vmatpush1.msra.mxu0 0.0
    %1718 = vmatprep.subr.mxu0 0.0
    %1719 = vmatpush1.msra.mxu0 0.0
    %1720 = vmatprep.subr.mxu0 0.0
    %1721 = vmatpush1.msra.mxu0 0.0
    %1722 = vmatprep.subr.mxu0 0.0
    %1723 = vmatpush1.msra.mxu0 0.0
    %1724 = vmatprep.subr.mxu0 0.0
    %1725 = vmatpush1.msra.mxu0 0.0
    %1726 = vmatprep.subr.mxu0 0.0
    %1727 = vmatpush1.msra.mxu0 0.0
    %1728 = vmatprep.subr.mxu0 0.0
    %1729 = vmatpush1.msra.mxu0 0.0
    %1730 = vmatprep.subr.mxu0 0.0
    %1731 = vmatpush1.msra.mxu0 0.0
    %1732 = vmatprep.subr.mxu0 0.0
    %1733 = vmatpush1.msra.mxu0 0.0
    %1734 = vmatprep.subr.mxu0 0.0
    %1735 = vmatpush1.msra.mxu0 0.0
    %1736 = vmatprep.subr.mxu0 0.0
    %1737 = vmatpush1.msra.mxu0 0.0
    %1738 = vmatprep.subr.mxu0 0.0
    %1739 = vmatpush1.msra.mxu0 0.0
    %1740 = vmatprep.subr.mxu0 0.0
    %1741 = vmatpush1.msra.mxu0 0.0
    %1742 = vmatprep.subr.mxu0 0.0
    %1743 = vmatpush1.msra.mxu0 0.0
    %1744 = vmatprep.subr.mxu0 0.0
    %1745 = vmatpush1.msra.mxu0 0.0
    %1746 = vmatprep.subr.mxu0 0.0
    %1747 = vmatpush1.msra.mxu0 0.0
    %1748 = vmatprep.subr.mxu0 0.0
    %1749 = vmatpush1.msra.mxu0 0.0
    %1750 = vmatprep.subr.mxu0 0.0
    %1751 = vmatpush1.msra.mxu0 0.0
    %1752 = vmatprep.subr.mxu0 0.0
    %1753 = vmatpush1.msra.mxu0 0.0
    %1754 = vmatprep.subr.mxu0 0.0
    %1755 = vmatpush1.msra.mxu0 0.0
    %1756 = vmatprep.subr.mxu0 0.0
    %1757 = vmatpush1.msra.mxu0 0.0
    %1758 = vmatprep.mubr.f32.mxu0 0.0
    %1759 = vmatmul.mubr.f32.gmra.mrb[0].mxu0 %v1692
    %v1760 = vpop.f32.mrb[0].mxu0
    %v1761 = vadd.f32 0.0, %v1760
    %v1762 = vpop.f32.mrb[0].mxu0
    %1763 = vdwg.mxu0
    %1765 = vrot.lane.b32.xlu0 %v1761, 16
    %v1766 = vpop.permute.xlu0 %1765
    %1768 = vst.msk [vmem:[#allocation2] sm:$0xff] %vm611, %v1766
    %v1769 = vmul.f32 %v1429, 0.25
    %1771 = vrot.lane.b32.xlu0 %v1429, 96
    %v1772 = vpop.permute.xlu0 %1771
    %v1774 = vsel %vm277, %v1769, 0
    %v1776 = vsel %vm277, %v1772, 0
    %1778 = vmatprep.subr.mxu0 0.0
    %1779 = vmatpush1.xpose.msra.mxu0 %v1776
    %1780 = vmatprep.subr.mxu0 0.0
    %1781 = vmatpush1.xpose.msra.mxu0 0.0
    %1782 = vmatprep.subr.mxu0 0.0
    %1783 = vmatpush1.xpose.msra.mxu0 0.0
    %1784 = vmatprep.subr.mxu0 0.0
    %1785 = vmatpush1.xpose.msra.mxu0 0.0
    %1786 = vmatprep.subr.mxu0 0.0
    %1787 = vmatpush1.xpose.msra.mxu0 0.0
    %1788 = vmatprep.subr.mxu0 0.0
    %1789 = vmatpush1.xpose.msra.mxu0 0.0
    %1790 = vmatprep.subr.mxu0 0.0
    %1791 = vmatpush1.xpose.msra.mxu0 0.0
    %1792 = vmatprep.subr.mxu0 0.0
    %1793 = vmatpush1.xpose.msra.mxu0 0.0
    %1794 = vmatprep.subr.mxu0 0.0
    %1795 = vmatpush1.xpose.msra.mxu0 0.0
    %1796 = vmatprep.subr.mxu0 0.0
    %1797 = vmatpush1.xpose.msra.mxu0 0.0
    %1798 = vmatprep.subr.mxu0 0.0
    %1799 = vmatpush1.xpose.msra.mxu0 0.0
    %1800 = vmatprep.subr.mxu0 0.0
    %1801 = vmatpush1.xpose.msra.mxu0 0.0
    %1802 = vmatprep.subr.mxu0 0.0
    %1803 = vmatpush1.xpose.msra.mxu0 0.0
    %1804 = vmatprep.subr.mxu0 0.0
    %1805 = vmatpush1.xpose.msra.mxu0 0.0
    %1806 = vmatprep.subr.mxu0 0.0
    %1807 = vmatpush1.xpose.msra.mxu0 0.0
    %1808 = vmatprep.subr.mxu0 0.0
    %1809 = vmatpush1.xpose.msra.mxu0 0.0
    %1810 = vmatprep.subr.mxu0 0.0
    %1811 = vmatpush1.xpose.msra.mxu0 0.0
    %1812 = vmatprep.subr.mxu0 0.0
    %1813 = vmatpush1.xpose.msra.mxu0 0.0
    %1814 = vmatprep.subr.mxu0 0.0
    %1815 = vmatpush1.xpose.msra.mxu0 0.0
    %1816 = vmatprep.subr.mxu0 0.0
    %1817 = vmatpush1.xpose.msra.mxu0 0.0
    %1818 = vmatprep.subr.mxu0 0.0
    %1819 = vmatpush1.xpose.msra.mxu0 0.0
    %1820 = vmatprep.subr.mxu0 0.0
    %1821 = vmatpush1.xpose.msra.mxu0 0.0
    %1822 = vmatprep.subr.mxu0 0.0
    %1823 = vmatpush1.xpose.msra.mxu0 0.0
    %1824 = vmatprep.subr.mxu0 0.0
    %1825 = vmatpush1.xpose.msra.mxu0 0.0
    %1826 = vmatprep.subr.mxu0 0.0
    %1827 = vmatpush1.xpose.msra.mxu0 0.0
    %1828 = vmatprep.subr.mxu0 0.0
    %1829 = vmatpush1.xpose.msra.mxu0 0.0
    %1830 = vmatprep.subr.mxu0 0.0
    %1831 = vmatpush1.xpose.msra.mxu0 0.0
    %1832 = vmatprep.subr.mxu0 0.0
    %1833 = vmatpush1.xpose.msra.mxu0 0.0
    %1834 = vmatprep.subr.mxu0 0.0
    %1835 = vmatpush1.xpose.msra.mxu0 0.0
    %1836 = vmatprep.subr.mxu0 0.0
    %1837 = vmatpush1.xpose.msra.mxu0 0.0
    %1838 = vmatprep.subr.mxu0 0.0
    %1839 = vmatpush1.xpose.msra.mxu0 0.0
    %1840 = vmatprep.subr.mxu0 0.0
    %1841 = vmatpush1.xpose.msra.mxu0 0.0
    %1842 = vmatprep.mubr.f32.mxu0 0.0
    %1843 = vmatmul.mubr.f32.gmra.mrb[0].mxu0 %v1774
    %v1844 = vpop.f32.mrb[0].mxu0
    %v1845 = vadd.f32 0.0, %v1844
    %v1846 = vpop.f32.mrb[0].mxu0
    %1847 = vdwg.mxu0
    %v1848 = vsel %vm353, %v1845, -inf
    %1849 = vmax.xlane.f32.xlu0 %v1848
    %v1850 = vpop.xlane.xlu0 %1849
    %v1851 = vsub.f32 %v1845, %v1850
    %v1852 = vmul.f32 %v1851, 1.442695
    %v1853 = vpow.pop %v1852
    %v1854 = vsel %vm353, %v1853, 0.0
    %1855 = vadd.xlane.f32.xlu0 %v1854
    %v1856 = vpop.xlane.xlu0 %1855
    %v1857 = vrcp.pop %v1856
    %v1858 = vmul.f32 %v1853, %v1857
    %1859 = vrot.lane.b32.xlu0 %v1429, 64
    %v1860 = vpop.permute.xlu0 %1859
    %v1863 = vsel %vm353, %v1858, 0
    %1865 = vmatprep.subr.mxu0 0.0
    %1866 = vmatpush1.msra.mxu0 %v1860
    %1867 = vmatprep.subr.mxu0 0.0
    %1868 = vmatpush1.msra.mxu0 0.0
    %1869 = vmatprep.subr.mxu0 0.0
    %1870 = vmatpush1.msra.mxu0 0.0
    %1871 = vmatprep.subr.mxu0 0.0
    %1872 = vmatpush1.msra.mxu0 0.0
    %1873 = vmatprep.subr.mxu0 0.0
    %1874 = vmatpush1.msra.mxu0 0.0
    %1875 = vmatprep.subr.mxu0 0.0
    %1876 = vmatpush1.msra.mxu0 0.0
    %1877 = vmatprep.subr.mxu0 0.0
    %1878 = vmatpush1.msra.mxu0 0.0
    %1879 = vmatprep.subr.mxu0 0.0
    %1880 = vmatpush1.msra.mxu0 0.0
    %1881 = vmatprep.subr.mxu0 0.0
    %1882 = vmatpush1.msra.mxu0 0.0
    %1883 = vmatprep.subr.mxu0 0.0
    %1884 = vmatpush1.msra.mxu0 0.0
    %1885 = vmatprep.subr.mxu0 0.0
    %1886 = vmatpush1.msra.mxu0 0.0
    %1887 = vmatprep.subr.mxu0 0.0
    %1888 = vmatpush1.msra.mxu0 0.0
    %1889 = vmatprep.subr.mxu0 0.0
    %1890 = vmatpush1.msra.mxu0 0.0
    %1891 = vmatprep.subr.mxu0 0.0
    %1892 = vmatpush1.msra.mxu0 0.0
    %1893 = vmatprep.subr.mxu0 0.0
    %1894 = vmatpush1.msra.mxu0 0.0
    %1895 = vmatprep.subr.mxu0 0.0
    %1896 = vmatpush1.msra.mxu0 0.0
    %1897 = vmatprep.subr.mxu0 0.0
    %1898 = vmatpush1.msra.mxu0 0.0
    %1899 = vmatprep.subr.mxu0 0.0
    %1900 = vmatpush1.msra.mxu0 0.0
    %1901 = vmatprep.subr.mxu0 0.0
    %1902 = vmatpush1.msra.mxu0 0.0
    %1903 = vmatprep.subr.mxu0 0.0
    %1904 = vmatpush1.msra.mxu0 0.0
    %1905 = vmatprep.subr.mxu0 0.0
    %1906 = vmatpush1.msra.mxu0 0.0
    %1907 = vmatprep.subr.mxu0 0.0
    %1908 = vmatpush1.msra.mxu0 0.0
    %1909 = vmatprep.subr.mxu0 0.0
    %1910 = vmatpush1.msra.mxu0 0.0
    %1911 = vmatprep.subr.mxu0 0.0
    %1912 = vmatpush1.msra.mxu0 0.0
    %1913 = vmatprep.subr.mxu0 0.0
    %1914 = vmatpush1.msra.mxu0 0.0
    %1915 = vmatprep.subr.mxu0 0.0
    %1916 = vmatpush1.msra.mxu0 0.0
    %1917 = vmatprep.subr.mxu0 0.0
    %1918 = vmatpush1.msra.mxu0 0.0
    %1919 = vmatprep.subr.mxu0 0.0
    %1920 = vmatpush1.msra.mxu0 0.0
    %1921 = vmatprep.subr.mxu0 0.0
    %1922 = vmatpush1.msra.mxu0 0.0
    %1923 = vmatprep.subr.mxu0 0.0
    %1924 = vmatpush1.msra.mxu0 0.0
    %1925 = vmatprep.subr.mxu0 0.0
    %1926 = vmatpush1.msra.mxu0 0.0
    %1927 = vmatprep.subr.mxu0 0.0
    %1928 = vmatpush1.msra.mxu0 0.0
    %1929 = vmatprep.mubr.f32.mxu0 0.0
    %1930 = vmatmul.mubr.f32.gmra.mrb[0].mxu0 %v1863
    %v1931 = vpop.f32.mrb[0].mxu0
    %v1932 = vadd.f32 0.0, %v1931
    %v1933 = vpop.f32.mrb[0].mxu0
    %1934 = vdwg.mxu0
    %1935 = vst.msk [vmem:[#allocation2 + $0x8] sm:$0xff] %vm277, %v1932
    %1936 = vrot.lane.b32.xlu0 %v1769, 112
    %v1937 = vpop.permute.xlu0 %1936
    %1938 = vrot.lane.b32.xlu0 %v1429, 80
    %v1939 = vpop.permute.xlu0 %1938
    %v1940 = vsel %vm277, %v1937, 0
    %v1942 = vsel %vm277, %v1939, 0
    %1944 = vmatprep.subr.mxu0 0.0
    %1945 = vmatpush1.xpose.msra.mxu0 %v1942
    %1946 = vmatprep.subr.mxu0 0.0
    %1947 = vmatpush1.xpose.msra.mxu0 0.0
    %1948 = vmatprep.subr.mxu0 0.0
    %1949 = vmatpush1.xpose.msra.mxu0 0.0
    %1950 = vmatprep.subr.mxu0 0.0
    %1951 = vmatpush1.xpose.msra.mxu0 0.0
    %1952 = vmatprep.subr.mxu0 0.0
    %1953 = vmatpush1.xpose.msra.mxu0 0.0
    %1954 = vmatprep.subr.mxu0 0.0
    %1955 = vmatpush1.xpose.msra.mxu0 0.0
    %1956 = vmatprep.subr.mxu0 0.0
    %1957 = vmatpush1.xpose.msra.mxu0 0.0
    %1958 = vmatprep.subr.mxu0 0.0
    %1959 = vmatpush1.xpose.msra.mxu0 0.0
    %1960 = vmatprep.subr.mxu0 0.0
    %1961 = vmatpush1.xpose.msra.mxu0 0.0
    %1962 = vmatprep.subr.mxu0 0.0
    %1963 = vmatpush1.xpose.msra.mxu0 0.0
    %1964 = vmatprep.subr.mxu0 0.0
    %1965 = vmatpush1.xpose.msra.mxu0 0.0
    %1966 = vmatprep.subr.mxu0 0.0
    %1967 = vmatpush1.xpose.msra.mxu0 0.0
    %1968 = vmatprep.subr.mxu0 0.0
    %1969 = vmatpush1.xpose.msra.mxu0 0.0
    %1970 = vmatprep.subr.mxu0 0.0
    %1971 = vmatpush1.xpose.msra.mxu0 0.0
    %1972 = vmatprep.subr.mxu0 0.0
    %1973 = vmatpush1.xpose.msra.mxu0 0.0
    %1974 = vmatprep.subr.mxu0 0.0
    %1975 = vmatpush1.xpose.msra.mxu0 0.0
    %1976 = vmatprep.subr.mxu0 0.0
    %1977 = vmatpush1.xpose.msra.mxu0 0.0
    %1978 = vmatprep.subr.mxu0 0.0
    %1979 = vmatpush1.xpose.msra.mxu0 0.0
    %1980 = vmatprep.subr.mxu0 0.0
    %1981 = vmatpush1.xpose.msra.mxu0 0.0
    %1982 = vmatprep.subr.mxu0 0.0
    %1983 = vmatpush1.xpose.msra.mxu0 0.0
    %1984 = vmatprep.subr.mxu0 0.0
    %1985 = vmatpush1.xpose.msra.mxu0 0.0
    %1986 = vmatprep.subr.mxu0 0.0
    %1987 = vmatpush1.xpose.msra.mxu0 0.0
    %1988 = vmatprep.subr.mxu0 0.0
    %1989 = vmatpush1.xpose.msra.mxu0 0.0
    %1990 = vmatprep.subr.mxu0 0.0
    %1991 = vmatpush1.xpose.msra.mxu0 0.0
    %1992 = vmatprep.subr.mxu0 0.0
    %1993 = vmatpush1.xpose.msra.mxu0 0.0
    %1994 = vmatprep.subr.mxu0 0.0
    %1995 = vmatpush1.xpose.msra.mxu0 0.0
    %1996 = vmatprep.subr.mxu0 0.0
    %1997 = vmatpush1.xpose.msra.mxu0 0.0
    %1998 = vmatprep.subr.mxu0 0.0
    %1999 = vmatpush1.xpose.msra.mxu0 0.0
    %2000 = vmatprep.subr.mxu0 0.0
    %2001 = vmatpush1.xpose.msra.mxu0 0.0
    %2002 = vmatprep.subr.mxu0 0.0
    %2003 = vmatpush1.xpose.msra.mxu0 0.0
    %2004 = vmatprep.subr.mxu0 0.0
    %2005 = vmatpush1.xpose.msra.mxu0 0.0
    %2006 = vmatprep.subr.mxu0 0.0
    %2007 = vmatpush1.xpose.msra.mxu0 0.0
    %2008 = vmatprep.mubr.f32.mxu0 0.0
    %2009 = vmatmul.mubr.f32.gmra.mrb[0].mxu0 %v1940
    %v2010 = vpop.f32.mrb[0].mxu0
    %v2011 = vadd.f32 0.0, %v2010
    %v2012 = vpop.f32.mrb[0].mxu0
    %2013 = vdwg.mxu0
    %v2014 = vsel %vm353, %v2011, -inf
    %2015 = vmax.xlane.f32.xlu0 %v2014
    %v2016 = vpop.xlane.xlu0 %2015
    %v2017 = vsub.f32 %v2011, %v2016
    %v2018 = vmul.f32 %v2017, 1.442695
    %v2019 = vpow.pop %v2018
    %v2020 = vsel %vm353, %v2019, 0.0
    %2021 = vadd.xlane.f32.xlu0 %v2020
    %v2022 = vpop.xlane.xlu0 %2021
    %v2023 = vrcp.pop %v2022
    %v2024 = vmul.f32 %v2019, %v2023
    %2025 = vrot.lane.b32.xlu0 %v1429, 48
    %v2026 = vpop.permute.xlu0 %2025
    %v2029 = vsel %vm353, %v2024, 0
    %2031 = vmatprep.subr.mxu0 0.0
    %2032 = vmatpush1.msra.mxu0 %v2026
    %2033 = vmatprep.subr.mxu0 0.0
    %2034 = vmatpush1.msra.mxu0 0.0
    %2035 = vmatprep.subr.mxu0 0.0
    %2036 = vmatpush1.msra.mxu0 0.0
    %2037 = vmatprep.subr.mxu0 0.0
    %2038 = vmatpush1.msra.mxu0 0.0
    %2039 = vmatprep.subr.mxu0 0.0
    %2040 = vmatpush1.msra.mxu0 0.0
    %2041 = vmatprep.subr.mxu0 0.0
    %2042 = vmatpush1.msra.mxu0 0.0
    %2043 = vmatprep.subr.mxu0 0.0
    %2044 = vmatpush1.msra.mxu0 0.0
    %2045 = vmatprep.subr.mxu0 0.0
    %2046 = vmatpush1.msra.mxu0 0.0
    %2047 = vmatprep.subr.mxu0 0.0
    %2048 = vmatpush1.msra.mxu0 0.0
    %2049 = vmatprep.subr.mxu0 0.0
    %2050 = vmatpush1.msra.mxu0 0.0
    %2051 = vmatprep.subr.mxu0 0.0
    %2052 = vmatpush1.msra.mxu0 0.0
    %2053 = vmatprep.subr.mxu0 0.0
    %2054 = vmatpush1.msra.mxu0 0.0
    %2055 = vmatprep.subr.mxu0 0.0
    %2056 = vmatpush1.msra.mxu0 0.0
    %2057 = vmatprep.subr.mxu0 0.0
    %2058 = vmatpush1.msra.mxu0 0.0
    %2059 = vmatprep.subr.mxu0 0.0
    %2060 = vmatpush1.msra.mxu0 0.0
    %2061 = vmatprep.subr.mxu0 0.0
    %2062 = vmatpush1.msra.mxu0 0.0
    %2063 = vmatprep.subr.mxu0 0.0
    %2064 = vmatpush1.msra.mxu0 0.0
    %2065 = vmatprep.subr.mxu0 0.0
    %2066 = vmatpush1.msra.mxu0 0.0
    %2067 = vmatprep.subr.mxu0 0.0
    %2068 = vmatpush1.msra.mxu0 0.0
    %2069 = vmatprep.subr.mxu0 0.0
    %2070 = vmatpush1.msra.mxu0 0.0
    %2071 = vmatprep.subr.mxu0 0.0
    %2072 = vmatpush1.msra.mxu0 0.0
    %2073 = vmatprep.subr.mxu0 0.0
    %2074 = vmatpush1.msra.mxu0 0.0
    %2075 = vmatprep.subr.mxu0 0.0
    %2076 = vmatpush1.msra.mxu0 0.0
    %2077 = vmatprep.subr.mxu0 0.0
    %2078 = vmatpush1.msra.mxu0 0.0
    %2079 = vmatprep.subr.mxu0 0.0
    %2080 = vmatpush1.msra.mxu0 0.0
    %2081 = vmatprep.subr.mxu0 0.0
    %2082 = vmatpush1.msra.mxu0 0.0
    %2083 = vmatprep.subr.mxu0 0.0
    %2084 = vmatpush1.msra.mxu0 0.0
    %2085 = vmatprep.subr.mxu0 0.0
    %2086 = vmatpush1.msra.mxu0 0.0
    %2087 = vmatprep.subr.mxu0 0.0
    %2088 = vmatpush1.msra.mxu0 0.0
    %2089 = vmatprep.subr.mxu0 0.0
    %2090 = vmatpush1.msra.mxu0 0.0
    %2091 = vmatprep.subr.mxu0 0.0
    %2092 = vmatpush1.msra.mxu0 0.0
    %2093 = vmatprep.subr.mxu0 0.0
    %2094 = vmatpush1.msra.mxu0 0.0
    %2095 = vmatprep.mubr.f32.mxu0 0.0
    %2096 = vmatmul.mubr.f32.gmra.mrb[0].mxu0 %v2029
    %v2097 = vpop.f32.mrb[0].mxu0
    %v2098 = vadd.f32 0.0, %v2097
    %v2099 = vpop.f32.mrb[0].mxu0
    %2100 = vdwg.mxu0
    %2102 = vrot.lane.b32.xlu0 %v2098, 16
    %v2103 = vpop.permute.xlu0 %2102
    %2105 = vst.msk [vmem:[#allocation2 + $0x8] sm:$0xff] %vm611, %v2103
    %v2106 = vld [vmem:[#allocation2] sm:$0xff]
    %v2107 = vld [vmem:[#allocation2 + $0x8] sm:$0xff]
    %v2109 = vlaneseq
    %v2110 = vshrl.u32 %v2109, 7
    %v2111 = vsub.s32 0, %v2110
    %v2112 = vrot.slane %v1318, %v2111
    %v2115 = vsel %vm191, %v2106, 0
    %v2118 = vsel %vm191, %v2107, 0
    %2120 = vmatprep.subr.mxu0 0.0
    %2121 = vmatpush1.msra.mxu0 %v1313
    %2122 = vmatprep.subr.mxu0 0.0
    %2123 = vmatpush1.msra.mxu0 %v1314
    %2124 = vmatprep.subr.mxu0 0.0
    %2125 = vmatpush1.msra.mxu0 %v1315
    %2126 = vmatprep.subr.mxu0 0.0
    %2127 = vmatpush1.msra.mxu0 %v1316
    %2128 = vmatprep.subr.mxu0 0.0
    %2129 = vmatpush1.msra.mxu0 0.0
    %2130 = vmatprep.subr.mxu0 0.0
    %2131 = vmatpush1.msra.mxu0 0.0
    %2132 = vmatprep.subr.mxu0 0.0
    %2133 = vmatpush1.msra.mxu0 0.0
    %2134 = vmatprep.subr.mxu0 0.0
    %2135 = vmatpush1.msra.mxu0 0.0
    %2136 = vmatprep.subr.mxu0 0.0
    %2137 = vmatpush1.msra.mxu0 0.0
    %2138 = vmatprep.subr.mxu0 0.0
    %2139 = vmatpush1.msra.mxu0 0.0
    %2140 = vmatprep.subr.mxu0 0.0
    %2141 = vmatpush1.msra.mxu0 0.0
    %2142 = vmatprep.subr.mxu0 0.0
    %2143 = vmatpush1.msra.mxu0 0.0
    %2144 = vmatprep.subr.mxu0 0.0
    %2145 = vmatpush1.msra.mxu0 0.0
    %2146 = vmatprep.subr.mxu0 0.0
    %2147 = vmatpush1.msra.mxu0 0.0
    %2148 = vmatprep.subr.mxu0 0.0
    %2149 = vmatpush1.msra.mxu0 0.0
    %2150 = vmatprep.subr.mxu0 0.0
    %2151 = vmatpush1.msra.mxu0 0.0
    %2152 = vmatprep.subr.mxu0 0.0
    %2153 = vmatpush1.msra.mxu0 0.0
    %2154 = vmatprep.subr.mxu0 0.0
    %2155 = vmatpush1.msra.mxu0 0.0
    %2156 = vmatprep.subr.mxu0 0.0
    %2157 = vmatpush1.msra.mxu0 0.0
    %2158 = vmatprep.subr.mxu0 0.0
    %2159 = vmatpush1.msra.mxu0 0.0
    %2160 = vmatprep.subr.mxu0 0.0
    %2161 = vmatpush1.msra.mxu0 0.0
    %2162 = vmatprep.subr.mxu0 0.0
    %2163 = vmatpush1.msra.mxu0 0.0
    %2164 = vmatprep.subr.mxu0 0.0
    %2165 = vmatpush1.msra.mxu0 0.0
    %2166 = vmatprep.subr.mxu0 0.0
    %2167 = vmatpush1.msra.mxu0 0.0
    %2168 = vmatprep.subr.mxu0 0.0
    %2169 = vmatpush1.msra.mxu0 0.0
    %2170 = vmatprep.subr.mxu0 0.0
    %2171 = vmatpush1.msra.mxu0 0.0
    %2172 = vmatprep.subr.mxu0 0.0
    %2173 = vmatpush1.msra.mxu0 0.0
    %2174 = vmatprep.subr.mxu0 0.0
    %2175 = vmatpush1.msra.mxu0 0.0
    %2176 = vmatprep.subr.mxu0 0.0
    %2177 = vmatpush1.msra.mxu0 0.0
    %2178 = vmatprep.subr.mxu0 0.0
    %2179 = vmatpush1.msra.mxu0 0.0
    %2180 = vmatprep.subr.mxu0 0.0
    %2181 = vmatpush1.msra.mxu0 0.0
    %2182 = vmatprep.subr.mxu0 0.0
    %2183 = vmatpush1.msra.mxu0 0.0
    %2184 = vmatprep.mubr.f32.mxu0 0.0
    %2185 = vmatmul.mubr.f32.gmra.mrb[0].mxu0 %v2115
    %v2186 = vpop.f32.mrb[0].mxu0
    %v2187 = vadd.f32 %v2112, %v2186
    %v2188 = vpop.f32.mrb[0].mxu0
    %2189 = vmatprep.mubr.f32.mxu0 0.0
    %2190 = vmatmul.mubr.f32.gmra.mrb[0].mxu0 %v2118
    %v2191 = vpop.f32.mrb[0].mxu0
    %v2192 = vadd.f32 %v2112, %v2191
    %v2193 = vpop.f32.mrb[0].mxu0
    %2194 = vdwg.mxu0
    %v2195 = vadd.f32 %v1303, %v2187
    %v2196 = vadd.f32 %v1304, %v2192
    %v2197 = vsel %vm191, %v2195, 0.0
    %2198 = vadd.xlane.f32.xlu0 %v2197
    %v2199 = vpop.xlane.xlu0 %2198
    %v2200 = vsel %vm191, %v2196, 0.0
    %2201 = vadd.xlane.f32.xlu0 %v2200
    %v2202 = vpop.xlane.xlu0 %2201
    %v2203 = vmul.f32 %v2199, %v1047
    %v2204 = vmul.f32 %v2202, %v1047
    %v2205 = vsub.f32 %v2195, %v2203
    %v2206 = vsub.f32 %v2196, %v2204
    %v2207 = vmul.f32 %v2205, %v2205
    %v2208 = vmul.f32 %v2206, %v2206
    %v2209 = vsel %vm191, %v2207, 0.0
    %2210 = vadd.xlane.f32.xlu0 %v2209
    %v2211 = vpop.xlane.xlu0 %2210
    %v2212 = vsel %vm191, %v2208, 0.0
    %2213 = vadd.xlane.f32.xlu0 %v2212
    %v2214 = vpop.xlane.xlu0 %2213
    %v2215 = vmul.f32 %v2211, %v1047
    %v2216 = vmul.f32 %v2214, %v1047
    %v2217 = vadd.f32 %v2215, 1e-05
    %v2218 = vadd.f32 %v2216, 1e-05
    %v2219 = vrsqrt.pop %v2217
    %v2220 = vrsqrt.pop %v2218
    %v2221 = vmul.f32 %v2205, %v2219
    %v2222 = vmul.f32 %v2206, %v2220
    %v2224 = vlaneseq
    %v2225 = vshrl.u32 %v2224, 7
    %v2226 = vsub.s32 0, %v2225
    %v2227 = vrot.slane %v1320, %v2226
    %v2229 = vmul.f32 %v2221, %v2227
    %v2230 = vmul.f32 %v2222, %v2227
    %v2232 = vlaneseq
    %v2233 = vshrl.u32 %v2232, 7
    %v2234 = vsub.s32 0, %v2233
    %v2235 = vrot.slane %v1322, %v2234
    %v2237 = vadd.f32 %v2229, %v2235
    %v2238 = vadd.f32 %v2230, %v2235
    %v2240 = vlaneseq
    %v2241 = vshrl.u32 %v2240, 7
    %v2242 = vsub.s32 0, %v2241
    %v2243 = vrot.slane %v1329, %v2242
    %v2246 = vsel %vm191, %v2237, 0
    %v2249 = vsel %vm191, %v2238, 0
    %2251 = vmatprep.subr.mxu0 0.0
    %2252 = vmatpush1.msra.mxu0 %v1324
    %2253 = vmatprep.subr.mxu0 0.0
    %2254 = vmatpush1.msra.mxu0 %v1325
    %2255 = vmatprep.subr.mxu0 0.0
    %2256 = vmatpush1.msra.mxu0 %v1326
    %2257 = vmatprep.subr.mxu0 0.0
    %2258 = vmatpush1.msra.mxu0 %v1327
    %2259 = vmatprep.subr.mxu0 0.0
    %2260 = vmatpush1.msra.mxu0 0.0
    %2261 = vmatprep.subr.mxu0 0.0
    %2262 = vmatpush1.msra.mxu0 0.0
    %2263 = vmatprep.subr.mxu0 0.0
    %2264 = vmatpush1.msra.mxu0 0.0
    %2265 = vmatprep.subr.mxu0 0.0
    %2266 = vmatpush1.msra.mxu0 0.0
    %2267 = vmatprep.subr.mxu0 0.0
    %2268 = vmatpush1.msra.mxu0 0.0
    %2269 = vmatprep.subr.mxu0 0.0
    %2270 = vmatpush1.msra.mxu0 0.0
    %2271 = vmatprep.subr.mxu0 0.0
    %2272 = vmatpush1.msra.mxu0 0.0
    %2273 = vmatprep.subr.mxu0 0.0
    %2274 = vmatpush1.msra.mxu0 0.0
    %2275 = vmatprep.subr.mxu0 0.0
    %2276 = vmatpush1.msra.mxu0 0.0
    %2277 = vmatprep.subr.mxu0 0.0
    %2278 = vmatpush1.msra.mxu0 0.0
    %2279 = vmatprep.subr.mxu0 0.0
    %2280 = vmatpush1.msra.mxu0 0.0
    %2281 = vmatprep.subr.mxu0 0.0
    %2282 = vmatpush1.msra.mxu0 0.0
    %2283 = vmatprep.subr.mxu0 0.0
    %2284 = vmatpush1.msra.mxu0 0.0
    %2285 = vmatprep.subr.mxu0 0.0
    %2286 = vmatpush1.msra.mxu0 0.0
    %2287 = vmatprep.subr.mxu0 0.0
    %2288 = vmatpush1.msra.mxu0 0.0
    %2289 = vmatprep.subr.mxu0 0.0
    %2290 = vmatpush1.msra.mxu0 0.0
    %2291 = vmatprep.subr.mxu0 0.0
    %2292 = vmatpush1.msra.mxu0 0.0
    %2293 = vmatprep.subr.mxu0 0.0
    %2294 = vmatpush1.msra.mxu0 0.0
    %2295 = vmatprep.subr.mxu0 0.0
    %2296 = vmatpush1.msra.mxu0 0.0
    %2297 = vmatprep.subr.mxu0 0.0
    %2298 = vmatpush1.msra.mxu0 0.0
    %2299 = vmatprep.subr.mxu0 0.0
    %2300 = vmatpush1.msra.mxu0 0.0
    %2301 = vmatprep.subr.mxu0 0.0
    %2302 = vmatpush1.msra.mxu0 0.0
    %2303 = vmatprep.subr.mxu0 0.0
    %2304 = vmatpush1.msra.mxu0 0.0
    %2305 = vmatprep.subr.mxu0 0.0
    %2306 = vmatpush1.msra.mxu0 0.0
    %2307 = vmatprep.subr.mxu0 0.0
    %2308 = vmatpush1.msra.mxu0 0.0
    %2309 = vmatprep.subr.mxu0 0.0
    %2310 = vmatpush1.msra.mxu0 0.0
    %2311 = vmatprep.subr.mxu0 0.0
    %2312 = vmatpush1.msra.mxu0 0.0
    %2313 = vmatprep.subr.mxu0 0.0
    %2314 = vmatpush1.msra.mxu0 0.0
    %2315 = vmatprep.mubr.f32.mxu0 0.0
    %2316 = vmatmul.mubr.f32.gmra.mrb[0].mxu0 %v2246
    %v2317 = vpop.f32.mrb[0].mxu0
    %v2318 = vadd.f32 %v2243, %v2317
    %v2319 = vpop.f32.mrb[0].mxu0
    %2320 = vmatprep.mubr.f32.mxu0 0.0
    %2321 = vmatmul.mubr.f32.gmra.mrb[0].mxu0 %v2249
    %v2322 = vpop.f32.mrb[0].mxu0
    %v2323 = vadd.f32 %v2243, %v2322
    %v2324 = vpop.f32.mrb[0].mxu0
    %2325 = vdwg.mxu0
    %v2326 = vmax.f32 %v2318, 0.0
    %v2327 = vmax.f32 %v2323, 0.0
    %v2329 = vlaneseq
    %v2330 = vshrl.u32 %v2329, 7
    %v2331 = vsub.s32 0, %v2330
    %v2332 = vrot.slane %v1340, %v2331
    %v2335 = vsel %vm1179, %v2326, 0
    %v2338 = vsel %vm1179, %v2327, 0
    %2340 = vmatprep.subr.mxu0 0.0
    %2341 = vmatpush1.msra.mxu0 %v1331
    %2342 = vmatprep.subr.mxu0 0.0
    %2343 = vmatpush1.msra.mxu0 %v1332
    %2344 = vmatprep.subr.mxu0 0.0
    %2345 = vmatpush1.msra.mxu0 %v1333
    %2346 = vmatprep.subr.mxu0 0.0
    %2347 = vmatpush1.msra.mxu0 %v1334
    %2348 = vmatprep.subr.mxu0 0.0
    %2349 = vmatpush1.msra.mxu0 %v1335
    %2350 = vmatprep.subr.mxu0 0.0
    %2351 = vmatpush1.msra.mxu0 %v1336
    %2352 = vmatprep.subr.mxu0 0.0
    %2353 = vmatpush1.msra.mxu0 %v1337
    %2354 = vmatprep.subr.mxu0 0.0
    %2355 = vmatpush1.msra.mxu0 %v1338
    %2356 = vmatprep.subr.mxu0 0.0
    %2357 = vmatpush1.msra.mxu0 0.0
    %2358 = vmatprep.subr.mxu0 0.0
    %2359 = vmatpush1.msra.mxu0 0.0
    %2360 = vmatprep.subr.mxu0 0.0
    %2361 = vmatpush1.msra.mxu0 0.0
    %2362 = vmatprep.subr.mxu0 0.0
    %2363 = vmatpush1.msra.mxu0 0.0
    %2364 = vmatprep.subr.mxu0 0.0
    %2365 = vmatpush1.msra.mxu0 0.0
    %2366 = vmatprep.subr.mxu0 0.0
    %2367 = vmatpush1.msra.mxu0 0.0
    %2368 = vmatprep.subr.mxu0 0.0
    %2369 = vmatpush1.msra.mxu0 0.0
    %2370 = vmatprep.subr.mxu0 0.0
    %2371 = vmatpush1.msra.mxu0 0.0
    %2372 = vmatprep.subr.mxu0 0.0
    %2373 = vmatpush1.msra.mxu0 0.0
    %2374 = vmatprep.subr.mxu0 0.0
    %2375 = vmatpush1.msra.mxu0 0.0
    %2376 = vmatprep.subr.mxu0 0.0
    %2377 = vmatpush1.msra.mxu0 0.0
    %2378 = vmatprep.subr.mxu0 0.0
    %2379 = vmatpush1.msra.mxu0 0.0
    %2380 = vmatprep.subr.mxu0 0.0
    %2381 = vmatpush1.msra.mxu0 0.0
    %2382 = vmatprep.subr.mxu0 0.0
    %2383 = vmatpush1.msra.mxu0 0.0
    %2384 = vmatprep.subr.mxu0 0.0
    %2385 = vmatpush1.msra.mxu0 0.0
    %2386 = vmatprep.subr.mxu0 0.0
    %2387 = vmatpush1.msra.mxu0 0.0
    %2388 = vmatprep.subr.mxu0 0.0
    %2389 = vmatpush1.msra.mxu0 0.0
    %2390 = vmatprep.subr.mxu0 0.0
    %2391 = vmatpush1.msra.mxu0 0.0
    %2392 = vmatprep.subr.mxu0 0.0
    %2393 = vmatpush1.msra.mxu0 0.0
    %2394 = vmatprep.subr.mxu0 0.0
    %2395 = vmatpush1.msra.mxu0 0.0
    %2396 = vmatprep.subr.mxu0 0.0
    %2397 = vmatpush1.msra.mxu0 0.0
    %2398 = vmatprep.subr.mxu0 0.0
    %2399 = vmatpush1.msra.mxu0 0.0
    %2400 = vmatprep.subr.mxu0 0.0
    %2401 = vmatpush1.msra.mxu0 0.0
    %2402 = vmatprep.subr.mxu0 0.0
    %2403 = vmatpush1.msra.mxu0 0.0
    %2404 = vmatprep.mubr.f32.mxu0 0.0
    %2405 = vmatmul.mubr.f32.gmra.mrb[0].mxu0 %v2335
    %v2406 = vpop.f32.mrb[0].mxu0
    %v2407 = vadd.f32 %v2332, %v2406
    %v2408 = vpop.f32.mrb[0].mxu0
    %2409 = vmatprep.mubr.f32.mxu0 0.0
    %2410 = vmatmul.mubr.f32.gmra.mrb[0].mxu0 %v2338
    %v2411 = vpop.f32.mrb[0].mxu0
    %v2412 = vadd.f32 %v2332, %v2411
    %v2413 = vpop.f32.mrb[0].mxu0
    %2414 = vdwg.mxu0
    %v2415 = vadd.f32 %v2237, %v2407
    %v2416 = vadd.f32 %v2238, %v2412
    %v2417 = vsel %vm191, %v2415, 0.0
    %2418 = vadd.xlane.f32.xlu0 %v2417
    %v2419 = vpop.xlane.xlu0 %2418
    %v2420 = vsel %vm191, %v2416, 0.0
    %2421 = vadd.xlane.f32.xlu0 %v2420
    %v2422 = vpop.xlane.xlu0 %2421
    %v2423 = vmul.f32 %v2419, %v1047
    %v2424 = vmul.f32 %v2422, %v1047
    %v2425 = vsub.f32 %v2415, %v2423
    %v2426 = vsub.f32 %v2416, %v2424
    %v2427 = vmul.f32 %v2425, %v2425
    %v2428 = vmul.f32 %v2426, %v2426
    %v2429 = vsel %vm191, %v2427, 0.0
    %2430 = vadd.xlane.f32.xlu0 %v2429
    %v2431 = vpop.xlane.xlu0 %2430
    %v2432 = vsel %vm191, %v2428, 0.0
    %2433 = vadd.xlane.f32.xlu0 %v2432
    %v2434 = vpop.xlane.xlu0 %2433
    %v2435 = vmul.f32 %v2431, %v1047
    %v2436 = vmul.f32 %v2434, %v1047
    %v2437 = vadd.f32 %v2435, 1e-05
    %v2438 = vadd.f32 %v2436, 1e-05
    %v2439 = vrsqrt.pop %v2437
    %v2440 = vrsqrt.pop %v2438
    %v2441 = vmul.f32 %v2425, %v2439
    %v2442 = vmul.f32 %v2426, %v2440
    %v2444 = vlaneseq
    %v2445 = vshrl.u32 %v2444, 7
    %v2446 = vsub.s32 0, %v2445
    %v2447 = vrot.slane %v1342, %v2446
    %v2449 = vmul.f32 %v2441, %v2447
    %v2450 = vmul.f32 %v2442, %v2447
    %v2452 = vlaneseq
    %v2453 = vshrl.u32 %v2452, 7
    %v2454 = vsub.s32 0, %v2453
    %v2455 = vrot.slane %v1344, %v2454
    %v2457 = vadd.f32 %v2449, %v2455
    %v2458 = vadd.f32 %v2450, %v2455
    %2459 = vst.msk [vmem:[#allocation3] sm:$0xff] %vm191, %v2457
    %2460 = vst.msk [vmem:[#allocation3 + $0x8] sm:$0xff] %vm191, %v2458
    // Predicated region
    $region58: #{tpu_custom_call.1} parent=1 // pred_check
      _
    $region59: #{tpu_custom_call.1} parent=1 // pred_check_branch
      %2462 = sbr.rel (0) target = $region61
    $region60: #{tpu_custom_call.1} parent=1 // pred_region
      %s2464 = ssub.s32 256, 256
      %2465 = vsyncadd [#allocation4], %s2464
      %s2466 = sshll.u32 [#allocation3], 4
      %s2467 = int_to_ptr.vmem [resolvable:$true] %s2466
      %2472 = dma.vmem_to_hbm [thread:$0]  %s2467, 256, %s14, [#allocation4], 128, 128, 8
    $region61: #{tpu_custom_call.1} parent=1 // pred_fallthru
      _
    // Predicated region
    $region62: #{tpu_custom_call.1} parent=1 // pred_check
      _
    $region63: #{tpu_custom_call.1} parent=1 // pred_check_branch
      %2474 = sbr.rel (0) target = $region65
    $region64: #{tpu_custom_call.1} parent=1 // pred_region
      %2475 = dma.done [#allocation4], 256
    $region65: #{tpu_custom_call.1} parent=1 // pred_fallthru
      _
    %2476 = vsyncpa [#allocation4], 1

</llo_original>
